<compile_context>
chip_gen: v7x
topology: tpu7x:2x2x1
jax: 0.10.0
libtpu: 0.0.40
codegen_flags: <defaults>
</compile_context>

<pallas_src>
import jax
import jax.numpy as jnp
import numpy as np
from jax import lax
from jax.experimental import pallas as pl
from jax.experimental.pallas import tpu as pltpu

EPS = 1e-5  # torch.nn.InstanceNorm2d default eps


# --------------------------------------------------------------------------- #
# kernel                                                                       #
# --------------------------------------------------------------------------- #
def _write_reflect_pad(src, pad_ref, H, W):
    """ReflectionPad2d(1): src (Bt,H,W,C) -> pad_ref (Bt,H+2,W+2,C)."""
    pad_ref[:, 1:H + 1, 1:W + 1, :] = src
    pad_ref[:, 0:1, 1:W + 1, :] = src[:, 1:2, :, :]                 # top row    <- row 1
    pad_ref[:, H + 1:H + 2, 1:W + 1, :] = src[:, H - 2:H - 1, :, :]  # bottom row <- row H-2
    # Columns (corners included) reflect from the already row-padded buffer:
    # padded col 0 <- original col 1 (= padded col 2); col W+1 <- original col W-2.
    pad_ref[:, :, 0:1, :] = pad_ref[:, :, 2:3, :]
    pad_ref[:, :, W + 1:W + 2, :] = pad_ref[:, :, W - 1:W, :]


def _conv3x3(pad_ref, w_ref, Bt, H, W, C):
    """3x3 valid conv of the padded scratch against w_ref (9, Cin, Cout).

    Nine accumulated (M, C) @ (C, C) dots into one f32 accumulator; the row
    offset dy is a fori_loop index so live ranges stay bounded per row band.
    """
    M = Bt * H * W

    def body(dy, acc):
        for dx in range(3):                                   # static, unrolled
            tap = pad_ref[:, pl.ds(dy, H), dx:dx + W, :]       # (Bt, H, W, C)
            wk = w_ref[dy * 3 + dx]                            # (Cin, Cout)
            acc = acc + jnp.dot(tap.reshape(M, C), wk,
                                preferred_element_type=jnp.float32)
        return acc

    return lax.fori_loop(0, 3, body, jnp.zeros((M, C), jnp.float32))


def _instance_norm(h, Bt, HW, C):
    """InstanceNorm2d (affine=False) over the H*W axis; stats kept in f32."""
    hb = h.reshape(Bt, HW, C)
    inv_hw = 1.0 / HW
    mu = jnp.sum(hb, axis=1, keepdims=True) * inv_hw
    var = jnp.sum(hb * hb, axis=1, keepdims=True) * inv_hw - mu * mu
    var = jnp.maximum(var, 0.0)           # guard single-pass cancellation
    return ((hb - mu) * lax.rsqrt(var + EPS)).reshape(Bt * HW, C)


def resnet_block_kernel(x_ref, w1_ref, w2_ref, o_ref, pad_ref):
    Bt, H, W, C = x_ref.shape
    HW = H * W
    cdt = pad_ref.dtype                                        # compute dtype

    x = x_ref[...]                                             # (Bt, H, W, C)

    # conv1 + instance-norm + ReLU  (conv bias cancelled exactly by the norm)
    _write_reflect_pad(x, pad_ref, H, W)
    h = _conv3x3(pad_ref, w1_ref, Bt, H, W, C)                 # (M, C) f32
    h = jnp.maximum(_instance_norm(h, Bt, HW, C), 0.0)

    # conv2 + instance-norm (pad the intermediate into the same scratch)
    _write_reflect_pad(h.reshape(Bt, H, W, C).astype(cdt), pad_ref, H, W)
    h = _conv3x3(pad_ref, w2_ref, Bt, H, W, C)
    h = _instance_norm(h, Bt, HW, C)

    # residual add in f32
    o_ref[...] = (x.astype(jnp.float32)
                  + h.reshape(Bt, H, W, C)).astype(o_ref.dtype)


# --------------------------------------------------------------------------- #
# wrapper                                                                      #
# --------------------------------------------------------------------------- #
def _default_vmem_limit_bytes():
    try:
        kind = jax.devices()[0].device_kind.lower()
    except Exception:
        kind = ""
    if any(v in kind for v in ("v4", "v5", "v6")):
        return 100 * 1024 * 1024          # 128 MiB physical VMEM generations
    return 48 * 1024 * 1024               # v7x (64 MiB physical) / unknown


def _pick_batch_tile(N, H, W, C, csize, vmem_limit):
    # Conservative per-sample live-set estimate: double-buffered in/out blocks,
    # padded scratch, f32 conv accumulator plus a few f32 temps.
    per_sample = (H * W * C * (2 * csize + 2 * 4 + 5 * 4)
                  + (H + 2) * (W + 2) * C * csize)
    weights = 2 * 2 * 9 * C * C * csize   # two weights, double-buffered
    budget = max(vmem_limit - weights, per_sample)
    # Keep the grid length >= 2 when N > 1 so v7x can shard the parallel batch
    # axis across its two TensorCores.
    bt = max(1, min(budget // per_sample, N // 2 if N > 1 else 1))
    bt = int(bt)
    while N % bt:
        bt -= 1
    return bt


def resnet_block(x_nchw, w1_oihw, w2_oihw, *, compute_dtype=jnp.bfloat16,
                 batch_tile=None, vmem_limit_bytes=None):
    """ResnetBlock forward.  x: (N,C,H,W) f32; weights: PyTorch OIHW (C,C,3,3).

    Conv biases are intentionally not taken: InstanceNorm2d (affine=False)
    immediately after each conv cancels any per-channel constant exactly.
    """
    N, C, H, W = x_nchw.shape
    csize = jnp.dtype(compute_dtype).itemsize
    vmem_limit = (vmem_limit_bytes if vmem_limit_bytes is not None
                  else _default_vmem_limit_bytes())
    if batch_tile is None:
        Bt = _pick_batch_tile(N, H, W, C, csize, vmem_limit)
    else:
        Bt = int(batch_tile)
        assert N % Bt == 0, "batch_tile must divide N"

    # Layout plumbing in XLA (free): NHWC activations in the compute dtype and
    # (tap, Cin, Cout) matmul-ready weights; tap order k = dy*3 + dx.
    x = jnp.transpose(x_nchw, (0, 2, 3, 1)).astype(compute_dtype)      # NHWC
    w1 = jnp.transpose(w1_oihw, (2, 3, 1, 0)).reshape(9, C, C).astype(compute_dtype)
    w2 = jnp.transpose(w2_oihw, (2, 3, 1, 0)).reshape(9, C, C).astype(compute_dtype)

    out = pl.pallas_call(
        resnet_block_kernel,
        out_shape=jax.ShapeDtypeStruct((N, H, W, C), jnp.float32),
        grid_spec=pltpu.PrefetchScalarGridSpec(
            num_scalar_prefetch=0,
            grid=(N // Bt,),
            in_specs=[
                pl.BlockSpec((Bt, H, W, C), lambda n: (n, 0, 0, 0)),
                # Constant index_maps: the weight blocks stay resident across
                # grid steps (could additionally be single-buffered with
                # pipeline_mode=pl.Buffered(1) to reclaim one copy each).
                pl.BlockSpec((9, C, C), lambda n: (0, 0, 0)),
                pl.BlockSpec((9, C, C), lambda n: (0, 0, 0)),
            ],
            out_specs=pl.BlockSpec((Bt, H, W, C), lambda n: (n, 0, 0, 0)),
            scratch_shapes=[pltpu.VMEM((Bt, H + 2, W + 2, C), compute_dtype)],
        ),
        compiler_params=pltpu.CompilerParams(
            dimension_semantics=("parallel",),
            vmem_limit_bytes=int(vmem_limit),
        ),
    )(x, w1, w2)

    # Note: for shapes where a single image still exceeds the VMEM budget after
    # the im2col removal, add H-band spatial tiling with a two-pass instance
    # norm (accumulate per-channel sum/sumsq across an "arbitrary" H axis).
    return jnp.transpose(out, (0, 3, 1, 2))                            # back to NCHW


# --------------------------------------------------------------------------- #
# reference + test                                                             #
# --------------------------------------------------------------------------- #
def _reference(x, w1, b1, w2, b2):
    # Pure-JAX reference of the PyTorch forward (NCHW), biases included.
    def inorm(h):
        mu = h.mean(axis=(2, 3), keepdims=True)
        var = ((h - mu) ** 2).mean(axis=(2, 3), keepdims=True)
        return (h - mu) / jnp.sqrt(var + EPS)

    def conv(h, w, b):
        hp = jnp.pad(h, ((0, 0), (0, 0), (1, 1), (1, 1)), mode="reflect")
        o = jax.lax.conv_general_dilated(
            hp, w, (1, 1), "VALID",
            dimension_numbers=("NCHW", "OIHW", "NCHW"))
        return o + b.reshape(1, -1, 1, 1)

    h = jnp.maximum(inorm(conv(x, w1, b1)), 0.0)
    h = inorm(conv(h, w2, b2))
    return x + h


if __name__ == "__main__":
    N, C, H, W = 2, 4, 16, 16
    key = jax.random.PRNGKey(0)
    kx, kw1, kb1, kw2, kb2 = jax.random.split(key, 5)

    x = jax.random.normal(kx, (N, C, H, W), jnp.float32)
    # Conv2d(dim, dim, 3) parameter shapes (OIHW) + biases (kernel drops them).
    w1 = 0.1 * jax.random.normal(kw1, (C, C, 3, 3), jnp.float32)
    b1 = 0.1 * jax.random.normal(kb1, (C,), jnp.float32)
    w2 = 0.1 * jax.random.normal(kw2, (C, C, 3, 3), jnp.float32)
    b2 = 0.1 * jax.random.normal(kb2, (C,), jnp.float32)

    ref = _reference(x, w1, b1, w2, b2)

    # f32 path: tight check of the fused math (also proves bias cancellation).
    out_f32 = resnet_block(x, w1, w2, compute_dtype=jnp.float32)
    jax.block_until_ready(out_f32)
    np.testing.assert_allclose(np.asarray(out_f32), np.asarray(ref),
                               rtol=1e-4, atol=1e-4)

    # bf16 path (default / production MXU path): loose check.
    out_bf16 = resnet_block(x, w1, w2)
    jax.block_until_ready(out_bf16)
    np.testing.assert_allclose(np.asarray(out_bf16), np.asarray(ref),
                               rtol=5e-2, atol=8e-2)

    print("KERNEL_OK")
</pallas_src>

<mosaic_0001>
module attributes {stable_mosaic.version = 11 : i64} {
  func.func @resnet_block_kernel(%arg0: i32, %arg1: memref<1x16x16x4xf32, #tpu.memory_space<vmem>>, %arg2: memref<9x4x4xf32, #tpu.memory_space<vmem>>, %arg3: memref<9x4x4xf32, #tpu.memory_space<vmem>>, %arg4: memref<1x16x16x4xf32, #tpu.memory_space<vmem>>, %arg5: memref<1x18x18x4xf32, #tpu.memory_space<vmem>>) attributes {dimension_semantics = [#tpu.dimension_semantics<parallel>], iteration_bounds = array<i64: 2>, scalar_prefetch = 0 : i64, scratch_operands = 1 : i64, tpu.core_type = #tpu.core_type<tc>, window_params = [{transform_indices = @transform_0, window_bounds = array<i64: 1, 16, 16, 4>}, {pipeline_mode = #tpu.pipeline_mode<synchronous>, transform_indices = @transform_1, window_bounds = array<i64: 9, 4, 4>}, {pipeline_mode = #tpu.pipeline_mode<synchronous>, transform_indices = @transform_2, window_bounds = array<i64: 9, 4, 4>}, {transform_indices = @transform_3, window_bounds = array<i64: 1, 16, 16, 4>}]} {
    %c0 = arith.constant 0 : index
    %c0_0 = arith.constant 0 : index
    %c0_1 = arith.constant 0 : index
    %c0_2 = arith.constant 0 : index
    %0 = vector.load %arg1[%c0, %c0_0, %c0_1, %c0_2] : memref<1x16x16x4xf32, #tpu.memory_space<vmem>>, vector<1x16x16x4xf32>
    %c0_3 = arith.constant 0 : index
    %c1 = arith.constant 1 : index
    %c1_4 = arith.constant 1 : index
    %c0_5 = arith.constant 0 : index
    %1 = vector.load %arg5[%c0_3, %c1, %c1_4, %c0_5] : memref<1x18x18x4xf32, #tpu.memory_space<vmem>>, vector<1x16x16x4xf32>
    tpu.vector_store %arg5[%c0_3, %c1, %c1_4, %c0_5], %0 {strides = array<i32>} : memref<1x18x18x4xf32, #tpu.memory_space<vmem>>, vector<1x16x16x4xf32>,
    %2 = vector.extract_strided_slice %0 {offsets = [0, 1, 0, 0], sizes = [1, 1, 16, 4], strides = [1, 1, 1, 1]} : vector<1x16x16x4xf32> to vector<1x1x16x4xf32>
    %c0_6 = arith.constant 0 : index
    %c0_7 = arith.constant 0 : index
    %c1_8 = arith.constant 1 : index
    %c0_9 = arith.constant 0 : index
    %3 = vector.load %arg5[%c0_6, %c0_7, %c1_8, %c0_9] : memref<1x18x18x4xf32, #tpu.memory_space<vmem>>, vector<1x1x16x4xf32>
    tpu.vector_store %arg5[%c0_6, %c0_7, %c1_8, %c0_9], %2 {strides = array<i32>} : memref<1x18x18x4xf32, #tpu.memory_space<vmem>>, vector<1x1x16x4xf32>,
    %4 = vector.extract_strided_slice %0 {offsets = [0, 14, 0, 0], sizes = [1, 1, 16, 4], strides = [1, 1, 1, 1]} : vector<1x16x16x4xf32> to vector<1x1x16x4xf32>
    %c0_10 = arith.constant 0 : index
    %c17 = arith.constant 17 : index
    %c1_11 = arith.constant 1 : index
    %c0_12 = arith.constant 0 : index
    %5 = vector.load %arg5[%c0_10, %c17, %c1_11, %c0_12] : memref<1x18x18x4xf32, #tpu.memory_space<vmem>>, vector<1x1x16x4xf32>
    tpu.vector_store %arg5[%c0_10, %c17, %c1_11, %c0_12], %4 {strides = array<i32>} : memref<1x18x18x4xf32, #tpu.memory_space<vmem>>, vector<1x1x16x4xf32>,
    %c0_13 = arith.constant 0 : index
    %c0_14 = arith.constant 0 : index
    %c2 = arith.constant 2 : index
    %c0_15 = arith.constant 0 : index
    %6 = vector.load %arg5[%c0_13, %c0_14, %c2, %c0_15] : memref<1x18x18x4xf32, #tpu.memory_space<vmem>>, vector<1x18x1x4xf32>
    %c0_16 = arith.constant 0 : index
    %c0_17 = arith.constant 0 : index
    %c0_18 = arith.constant 0 : index
    %c0_19 = arith.constant 0 : index
    %7 = vector.load %arg5[%c0_16, %c0_17, %c0_18, %c0_19] : memref<1x18x18x4xf32, #tpu.memory_space<vmem>>, vector<1x18x1x4xf32>
    tpu.vector_store %arg5[%c0_16, %c0_17, %c0_18, %c0_19], %6 {strides = array<i32>} : memref<1x18x18x4xf32, #tpu.memory_space<vmem>>, vector<1x18x1x4xf32>,
    %c0_20 = arith.constant 0 : index
    %c0_21 = arith.constant 0 : index
    %c15 = arith.constant 15 : index
    %c0_22 = arith.constant 0 : index
    %8 = vector.load %arg5[%c0_20, %c0_21, %c15, %c0_22] : memref<1x18x18x4xf32, #tpu.memory_space<vmem>>, vector<1x18x1x4xf32>
    %c0_23 = arith.constant 0 : index
    %c0_24 = arith.constant 0 : index
    %c17_25 = arith.constant 17 : index
    %c0_26 = arith.constant 0 : index
    %9 = vector.load %arg5[%c0_23, %c0_24, %c17_25, %c0_26] : memref<1x18x18x4xf32, #tpu.memory_space<vmem>>, vector<1x18x1x4xf32>
    tpu.vector_store %arg5[%c0_23, %c0_24, %c17_25, %c0_26], %8 {strides = array<i32>} : memref<1x18x18x4xf32, #tpu.memory_space<vmem>>, vector<1x18x1x4xf32>,
    %cst = arith.constant 0.000000e+00 : f32
    %10 = vector.broadcast %cst : f32 to vector<256x4xf32>
    %c0_i32 = arith.constant 0 : i32
    %c3_i32 = arith.constant 3 : i32
    %11 = arith.addi %c0_i32, %c3_i32 : i32
    %c1_i32 = arith.constant 1 : i32
    %12 = scf.for %arg6 = %c0_i32 to %11 step %c1_i32 iter_args(%arg7 = %10) -> (vector<256x4xf32>)  : i32 {
      %c0_78 = arith.constant 0 : index
      %75 = arith.index_cast %arg6 : i32 to index
      %c0_79 = arith.constant 0 : index
      %c0_80 = arith.constant 0 : index
      %76 = vector.load %arg5[%c0_78, %75, %c0_79, %c0_80] : memref<1x18x18x4xf32, #tpu.memory_space<vmem>>, vector<1x16x16x4xf32>
      %c3_i32_81 = arith.constant 3 : i32
      %77 = arith.muli %arg6, %c3_i32_81 : i32
      %c0_i32_82 = arith.constant 0 : i32
      %78 = arith.addi %77, %c0_i32_82 : i32
      %79 = arith.index_cast %78 : i32 to index
      %c0_83 = arith.constant 0 : index
      %c0_84 = arith.constant 0 : index
      %80 = vector.load %arg2[%79, %c0_83, %c0_84] : memref<9x4x4xf32, #tpu.memory_space<vmem>>, vector<1x4x4xf32>
      %81 = vector.shape_cast %80 : vector<1x4x4xf32> to vector<4x4xf32>
      %82 = vector.shape_cast %76 : vector<1x16x16x4xf32> to vector<256x4xf32>
      %cst_85 = arith.constant dense<0.000000e+00> : vector<256x4xf32>
      %83 = tpu.matmul %82, %81, %cst_85 {dimension_numbers = #tpu.dot_dimension_numbers<[1], [0], [0], [1], [0, 0, 1, 1], [], []>} : vector<256x4xf32>, vector<4x4xf32>, vector<256x4xf32> -> vector<256x4xf32>
      %84 = arith.addf %arg7, %83 : vector<256x4xf32>
      %c0_86 = arith.constant 0 : index
      %85 = arith.index_cast %arg6 : i32 to index
      %c1_87 = arith.constant 1 : index
      %c0_88 = arith.constant 0 : index
      %86 = vector.load %arg5[%c0_86, %85, %c1_87, %c0_88] : memref<1x18x18x4xf32, #tpu.memory_space<vmem>>, vector<1x16x16x4xf32>
      %c3_i32_89 = arith.constant 3 : i32
      %87 = arith.muli %arg6, %c3_i32_89 : i32
      %c1_i32_90 = arith.constant 1 : i32
      %88 = arith.addi %87, %c1_i32_90 : i32
      %89 = arith.index_cast %88 : i32 to index
      %c0_91 = arith.constant 0 : index
      %c0_92 = arith.constant 0 : index
      %90 = vector.load %arg2[%89, %c0_91, %c0_92] : memref<9x4x4xf32, #tpu.memory_space<vmem>>, vector<1x4x4xf32>
      %91 = vector.shape_cast %90 : vector<1x4x4xf32> to vector<4x4xf32>
      %92 = vector.shape_cast %86 : vector<1x16x16x4xf32> to vector<256x4xf32>
      %cst_93 = arith.constant dense<0.000000e+00> : vector<256x4xf32>
      %93 = tpu.matmul %92, %91, %cst_93 {dimension_numbers = #tpu.dot_dimension_numbers<[1], [0], [0], [1], [0, 0, 1, 1], [], []>} : vector<256x4xf32>, vector<4x4xf32>, vector<256x4xf32> -> vector<256x4xf32>
      %94 = arith.addf %84, %93 : vector<256x4xf32>
      %c0_94 = arith.constant 0 : index
      %95 = arith.index_cast %arg6 : i32 to index
      %c2_95 = arith.constant 2 : index
      %c0_96 = arith.constant 0 : index
      %96 = vector.load %arg5[%c0_94, %95, %c2_95, %c0_96] : memref<1x18x18x4xf32, #tpu.memory_space<vmem>>, vector<1x16x16x4xf32>
      %c3_i32_97 = arith.constant 3 : i32
      %97 = arith.muli %arg6, %c3_i32_97 : i32
      %c2_i32 = arith.constant 2 : i32
      %98 = arith.addi %97, %c2_i32 : i32
      %99 = arith.index_cast %98 : i32 to index
      %c0_98 = arith.constant 0 : index
      %c0_99 = arith.constant 0 : index
      %100 = vector.load %arg2[%99, %c0_98, %c0_99] : memref<9x4x4xf32, #tpu.memory_space<vmem>>, vector<1x4x4xf32>
      %101 = vector.shape_cast %100 : vector<1x4x4xf32> to vector<4x4xf32>
      %102 = vector.shape_cast %96 : vector<1x16x16x4xf32> to vector<256x4xf32>
      %cst_100 = arith.constant dense<0.000000e+00> : vector<256x4xf32>
      %103 = tpu.matmul %102, %101, %cst_100 {dimension_numbers = #tpu.dot_dimension_numbers<[1], [0], [0], [1], [0, 0, 1, 1], [], []>} : vector<256x4xf32>, vector<4x4xf32>, vector<256x4xf32> -> vector<256x4xf32>
      %104 = arith.addf %94, %103 : vector<256x4xf32>
      scf.yield %104 : vector<256x4xf32>
    }
    %c3_i32_27 = arith.constant 3 : i32
    %13 = vector.shape_cast %12 : vector<256x4xf32> to vector<1x256x4xf32>
    %cst_28 = arith.constant dense<0.000000e+00> : vector<1x4xf32>
    %14 = vector.multi_reduction <add>, %13, %cst_28 [1] : vector<1x256x4xf32> to vector<1x4xf32>
    %15 = vector.shape_cast %14 : vector<1x4xf32> to vector<1x1x4xf32>
    %cst_29 = arith.constant 3.906250e-03 : f32
    %16 = vector.broadcast %cst_29 : f32 to vector<1x1x4xf32>
    %17 = arith.mulf %15, %16 : vector<1x1x4xf32>
    %18 = arith.mulf %13, %13 : vector<1x256x4xf32>
    %cst_30 = arith.constant dense<0.000000e+00> : vector<1x4xf32>
    %19 = vector.multi_reduction <add>, %18, %cst_30 [1] : vector<1x256x4xf32> to vector<1x4xf32>
    %20 = vector.shape_cast %19 : vector<1x4xf32> to vector<1x1x4xf32>
    %cst_31 = arith.constant 3.906250e-03 : f32
    %21 = vector.broadcast %cst_31 : f32 to vector<1x1x4xf32>
    %22 = arith.mulf %20, %21 : vector<1x1x4xf32>
    %23 = arith.mulf %17, %17 : vector<1x1x4xf32>
    %24 = arith.subf %22, %23 : vector<1x1x4xf32>
    %cst_32 = arith.constant 0.000000e+00 : f32
    %25 = vector.broadcast %cst_32 : f32 to vector<1x1x4xf32>
    %26 = arith.maximumf %24, %25 : vector<1x1x4xf32>
    %27 = vector.broadcast %17 : vector<1x1x4xf32> to vector<1x256x4xf32>
    %28 = arith.subf %13, %27 : vector<1x256x4xf32>
    %cst_33 = arith.constant 9.99999974E-6 : f32
    %29 = vector.broadcast %cst_33 : f32 to vector<1x1x4xf32>
    %30 = arith.addf %26, %29 : vector<1x1x4xf32>
    %31 = math.rsqrt %30 : vector<1x1x4xf32>
    %32 = vector.broadcast %31 : vector<1x1x4xf32> to vector<1x256x4xf32>
    %33 = arith.mulf %28, %32 : vector<1x256x4xf32>
    %34 = vector.shape_cast %33 : vector<1x256x4xf32> to vector<256x4xf32>
    %cst_34 = arith.constant 0.000000e+00 : f32
    %35 = vector.broadcast %cst_34 : f32 to vector<256x4xf32>
    %36 = arith.maximumf %34, %35 : vector<256x4xf32>
    %37 = vector.shape_cast %36 : vector<256x4xf32> to vector<1x16x16x4xf32>
    %c0_35 = arith.constant 0 : index
    %c1_36 = arith.constant 1 : index
    %c1_37 = arith.constant 1 : index
    %c0_38 = arith.constant 0 : index
    %38 = vector.load %arg5[%c0_35, %c1_36, %c1_37, %c0_38] : memref<1x18x18x4xf32, #tpu.memory_space<vmem>>, vector<1x16x16x4xf32>
    tpu.vector_store %arg5[%c0_35, %c1_36, %c1_37, %c0_38], %37 {strides = array<i32>} : memref<1x18x18x4xf32, #tpu.memory_space<vmem>>, vector<1x16x16x4xf32>,
    %39 = vector.extract_strided_slice %37 {offsets = [0, 1, 0, 0], sizes = [1, 1, 16, 4], strides = [1, 1, 1, 1]} : vector<1x16x16x4xf32> to vector<1x1x16x4xf32>
    %c0_39 = arith.constant 0 : index
    %c0_40 = arith.constant 0 : index
    %c1_41 = arith.constant 1 : index
    %c0_42 = arith.constant 0 : index
    %40 = vector.load %arg5[%c0_39, %c0_40, %c1_41, %c0_42] : memref<1x18x18x4xf32, #tpu.memory_space<vmem>>, vector<1x1x16x4xf32>
    tpu.vector_store %arg5[%c0_39, %c0_40, %c1_41, %c0_42], %39 {strides = array<i32>} : memref<1x18x18x4xf32, #tpu.memory_space<vmem>>, vector<1x1x16x4xf32>,
    %41 = vector.extract_strided_slice %37 {offsets = [0, 14, 0, 0], sizes = [1, 1, 16, 4], strides = [1, 1, 1, 1]} : vector<1x16x16x4xf32> to vector<1x1x16x4xf32>
    %c0_43 = arith.constant 0 : index
    %c17_44 = arith.constant 17 : index
    %c1_45 = arith.constant 1 : index
    %c0_46 = arith.constant 0 : index
    %42 = vector.load %arg5[%c0_43, %c17_44, %c1_45, %c0_46] : memref<1x18x18x4xf32, #tpu.memory_space<vmem>>, vector<1x1x16x4xf32>
    tpu.vector_store %arg5[%c0_43, %c17_44, %c1_45, %c0_46], %41 {strides = array<i32>} : memref<1x18x18x4xf32, #tpu.memory_space<vmem>>, vector<1x1x16x4xf32>,
    %c0_47 = arith.constant 0 : index
    %c0_48 = arith.constant 0 : index
    %c2_49 = arith.constant 2 : index
    %c0_50 = arith.constant 0 : index
    %43 = vector.load %arg5[%c0_47, %c0_48, %c2_49, %c0_50] : memref<1x18x18x4xf32, #tpu.memory_space<vmem>>, vector<1x18x1x4xf32>
    %c0_51 = arith.constant 0 : index
    %c0_52 = arith.constant 0 : index
    %c0_53 = arith.constant 0 : index
    %c0_54 = arith.constant 0 : index
    %44 = vector.load %arg5[%c0_51, %c0_52, %c0_53, %c0_54] : memref<1x18x18x4xf32, #tpu.memory_space<vmem>>, vector<1x18x1x4xf32>
    tpu.vector_store %arg5[%c0_51, %c0_52, %c0_53, %c0_54], %43 {strides = array<i32>} : memref<1x18x18x4xf32, #tpu.memory_space<vmem>>, vector<1x18x1x4xf32>,
    %c0_55 = arith.constant 0 : index
    %c0_56 = arith.constant 0 : index
    %c15_57 = arith.constant 15 : index
    %c0_58 = arith.constant 0 : index
    %45 = vector.load %arg5[%c0_55, %c0_56, %c15_57, %c0_58] : memref<1x18x18x4xf32, #tpu.memory_space<vmem>>, vector<1x18x1x4xf32>
    %c0_59 = arith.constant 0 : index
    %c0_60 = arith.constant 0 : index
    %c17_61 = arith.constant 17 : index
    %c0_62 = arith.constant 0 : index
    %46 = vector.load %arg5[%c0_59, %c0_60, %c17_61, %c0_62] : memref<1x18x18x4xf32, #tpu.memory_space<vmem>>, vector<1x18x1x4xf32>
    tpu.vector_store %arg5[%c0_59, %c0_60, %c17_61, %c0_62], %45 {strides = array<i32>} : memref<1x18x18x4xf32, #tpu.memory_space<vmem>>, vector<1x18x1x4xf32>,
    %cst_63 = arith.constant 0.000000e+00 : f32
    %47 = vector.broadcast %cst_63 : f32 to vector<256x4xf32>
    %c0_i32_64 = arith.constant 0 : i32
    %c3_i32_65 = arith.constant 3 : i32
    %48 = arith.addi %c0_i32_64, %c3_i32_65 : i32
    %c1_i32_66 = arith.constant 1 : i32
    %49 = scf.for %arg6 = %c0_i32_64 to %48 step %c1_i32_66 iter_args(%arg7 = %47) -> (vector<256x4xf32>)  : i32 {
      %c0_78 = arith.constant 0 : index
      %75 = arith.index_cast %arg6 : i32 to index
      %c0_79 = arith.constant 0 : index
      %c0_80 = arith.constant 0 : index
      %76 = vector.load %arg5[%c0_78, %75, %c0_79, %c0_80] : memref<1x18x18x4xf32, #tpu.memory_space<vmem>>, vector<1x16x16x4xf32>
      %c3_i32_81 = arith.constant 3 : i32
      %77 = arith.muli %arg6, %c3_i32_81 : i32
      %c0_i32_82 = arith.constant 0 : i32
      %78 = arith.addi %77, %c0_i32_82 : i32
      %79 = arith.index_cast %78 : i32 to index
      %c0_83 = arith.constant 0 : index
      %c0_84 = arith.constant 0 : index
      %80 = vector.load %arg3[%79, %c0_83, %c0_84] : memref<9x4x4xf32, #tpu.memory_space<vmem>>, vector<1x4x4xf32>
      %81 = vector.shape_cast %80 : vector<1x4x4xf32> to vector<4x4xf32>
      %82 = vector.shape_cast %76 : vector<1x16x16x4xf32> to vector<256x4xf32>
      %cst_85 = arith.constant dense<0.000000e+00> : vector<256x4xf32>
      %83 = tpu.matmul %82, %81, %cst_85 {dimension_numbers = #tpu.dot_dimension_numbers<[1], [0], [0], [1], [0, 0, 1, 1], [], []>} : vector<256x4xf32>, vector<4x4xf32>, vector<256x4xf32> -> vector<256x4xf32>
      %84 = arith.addf %arg7, %83 : vector<256x4xf32>
      %c0_86 = arith.constant 0 : index
      %85 = arith.index_cast %arg6 : i32 to index
      %c1_87 = arith.constant 1 : index
      %c0_88 = arith.constant 0 : index
      %86 = vector.load %arg5[%c0_86, %85, %c1_87, %c0_88] : memref<1x18x18x4xf32, #tpu.memory_space<vmem>>, vector<1x16x16x4xf32>
      %c3_i32_89 = arith.constant 3 : i32
      %87 = arith.muli %arg6, %c3_i32_89 : i32
      %c1_i32_90 = arith.constant 1 : i32
      %88 = arith.addi %87, %c1_i32_90 : i32
      %89 = arith.index_cast %88 : i32 to index
      %c0_91 = arith.constant 0 : index
      %c0_92 = arith.constant 0 : index
      %90 = vector.load %arg3[%89, %c0_91, %c0_92] : memref<9x4x4xf32, #tpu.memory_space<vmem>>, vector<1x4x4xf32>
      %91 = vector.shape_cast %90 : vector<1x4x4xf32> to vector<4x4xf32>
      %92 = vector.shape_cast %86 : vector<1x16x16x4xf32> to vector<256x4xf32>
      %cst_93 = arith.constant dense<0.000000e+00> : vector<256x4xf32>
      %93 = tpu.matmul %92, %91, %cst_93 {dimension_numbers = #tpu.dot_dimension_numbers<[1], [0], [0], [1], [0, 0, 1, 1], [], []>} : vector<256x4xf32>, vector<4x4xf32>, vector<256x4xf32> -> vector<256x4xf32>
      %94 = arith.addf %84, %93 : vector<256x4xf32>
      %c0_94 = arith.constant 0 : index
      %95 = arith.index_cast %arg6 : i32 to index
      %c2_95 = arith.constant 2 : index
      %c0_96 = arith.constant 0 : index
      %96 = vector.load %arg5[%c0_94, %95, %c2_95, %c0_96] : memref<1x18x18x4xf32, #tpu.memory_space<vmem>>, vector<1x16x16x4xf32>
      %c3_i32_97 = arith.constant 3 : i32
      %97 = arith.muli %arg6, %c3_i32_97 : i32
      %c2_i32 = arith.constant 2 : i32
      %98 = arith.addi %97, %c2_i32 : i32
      %99 = arith.index_cast %98 : i32 to index
      %c0_98 = arith.constant 0 : index
      %c0_99 = arith.constant 0 : index
      %100 = vector.load %arg3[%99, %c0_98, %c0_99] : memref<9x4x4xf32, #tpu.memory_space<vmem>>, vector<1x4x4xf32>
      %101 = vector.shape_cast %100 : vector<1x4x4xf32> to vector<4x4xf32>
      %102 = vector.shape_cast %96 : vector<1x16x16x4xf32> to vector<256x4xf32>
      %cst_100 = arith.constant dense<0.000000e+00> : vector<256x4xf32>
      %103 = tpu.matmul %102, %101, %cst_100 {dimension_numbers = #tpu.dot_dimension_numbers<[1], [0], [0], [1], [0, 0, 1, 1], [], []>} : vector<256x4xf32>, vector<4x4xf32>, vector<256x4xf32> -> vector<256x4xf32>
      %104 = arith.addf %94, %103 : vector<256x4xf32>
      scf.yield %104 : vector<256x4xf32>
    }
    %c3_i32_67 = arith.constant 3 : i32
    %50 = vector.shape_cast %49 : vector<256x4xf32> to vector<1x256x4xf32>
    %cst_68 = arith.constant dense<0.000000e+00> : vector<1x4xf32>
    %51 = vector.multi_reduction <add>, %50, %cst_68 [1] : vector<1x256x4xf32> to vector<1x4xf32>
    %52 = vector.shape_cast %51 : vector<1x4xf32> to vector<1x1x4xf32>
    %cst_69 = arith.constant 3.906250e-03 : f32
    %53 = vector.broadcast %cst_69 : f32 to vector<1x1x4xf32>
    %54 = arith.mulf %52, %53 : vector<1x1x4xf32>
    %55 = arith.mulf %50, %50 : vector<1x256x4xf32>
    %cst_70 = arith.constant dense<0.000000e+00> : vector<1x4xf32>
    %56 = vector.multi_reduction <add>, %55, %cst_70 [1] : vector<1x256x4xf32> to vector<1x4xf32>
    %57 = vector.shape_cast %56 : vector<1x4xf32> to vector<1x1x4xf32>
    %cst_71 = arith.constant 3.906250e-03 : f32
    %58 = vector.broadcast %cst_71 : f32 to vector<1x1x4xf32>
    %59 = arith.mulf %57, %58 : vector<1x1x4xf32>
    %60 = arith.mulf %54, %54 : vector<1x1x4xf32>
    %61 = arith.subf %59, %60 : vector<1x1x4xf32>
    %cst_72 = arith.constant 0.000000e+00 : f32
    %62 = vector.broadcast %cst_72 : f32 to vector<1x1x4xf32>
    %63 = arith.maximumf %61, %62 : vector<1x1x4xf32>
    %64 = vector.broadcast %54 : vector<1x1x4xf32> to vector<1x256x4xf32>
    %65 = arith.subf %50, %64 : vector<1x256x4xf32>
    %cst_73 = arith.constant 9.99999974E-6 : f32
    %66 = vector.broadcast %cst_73 : f32 to vector<1x1x4xf32>
    %67 = arith.addf %63, %66 : vector<1x1x4xf32>
    %68 = math.rsqrt %67 : vector<1x1x4xf32>
    %69 = vector.broadcast %68 : vector<1x1x4xf32> to vector<1x256x4xf32>
    %70 = arith.mulf %65, %69 : vector<1x256x4xf32>
    %71 = vector.shape_cast %70 : vector<1x256x4xf32> to vector<256x4xf32>
    %72 = vector.shape_cast %71 : vector<256x4xf32> to vector<1x16x16x4xf32>
    %73 = arith.addf %0, %72 : vector<1x16x16x4xf32>
    %c0_74 = arith.constant 0 : index
    %c0_75 = arith.constant 0 : index
    %c0_76 = arith.constant 0 : index
    %c0_77 = arith.constant 0 : index
    %74 = vector.load %arg4[%c0_74, %c0_75, %c0_76, %c0_77] : memref<1x16x16x4xf32, #tpu.memory_space<vmem>>, vector<1x16x16x4xf32>
    tpu.vector_store %arg4[%c0_74, %c0_75, %c0_76, %c0_77], %73 {strides = array<i32>} : memref<1x16x16x4xf32, #tpu.memory_space<vmem>>, vector<1x16x16x4xf32>,
    return
  }
  func.func @transform_0(%arg0: i32) -> (i32, i32, i32, i32) {
    %c0_i32 = arith.constant 0 : i32
    %c0_i32_0 = arith.constant 0 : i32
    %c0_i32_1 = arith.constant 0 : i32
    %c0_i32_2 = arith.constant 0 : i32
    return %arg0, %c0_i32, %c0_i32_0, %c0_i32_1 : i32, i32, i32, i32
  }
  func.func @transform_1(%arg0: i32) -> (i32, i32, i32) {
    %c0_i32 = arith.constant 0 : i32
    %c0_i32_0 = arith.constant 0 : i32
    %c0_i32_1 = arith.constant 0 : i32
    %c0_i32_2 = arith.constant 0 : i32
    return %c0_i32, %c0_i32_0, %c0_i32_1 : i32, i32, i32
  }
  func.func @transform_2(%arg0: i32) -> (i32, i32, i32) {
    %c0_i32 = arith.constant 0 : i32
    %c0_i32_0 = arith.constant 0 : i32
    %c0_i32_1 = arith.constant 0 : i32
    %c0_i32_2 = arith.constant 0 : i32
    return %c0_i32, %c0_i32_0, %c0_i32_1 : i32, i32, i32
  }
  func.func @transform_3(%arg0: i32) -> (i32, i32, i32, i32) {
    %c0_i32 = arith.constant 0 : i32
    %c0_i32_0 = arith.constant 0 : i32
    %c0_i32_1 = arith.constant 0 : i32
    %c0_i32_2 = arith.constant 0 : i32
    return %arg0, %c0_i32, %c0_i32_0, %c0_i32_1 : i32, i32, i32, i32
  }
}

</mosaic_0001>

<llo_original>
// kernel: tpu_custom_call.1
$region0: #{tpu_custom_call.1}
  #allocation0 [shape = 'u32[]', space=smem, size = 0x4, offset = 0x4, fixed_abs, tag = 'smem constant byte address 0x4 - core index']
  #allocation1 [shape = 'u32[144,128]{1,0:T(1,128)}', space=vmem, size = 0x12000, scoped, tag = 'internal scratch']
  #allocation2 [shape = 'f32[1,18,18,4]{3,2,1,0:T(8,128)}', space=vmem, size = 0x36000, scoped, tag = 'scratch operand']
  %s0 = inlined_call_operand.vmem [shape: f32[2,16,16,4], index: 0, kind: input, shape index: {}]
  %s1 = inlined_call_operand.vmem [shape: f32[9,4,4], index: 1, kind: input, shape index: {}]
  %s2 = inlined_call_operand.vmem [shape: f32[9,4,4], index: 2, kind: input, shape index: {}]
  %s3 = inlined_call_operand.vmem [shape: f32[2,16,16,4], index: 3, kind: output, shape index: {}]
  %s4 = sld [smem:[#allocation0]]
  $region59: #{tpu_custom_call.1} parent=0
    _
  %s6 = ssub.s32 1, %s4
  %s7 = scalar_select 0, %s6, %s4
  loop: start=0, step=1, limit=4
  $region2: #{tpu_custom_call.1} parent=0 // loop_pre_header
    _
  $region3: #{tpu_custom_call.1} parent=0 // loop_header
    %s9 = sphi 0, %s13
    %p10 = scmp.ge.s32.totalorder %s9, 4
    %s19 = sphi 0, %s21
    %s22 = sphi 0, %s19
    %s23 = sphi 0, %s22
    %s39 = sphi 0, %s23
    %s43 = sphi 0, %s43
    %s45 = sphi 0, %s43
    %s46 = sphi 0, %s45
    %s60 = sphi 0, %s46
    %s64 = sphi 0, %s64
    %s66 = sphi 0, %s64
    %s67 = sphi 0, %s66
    %s81 = sphi 0, %s67
    %s87 = sphi 0, %s89
    %s90 = sphi 0, %s87
    %s91 = sphi 0, %s90
    %s107 = sphi 0, %s91
  $region4: #{tpu_custom_call.1} parent=0 // loop_header_branch
    %12 = sbr.rel (%p10) target = $region8
  $region5: #{tpu_custom_call.1} parent=0 // loop_body
    %s14 = ssub.s32 %s9, 1
    %s15 = ssub.s32 %s9, 2
    %s16 = sadd.s32 %s9, 1
    %s17 = ssub.s32 %s9, %s16
    %p18 = scmp.eq.s32.totalorder %s17, 0
    %s20 = sadd.s32 %s19, 1
    %s21 = scalar_select %p18, %s19, %s20
    %p24 = pneg %p18
    %p25 = scmp.eq.s32.totalorder %s9, 1
    %p26 = por %p24, %p25
    %p27 = scmp.ne.s32.totalorder %s19, %s22
    %p28 = scmp.eq.s32.totalorder %s9, 0
    %p29 = por %p27, %p28
    %p30 = scmp.ne.s32.totalorder %s19, %s22
    %p31 = scmp.eq.s32.totalorder %s14, 1
    %p32 = por %p30, %p31
    %p33 = scmp.ne.s32.totalorder %s22, %s23
    %p34 = scmp.eq.s32.totalorder %s14, 0
    %p35 = por %p33, %p34
    %p36 = scmp.ne.s32.totalorder %s22, %s23
    %p37 = scmp.eq.s32.totalorder %s15, 1
    %p38 = por %p36, %p37
    %p40 = scmp.ne.s32.totalorder %s23, %s39
    %p41 = scmp.eq.s32.totalorder %s15, 0
    %p42 = por %p40, %p41
    %s44 = sadd.s32 %s43, 1
    %p47 = scmp.eq.s32.totalorder %s9, 1
    %p48 = scmp.ne.s32.totalorder %s43, %s45
    %p49 = scmp.eq.s32.totalorder %s9, 0
    %p50 = por %p48, %p49
    %p51 = scmp.ne.s32.totalorder %s43, %s45
    %p52 = scmp.eq.s32.totalorder %s14, 1
    %p53 = por %p51, %p52
    %p54 = scmp.ne.s32.totalorder %s45, %s46
    %p55 = scmp.eq.s32.totalorder %s14, 0
    %p56 = por %p54, %p55
    %p57 = scmp.ne.s32.totalorder %s45, %s46
    %p58 = scmp.eq.s32.totalorder %s15, 1
    %p59 = por %p57, %p58
    %p61 = scmp.ne.s32.totalorder %s46, %s60
    %p62 = scmp.eq.s32.totalorder %s15, 0
    %p63 = por %p61, %p62
    %s65 = sadd.s32 %s64, 1
    %p68 = scmp.eq.s32.totalorder %s9, 1
    %p69 = scmp.ne.s32.totalorder %s64, %s66
    %p70 = scmp.eq.s32.totalorder %s9, 0
    %p71 = por %p69, %p70
    %p72 = scmp.ne.s32.totalorder %s64, %s66
    %p73 = scmp.eq.s32.totalorder %s14, 1
    %p74 = por %p72, %p73
    %p75 = scmp.ne.s32.totalorder %s66, %s67
    %p76 = scmp.eq.s32.totalorder %s14, 0
    %p77 = por %p75, %p76
    %p78 = scmp.ne.s32.totalorder %s66, %s67
    %p79 = scmp.eq.s32.totalorder %s15, 1
    %p80 = por %p78, %p79
    %p82 = scmp.ne.s32.totalorder %s67, %s81
    %p83 = scmp.eq.s32.totalorder %s15, 0
    %p84 = por %p82, %p83
    %s85 = ssub.s32 %s9, %s16
    %p86 = scmp.eq.s32.totalorder %s85, 0
    %s88 = sadd.s32 %s87, 1
    %s89 = scalar_select %p86, %s87, %s88
    %p92 = pneg %p86
    %p93 = scmp.eq.s32.totalorder %s9, 1
    %p94 = por %p92, %p93
    %p95 = scmp.ne.s32.totalorder %s87, %s90
    %p96 = scmp.eq.s32.totalorder %s9, 0
    %p97 = por %p95, %p96
    %p98 = scmp.ne.s32.totalorder %s87, %s90
    %p99 = scmp.eq.s32.totalorder %s14, 1
    %p100 = por %p98, %p99
    %p101 = scmp.ne.s32.totalorder %s90, %s91
    %p102 = scmp.eq.s32.totalorder %s14, 0
    %p103 = por %p101, %p102
    %p104 = scmp.ne.s32.totalorder %s90, %s91
    %p105 = scmp.eq.s32.totalorder %s15, 1
    %p106 = por %p104, %p105
    %p108 = scmp.ne.s32.totalorder %s91, %s107
    %p109 = scmp.eq.s32.totalorder %s15, 0
    %p110 = por %p108, %p109
    %p111 = scmp.le.s32.totalorder 1, %s9
    %p112 = scmp.lt.s32.totalorder %s9, 3
    %p113 = pnand %p111, %p112
    %p114 = pneg %p113
    // Predicated region
    $region9: #{tpu_custom_call.1} parent=5 // pred_check
      _
    $region10: #{tpu_custom_call.1} parent=5 // pred_check_branch
      %116 = sbr.rel (%p113) target = $region12
    $region11: #{tpu_custom_call.1} parent=5 // pred_region
      %s117 = ssub.s32 %s9, 1
      // Predicated region
      $region13: #{tpu_custom_call.1} parent=11 // pred_check
        %p118 = pneg %p56
      $region14: #{tpu_custom_call.1} parent=11 // pred_check_branch
        %120 = sbr.rel (%p118) target = $region16
      $region15: #{tpu_custom_call.1} parent=11 // pred_region
        _
      $region16: #{tpu_custom_call.1} parent=11 // pred_fallthru
        _
      // Predicated region
      $region17: #{tpu_custom_call.1} parent=11 // pred_check
        %p121 = pneg %p77
      $region18: #{tpu_custom_call.1} parent=11 // pred_check_branch
        %123 = sbr.rel (%p121) target = $region20
      $region19: #{tpu_custom_call.1} parent=11 // pred_region
        _
      $region20: #{tpu_custom_call.1} parent=11 // pred_fallthru
        _
    $region12: #{tpu_custom_call.1} parent=5 // pred_fallthru
      _
    %p124 = scmp.lt.s32.totalorder %s9, 2
    // Predicated region
    $region21: #{tpu_custom_call.1} parent=5 // pred_check
      %p125 = pneg %p124
    $region22: #{tpu_custom_call.1} parent=5 // pred_check_branch
      %127 = sbr.rel (%p125) target = $region24
    $region23: #{tpu_custom_call.1} parent=5 // pred_region
      // Predicated region
      $region25: #{tpu_custom_call.1} parent=23 // pred_check
        %p128 = pneg %p29
      $region26: #{tpu_custom_call.1} parent=23 // pred_check_branch
        %130 = sbr.rel (%p128) target = $region28
      $region27: #{tpu_custom_call.1} parent=23 // pred_region
        %p131 = scmp.lt.s32.totalorder %s9, 1
        %s132 = scalar_select %p131, %s9, 1
        %s133 = smul.addr %s132, 32
        %s134 = smul.addr %s133, 8
        %s135 = scalar_lea.vmem %s0, %s134
      $region28: #{tpu_custom_call.1} parent=23 // pred_fallthru
        _
    $region24: #{tpu_custom_call.1} parent=5 // pred_fallthru
      _
    %p136 = scmp.le.s32.totalorder 1, %s9
    %p137 = scmp.lt.s32.totalorder %s9, 3
    %p138 = pnand %p136, %p137
    %p139 = pneg %p138
    // Predicated region
    $region29: #{tpu_custom_call.1} parent=5 // pred_check
      _
    $region30: #{tpu_custom_call.1} parent=5 // pred_check_branch
      %141 = sbr.rel (%p138) target = $region32
    $region31: #{tpu_custom_call.1} parent=5 // pred_region
      %s142 = ssub.s32 %s9, 1
      %p143 = scmp.lt.s32.totalorder %s14, 1
      %s144 = scalar_select %p143, %s14, 1
      %s145 = smul.addr %s144, 32
      %s146 = smul.addr %s145, 8
      %s147 = scalar_lea.vmem %s0, %s146
      %p148 = pneg %p35
      %p149 = pneg %p32
      %p150 = pneg %p56
      %p151 = pneg %p53
      %p152 = pneg %p77
      %p153 = pneg %p74
      %p154 = pneg %p103
      %p155 = pneg %p100
      %p156 = scmp.lt.s32.totalorder %s14, 1
      %s157 = scalar_select %p156, %s14, 1
      %s158 = smul.addr %s157, 32
      %s159 = smul.addr %s158, 8
      %s160 = scalar_lea.vmem %s3, %s159
      %p161 = scmp.lt.s32.totalorder %s14, 1
      %s162 = scalar_select %p161, %s14, 1
      %s163 = smul.addr %s162, 32
      %s164 = smul.addr %s163, 8
      %s165 = scalar_lea.vmem %s0, %s164
      %p166 = scmp.lt.s32.totalorder %s14, 1
      %s167 = scalar_select %p166, %s14, 1
      %s168 = smul.addr %s167, 32
      %s169 = smul.addr %s168, 8
      %s170 = scalar_lea.vmem %s3, %s169
      %v171 = vld [vmem:[%s165] sm:$0xff]
      %v172 = vld [vmem:[%s165 + $0x8] sm:$0xff]
      %v173 = vld [vmem:[%s165 + $0x10] sm:$0xff]
      %v174 = vld [vmem:[%s165 + $0x18] sm:$0xff]
      %v175 = vld [vmem:[%s165 + $0x20] sm:$0xff]
      %v176 = vld [vmem:[%s165 + $0x28] sm:$0xff]
      %v177 = vld [vmem:[%s165 + $0x30] sm:$0xff]
      %v178 = vld [vmem:[%s165 + $0x38] sm:$0xff]
      %v179 = vld [vmem:[%s165 + $0x40] sm:$0xff]
      %v180 = vld [vmem:[%s165 + $0x48] sm:$0xff]
      %v181 = vld [vmem:[%s165 + $0x50] sm:$0xff]
      %v182 = vld [vmem:[%s165 + $0x58] sm:$0xff]
      %v183 = vld [vmem:[%s165 + $0x60] sm:$0xff]
      %v184 = vld [vmem:[%s165 + $0x68] sm:$0xff]
      %v185 = vld [vmem:[%s165 + $0x70] sm:$0xff]
      %v186 = vld [vmem:[%s165 + $0x78] sm:$0xff]
      %v187 = vld [vmem:[%s165 + $0x80] sm:$0xff]
      %v188 = vld [vmem:[%s165 + $0x88] sm:$0xff]
      %v189 = vld [vmem:[%s165 + $0x90] sm:$0xff]
      %v190 = vld [vmem:[%s165 + $0x98] sm:$0xff]
      %v191 = vld [vmem:[%s165 + $0xa0] sm:$0xff]
      %v192 = vld [vmem:[%s165 + $0xa8] sm:$0xff]
      %v193 = vld [vmem:[%s165 + $0xb0] sm:$0xff]
      %v194 = vld [vmem:[%s165 + $0xb8] sm:$0xff]
      %v195 = vld [vmem:[%s165 + $0xc0] sm:$0xff]
      %v196 = vld [vmem:[%s165 + $0xc8] sm:$0xff]
      %v197 = vld [vmem:[%s165 + $0xd0] sm:$0xff]
      %v198 = vld [vmem:[%s165 + $0xd8] sm:$0xff]
      %v199 = vld [vmem:[%s165 + $0xe0] sm:$0xff]
      %v200 = vld [vmem:[%s165 + $0xe8] sm:$0xff]
      %v201 = vld [vmem:[%s165 + $0xf0] sm:$0xff]
      %v202 = vld [vmem:[%s165 + $0xf8] sm:$0xff]
      %s203 = scalar_lea.vmem [#allocation2], 24
      %vm204 = vcmask 31744
      %205 = vst.msk [vmem:[%s203 + $0x1] sm:$0xff] %vm204, %v171
      %206 = vst.msk [vmem:[%s203 + $0x9] sm:$0xff] %vm204, %v172
      %207 = vst.msk [vmem:[%s203 + $0x19] sm:$0xff] %vm204, %v173
      %208 = vst.msk [vmem:[%s203 + $0x21] sm:$0xff] %vm204, %v174
      %209 = vst.msk [vmem:[%s203 + $0x31] sm:$0xff] %vm204, %v175
      %210 = vst.msk [vmem:[%s203 + $0x39] sm:$0xff] %vm204, %v176
      %211 = vst.msk [vmem:[%s203 + $0x49] sm:$0xff] %vm204, %v177
      %212 = vst.msk [vmem:[%s203 + $0x51] sm:$0xff] %vm204, %v178
      %213 = vst.msk [vmem:[%s203 + $0x61] sm:$0xff] %vm204, %v179
      %214 = vst.msk [vmem:[%s203 + $0x69] sm:$0xff] %vm204, %v180
      %215 = vst.msk [vmem:[%s203 + $0x79] sm:$0xff] %vm204, %v181
      %216 = vst.msk [vmem:[%s203 + $0x81] sm:$0xff] %vm204, %v182
      %217 = vst.msk [vmem:[%s203 + $0x91] sm:$0xff] %vm204, %v183
      %218 = vst.msk [vmem:[%s203 + $0x99] sm:$0xff] %vm204, %v184
      %219 = vst.msk [vmem:[%s203 + $0xa9] sm:$0xff] %vm204, %v185
      %220 = vst.msk [vmem:[%s203 + $0xb1] sm:$0xff] %vm204, %v186
      %221 = vst.msk [vmem:[%s203 + $0xc1] sm:$0xff] %vm204, %v187
      %222 = vst.msk [vmem:[%s203 + $0xc9] sm:$0xff] %vm204, %v188
      %223 = vst.msk [vmem:[%s203 + $0xd9] sm:$0xff] %vm204, %v189
      %224 = vst.msk [vmem:[%s203 + $0xe1] sm:$0xff] %vm204, %v190
      %225 = vst.msk [vmem:[%s203 + $0xf1] sm:$0xff] %vm204, %v191
      %226 = vst.msk [vmem:[%s203 + $0xf9] sm:$0xff] %vm204, %v192
      %227 = vst.msk [vmem:[%s203 + $0x109] sm:$0xff] %vm204, %v193
      %228 = vst.msk [vmem:[%s203 + $0x111] sm:$0xff] %vm204, %v194
      %229 = vst.msk [vmem:[%s203 + $0x121] sm:$0xff] %vm204, %v195
      %230 = vst.msk [vmem:[%s203 + $0x129] sm:$0xff] %vm204, %v196
      %231 = vst.msk [vmem:[%s203 + $0x139] sm:$0xff] %vm204, %v197
      %232 = vst.msk [vmem:[%s203 + $0x141] sm:$0xff] %vm204, %v198
      %233 = vst.msk [vmem:[%s203 + $0x151] sm:$0xff] %vm204, %v199
      %234 = vst.msk [vmem:[%s203 + $0x159] sm:$0xff] %vm204, %v200
      %235 = vst.msk [vmem:[%s203 + $0x169] sm:$0xff] %vm204, %v201
      %236 = vst.msk [vmem:[%s203 + $0x171] sm:$0xff] %vm204, %v202
      %237 = vst.msk [vmem:[#allocation2 + $0x1] sm:$0xff] %vm204, %v173
      %238 = vst.msk [vmem:[#allocation2 + $0x9] sm:$0xff] %vm204, %v174
      %s239 = scalar_lea.vmem [#allocation2], 408
      %240 = vst.msk [vmem:[%s239 + $0x1] sm:$0xff] %vm204, %v199
      %241 = vst.msk [vmem:[%s239 + $0x9] sm:$0xff] %vm204, %v200
      %v242 = vld [vmem:[#allocation2 + $0x2] sm:$0x1]
      %v243 = vld [vmem:[#allocation2 + $0x1a] sm:$0x1]
      %v244 = vld [vmem:[#allocation2 + $0x32] sm:$0x1]
      %v245 = vld [vmem:[#allocation2 + $0x4a] sm:$0x1]
      %v246 = vld [vmem:[#allocation2 + $0x62] sm:$0x1]
      %v247 = vld [vmem:[#allocation2 + $0x7a] sm:$0x1]
      %v248 = vld [vmem:[#allocation2 + $0x92] sm:$0x1]
      %v249 = vld [vmem:[#allocation2 + $0xaa] sm:$0x1]
      %v250 = vld [vmem:[#allocation2 + $0xc2] sm:$0x1]
      %v251 = vld [vmem:[#allocation2 + $0xda] sm:$0x1]
      %v252 = vld [vmem:[#allocation2 + $0xf2] sm:$0x1]
      %v253 = vld [vmem:[#allocation2 + $0x10a] sm:$0x1]
      %v254 = vld [vmem:[#allocation2 + $0x122] sm:$0x1]
      %v255 = vld [vmem:[#allocation2 + $0x13a] sm:$0x1]
      %v256 = vld [vmem:[#allocation2 + $0x152] sm:$0x1]
      %v257 = vld [vmem:[#allocation2 + $0x16a] sm:$0x1]
      %v258 = vld [vmem:[#allocation2 + $0x182] sm:$0x1]
      %v259 = vld [vmem:[#allocation2 + $0x19a] sm:$0x1]
      %vm260 = vcmask 24576
      %261 = vst.msk [vmem:[#allocation2] sm:$0x1] %vm260, %v242
      %262 = vst.msk [vmem:[#allocation2 + $0x18] sm:$0x1] %vm260, %v243
      %263 = vst.msk [vmem:[#allocation2 + $0x30] sm:$0x1] %vm260, %v244
      %264 = vst.msk [vmem:[#allocation2 + $0x48] sm:$0x1] %vm260, %v245
      %265 = vst.msk [vmem:[#allocation2 + $0x60] sm:$0x1] %vm260, %v246
      %266 = vst.msk [vmem:[#allocation2 + $0x78] sm:$0x1] %vm260, %v247
      %267 = vst.msk [vmem:[#allocation2 + $0x90] sm:$0x1] %vm260, %v248
      %268 = vst.msk [vmem:[#allocation2 + $0xa8] sm:$0x1] %vm260, %v249
      %269 = vst.msk [vmem:[#allocation2 + $0xc0] sm:$0x1] %vm260, %v250
      %270 = vst.msk [vmem:[#allocation2 + $0xd8] sm:$0x1] %vm260, %v251
      %271 = vst.msk [vmem:[#allocation2 + $0xf0] sm:$0x1] %vm260, %v252
      %272 = vst.msk [vmem:[#allocation2 + $0x108] sm:$0x1] %vm260, %v253
      %273 = vst.msk [vmem:[#allocation2 + $0x120] sm:$0x1] %vm260, %v254
      %274 = vst.msk [vmem:[#allocation2 + $0x138] sm:$0x1] %vm260, %v255
      %275 = vst.msk [vmem:[#allocation2 + $0x150] sm:$0x1] %vm260, %v256
      %276 = vst.msk [vmem:[#allocation2 + $0x168] sm:$0x1] %vm260, %v257
      %277 = vst.msk [vmem:[#allocation2 + $0x180] sm:$0x1] %vm260, %v258
      %278 = vst.msk [vmem:[#allocation2 + $0x198] sm:$0x1] %vm260, %v259
      %v279 = vld [vmem:[#allocation2 + $0xf] sm:$0x1]
      %v280 = vld [vmem:[#allocation2 + $0x27] sm:$0x1]
      %v281 = vld [vmem:[#allocation2 + $0x3f] sm:$0x1]
      %v282 = vld [vmem:[#allocation2 + $0x57] sm:$0x1]
      %v283 = vld [vmem:[#allocation2 + $0x6f] sm:$0x1]
      %v284 = vld [vmem:[#allocation2 + $0x87] sm:$0x1]
      %v285 = vld [vmem:[#allocation2 + $0x9f] sm:$0x1]
      %v286 = vld [vmem:[#allocation2 + $0xb7] sm:$0x1]
      %v287 = vld [vmem:[#allocation2 + $0xcf] sm:$0x1]
      %v288 = vld [vmem:[#allocation2 + $0xe7] sm:$0x1]
      %v289 = vld [vmem:[#allocation2 + $0xff] sm:$0x1]
      %v290 = vld [vmem:[#allocation2 + $0x117] sm:$0x1]
      %v291 = vld [vmem:[#allocation2 + $0x12f] sm:$0x1]
      %v292 = vld [vmem:[#allocation2 + $0x147] sm:$0x1]
      %v293 = vld [vmem:[#allocation2 + $0x15f] sm:$0x1]
      %v294 = vld [vmem:[#allocation2 + $0x177] sm:$0x1]
      %v295 = vld [vmem:[#allocation2 + $0x18f] sm:$0x1]
      %v296 = vld [vmem:[#allocation2 + $0x1a7] sm:$0x1]
      %297 = vst.msk [vmem:[#allocation2 + $0x11] sm:$0x1] %vm260, %v279
      %298 = vst.msk [vmem:[#allocation2 + $0x29] sm:$0x1] %vm260, %v280
      %299 = vst.msk [vmem:[#allocation2 + $0x41] sm:$0x1] %vm260, %v281
      %300 = vst.msk [vmem:[#allocation2 + $0x59] sm:$0x1] %vm260, %v282
      %301 = vst.msk [vmem:[#allocation2 + $0x71] sm:$0x1] %vm260, %v283
      %302 = vst.msk [vmem:[#allocation2 + $0x89] sm:$0x1] %vm260, %v284
      %303 = vst.msk [vmem:[#allocation2 + $0xa1] sm:$0x1] %vm260, %v285
      %304 = vst.msk [vmem:[#allocation2 + $0xb9] sm:$0x1] %vm260, %v286
      %305 = vst.msk [vmem:[#allocation2 + $0xd1] sm:$0x1] %vm260, %v287
      %306 = vst.msk [vmem:[#allocation2 + $0xe9] sm:$0x1] %vm260, %v288
      %307 = vst.msk [vmem:[#allocation2 + $0x101] sm:$0x1] %vm260, %v289
      %308 = vst.msk [vmem:[#allocation2 + $0x119] sm:$0x1] %vm260, %v290
      %309 = vst.msk [vmem:[#allocation2 + $0x131] sm:$0x1] %vm260, %v291
      %310 = vst.msk [vmem:[#allocation2 + $0x149] sm:$0x1] %vm260, %v292
      %311 = vst.msk [vmem:[#allocation2 + $0x161] sm:$0x1] %vm260, %v293
      %312 = vst.msk [vmem:[#allocation2 + $0x179] sm:$0x1] %vm260, %v294
      %313 = vst.msk [vmem:[#allocation2 + $0x191] sm:$0x1] %vm260, %v295
      %314 = vst.msk [vmem:[#allocation2 + $0x1a9] sm:$0x1] %vm260, %v296
      loop: start=0, step=1, limit=3
      $region33: #{tpu_custom_call.1} parent=31 // loop_pre_header
        _
      $region34: #{tpu_custom_call.1} parent=31 // loop_header
        %s316 = sphi 0, %s320
        %p317 = scmp.ge.s32.totalorder %s316, 3
        %v321 = vphi 0.0, %v1500
        %v322 = vphi 0.0, %v1501
        %v323 = vphi 0.0, %v1502
        %v324 = vphi 0.0, %v1503
        %v325 = vphi 0.0, %v1504
        %v326 = vphi 0.0, %v1505
        %v327 = vphi 0.0, %v1506
        %v328 = vphi 0.0, %v1507
        %v329 = vphi 0.0, %v1508
        %v330 = vphi 0.0, %v1509
        %v331 = vphi 0.0, %v1510
        %v332 = vphi 0.0, %v1511
        %v333 = vphi 0.0, %v1512
        %v334 = vphi 0.0, %v1513
        %v335 = vphi 0.0, %v1514
        %v336 = vphi 0.0, %v1515
        %v337 = vphi 0.0, %v1516
        %v338 = vphi 0.0, %v1517
        %v339 = vphi 0.0, %v1518
        %v340 = vphi 0.0, %v1519
        %v341 = vphi 0.0, %v1520
        %v342 = vphi 0.0, %v1521
        %v343 = vphi 0.0, %v1522
        %v344 = vphi 0.0, %v1523
        %v345 = vphi 0.0, %v1524
        %v346 = vphi 0.0, %v1525
        %v347 = vphi 0.0, %v1526
        %v348 = vphi 0.0, %v1527
        %v349 = vphi 0.0, %v1528
        %v350 = vphi 0.0, %v1529
        %v351 = vphi 0.0, %v1530
        %v352 = vphi 0.0, %v1531
      $region35: #{tpu_custom_call.1} parent=31 // loop_header_branch
        %319 = sbr.rel (%p317) target = $region39
      $region36: #{tpu_custom_call.1} parent=31 // loop_body
        %s353 = smul.u32 %s316, 24
        %s354 = scalar_lea.vmem [#allocation2], %s353
        %v355 = vld [vmem:[%s354] sm:$0xff]
        %v356 = vld [vmem:[%s354 + $0x8] sm:$0xff]
        %v357 = vld [vmem:[%s354 + $0x18] sm:$0xff]
        %v358 = vld [vmem:[%s354 + $0x20] sm:$0xff]
        %v359 = vld [vmem:[%s354 + $0x30] sm:$0xff]
        %v360 = vld [vmem:[%s354 + $0x38] sm:$0xff]
        %v361 = vld [vmem:[%s354 + $0x48] sm:$0xff]
        %v362 = vld [vmem:[%s354 + $0x50] sm:$0xff]
        %v363 = vld [vmem:[%s354 + $0x60] sm:$0xff]
        %v364 = vld [vmem:[%s354 + $0x68] sm:$0xff]
        %v365 = vld [vmem:[%s354 + $0x78] sm:$0xff]
        %v366 = vld [vmem:[%s354 + $0x80] sm:$0xff]
        %v367 = vld [vmem:[%s354 + $0x90] sm:$0xff]
        %v368 = vld [vmem:[%s354 + $0x98] sm:$0xff]
        %v369 = vld [vmem:[%s354 + $0xa8] sm:$0xff]
        %v370 = vld [vmem:[%s354 + $0xb0] sm:$0xff]
        %v371 = vld [vmem:[%s354 + $0xc0] sm:$0xff]
        %v372 = vld [vmem:[%s354 + $0xc8] sm:$0xff]
        %v373 = vld [vmem:[%s354 + $0xd8] sm:$0xff]
        %v374 = vld [vmem:[%s354 + $0xe0] sm:$0xff]
        %v375 = vld [vmem:[%s354 + $0xf0] sm:$0xff]
        %v376 = vld [vmem:[%s354 + $0xf8] sm:$0xff]
        %v377 = vld [vmem:[%s354 + $0x108] sm:$0xff]
        %v378 = vld [vmem:[%s354 + $0x110] sm:$0xff]
        %v379 = vld [vmem:[%s354 + $0x120] sm:$0xff]
        %v380 = vld [vmem:[%s354 + $0x128] sm:$0xff]
        %v381 = vld [vmem:[%s354 + $0x138] sm:$0xff]
        %v382 = vld [vmem:[%s354 + $0x140] sm:$0xff]
        %v383 = vld [vmem:[%s354 + $0x150] sm:$0xff]
        %v384 = vld [vmem:[%s354 + $0x158] sm:$0xff]
        %v385 = vld [vmem:[%s354 + $0x168] sm:$0xff]
        %v386 = vld [vmem:[%s354 + $0x170] sm:$0xff]
        %s387 = smul.u32 %s316, 3
        %s388 = smul.u32 %s387, 4
        %s389 = scalar_lea.vmem %s1, %s388
        %v390 = vld [vmem:[%s389] sm:$0xf]
        %v392 = vsel %vm204, %v355, 0
        %v395 = vsel %vm204, %v356, 0
        %v398 = vsel %vm204, %v357, 0
        %v401 = vsel %vm204, %v358, 0
        %v404 = vsel %vm204, %v359, 0
        %v407 = vsel %vm204, %v360, 0
        %v410 = vsel %vm204, %v361, 0
        %v413 = vsel %vm204, %v362, 0
        %v416 = vsel %vm204, %v363, 0
        %v419 = vsel %vm204, %v364, 0
        %v422 = vsel %vm204, %v365, 0
        %v425 = vsel %vm204, %v366, 0
        %v428 = vsel %vm204, %v367, 0
        %v431 = vsel %vm204, %v368, 0
        %v434 = vsel %vm204, %v369, 0
        %v437 = vsel %vm204, %v370, 0
        %v440 = vsel %vm204, %v371, 0
        %v443 = vsel %vm204, %v372, 0
        %v446 = vsel %vm204, %v373, 0
        %v449 = vsel %vm204, %v374, 0
        %v452 = vsel %vm204, %v375, 0
        %v455 = vsel %vm204, %v376, 0
        %v458 = vsel %vm204, %v377, 0
        %v461 = vsel %vm204, %v378, 0
        %v464 = vsel %vm204, %v379, 0
        %v467 = vsel %vm204, %v380, 0
        %v470 = vsel %vm204, %v381, 0
        %v473 = vsel %vm204, %v382, 0
        %v476 = vsel %vm204, %v383, 0
        %v479 = vsel %vm204, %v384, 0
        %v482 = vsel %vm204, %v385, 0
        %v485 = vsel %vm204, %v386, 0
        %vm487 = vcmask 1043456
        %v489 = vsel %vm487, %v390, 0
        %491 = vmatprep.subr.mxu0 0.0
        %492 = vmatpush1.msra.mxu0 %v489
        %493 = vmatprep.subr.mxu0 0.0
        %494 = vmatpush1.msra.mxu0 0.0
        %495 = vmatprep.subr.mxu0 0.0
        %496 = vmatpush1.msra.mxu0 0.0
        %497 = vmatprep.subr.mxu0 0.0
        %498 = vmatpush1.msra.mxu0 0.0
        %499 = vmatprep.subr.mxu0 0.0
        %500 = vmatpush1.msra.mxu0 0.0
        %501 = vmatprep.subr.mxu0 0.0
        %502 = vmatpush1.msra.mxu0 0.0
        %503 = vmatprep.subr.mxu0 0.0
        %504 = vmatpush1.msra.mxu0 0.0
        %505 = vmatprep.subr.mxu0 0.0
        %506 = vmatpush1.msra.mxu0 0.0
        %507 = vmatprep.subr.mxu0 0.0
        %508 = vmatpush1.msra.mxu0 0.0
        %509 = vmatprep.subr.mxu0 0.0
        %510 = vmatpush1.msra.mxu0 0.0
        %511 = vmatprep.subr.mxu0 0.0
        %512 = vmatpush1.msra.mxu0 0.0
        %513 = vmatprep.subr.mxu0 0.0
        %514 = vmatpush1.msra.mxu0 0.0
        %515 = vmatprep.subr.mxu0 0.0
        %516 = vmatpush1.msra.mxu0 0.0
        %517 = vmatprep.subr.mxu0 0.0
        %518 = vmatpush1.msra.mxu0 0.0
        %519 = vmatprep.subr.mxu0 0.0
        %520 = vmatpush1.msra.mxu0 0.0
        %521 = vmatprep.subr.mxu0 0.0
        %522 = vmatpush1.msra.mxu0 0.0
        %523 = vmatprep.subr.mxu0 0.0
        %524 = vmatpush1.msra.mxu0 0.0
        %525 = vmatprep.subr.mxu0 0.0
        %526 = vmatpush1.msra.mxu0 0.0
        %527 = vmatprep.subr.mxu0 0.0
        %528 = vmatpush1.msra.mxu0 0.0
        %529 = vmatprep.subr.mxu0 0.0
        %530 = vmatpush1.msra.mxu0 0.0
        %531 = vmatprep.subr.mxu0 0.0
        %532 = vmatpush1.msra.mxu0 0.0
        %533 = vmatprep.subr.mxu0 0.0
        %534 = vmatpush1.msra.mxu0 0.0
        %535 = vmatprep.subr.mxu0 0.0
        %536 = vmatpush1.msra.mxu0 0.0
        %537 = vmatprep.subr.mxu0 0.0
        %538 = vmatpush1.msra.mxu0 0.0
        %539 = vmatprep.subr.mxu0 0.0
        %540 = vmatpush1.msra.mxu0 0.0
        %541 = vmatprep.subr.mxu0 0.0
        %542 = vmatpush1.msra.mxu0 0.0
        %543 = vmatprep.subr.mxu0 0.0
        %544 = vmatpush1.msra.mxu0 0.0
        %545 = vmatprep.subr.mxu0 0.0
        %546 = vmatpush1.msra.mxu0 0.0
        %547 = vmatprep.subr.mxu0 0.0
        %548 = vmatpush1.msra.mxu0 0.0
        %549 = vmatprep.subr.mxu0 0.0
        %550 = vmatpush1.msra.mxu0 0.0
        %551 = vmatprep.subr.mxu0 0.0
        %552 = vmatpush1.msra.mxu0 0.0
        %553 = vmatprep.subr.mxu0 0.0
        %554 = vmatpush1.msra.mxu0 0.0
        %555 = vmatprep.mubr.f32.mxu0 0.0
        %556 = vmatmul.mubr.f32.gmra.mrb[0].mxu0 %v392
        %v557 = vpop.f32.mrb[0].mxu0
        %v558 = vadd.f32 0.0, %v557
        %v559 = vpop.f32.mrb[0].mxu0
        %560 = vmatprep.mubr.f32.mxu0 0.0
        %561 = vmatmul.mubr.f32.gmra.mrb[0].mxu0 %v395
        %v562 = vpop.f32.mrb[0].mxu0
        %v563 = vadd.f32 0.0, %v562
        %v564 = vpop.f32.mrb[0].mxu0
        %565 = vmatprep.mubr.f32.mxu0 0.0
        %566 = vmatmul.mubr.f32.gmra.mrb[0].mxu0 %v398
        %v567 = vpop.f32.mrb[0].mxu0
        %v568 = vadd.f32 0.0, %v567
        %v569 = vpop.f32.mrb[0].mxu0
        %570 = vmatprep.mubr.f32.mxu0 0.0
        %571 = vmatmul.mubr.f32.gmra.mrb[0].mxu0 %v401
        %v572 = vpop.f32.mrb[0].mxu0
        %v573 = vadd.f32 0.0, %v572
        %v574 = vpop.f32.mrb[0].mxu0
        %575 = vmatprep.mubr.f32.mxu0 0.0
        %576 = vmatmul.mubr.f32.gmra.mrb[0].mxu0 %v404
        %v577 = vpop.f32.mrb[0].mxu0
        %v578 = vadd.f32 0.0, %v577
        %v579 = vpop.f32.mrb[0].mxu0
        %580 = vmatprep.mubr.f32.mxu0 0.0
        %581 = vmatmul.mubr.f32.gmra.mrb[0].mxu0 %v407
        %v582 = vpop.f32.mrb[0].mxu0
        %v583 = vadd.f32 0.0, %v582
        %v584 = vpop.f32.mrb[0].mxu0
        %585 = vmatprep.mubr.f32.mxu0 0.0
        %586 = vmatmul.mubr.f32.gmra.mrb[0].mxu0 %v410
        %v587 = vpop.f32.mrb[0].mxu0
        %v588 = vadd.f32 0.0, %v587
        %v589 = vpop.f32.mrb[0].mxu0
        %590 = vmatprep.mubr.f32.mxu0 0.0
        %591 = vmatmul.mubr.f32.gmra.mrb[0].mxu0 %v413
        %v592 = vpop.f32.mrb[0].mxu0
        %v593 = vadd.f32 0.0, %v592
        %v594 = vpop.f32.mrb[0].mxu0
        %595 = vmatprep.mubr.f32.mxu0 0.0
        %596 = vmatmul.mubr.f32.gmra.mrb[0].mxu0 %v416
        %v597 = vpop.f32.mrb[0].mxu0
        %v598 = vadd.f32 0.0, %v597
        %v599 = vpop.f32.mrb[0].mxu0
        %600 = vmatprep.mubr.f32.mxu0 0.0
        %601 = vmatmul.mubr.f32.gmra.mrb[0].mxu0 %v419
        %v602 = vpop.f32.mrb[0].mxu0
        %v603 = vadd.f32 0.0, %v602
        %v604 = vpop.f32.mrb[0].mxu0
        %605 = vmatprep.mubr.f32.mxu0 0.0
        %606 = vmatmul.mubr.f32.gmra.mrb[0].mxu0 %v422
        %v607 = vpop.f32.mrb[0].mxu0
        %v608 = vadd.f32 0.0, %v607
        %v609 = vpop.f32.mrb[0].mxu0
        %610 = vmatprep.mubr.f32.mxu0 0.0
        %611 = vmatmul.mubr.f32.gmra.mrb[0].mxu0 %v425
        %v612 = vpop.f32.mrb[0].mxu0
        %v613 = vadd.f32 0.0, %v612
        %v614 = vpop.f32.mrb[0].mxu0
        %615 = vmatprep.mubr.f32.mxu0 0.0
        %616 = vmatmul.mubr.f32.gmra.mrb[0].mxu0 %v428
        %v617 = vpop.f32.mrb[0].mxu0
        %v618 = vadd.f32 0.0, %v617
        %v619 = vpop.f32.mrb[0].mxu0
        %620 = vmatprep.mubr.f32.mxu0 0.0
        %621 = vmatmul.mubr.f32.gmra.mrb[0].mxu0 %v431
        %v622 = vpop.f32.mrb[0].mxu0
        %v623 = vadd.f32 0.0, %v622
        %v624 = vpop.f32.mrb[0].mxu0
        %625 = vmatprep.mubr.f32.mxu0 0.0
        %626 = vmatmul.mubr.f32.gmra.mrb[0].mxu0 %v434
        %v627 = vpop.f32.mrb[0].mxu0
        %v628 = vadd.f32 0.0, %v627
        %v629 = vpop.f32.mrb[0].mxu0
        %630 = vmatprep.mubr.f32.mxu0 0.0
        %631 = vmatmul.mubr.f32.gmra.mrb[0].mxu0 %v437
        %v632 = vpop.f32.mrb[0].mxu0
        %v633 = vadd.f32 0.0, %v632
        %v634 = vpop.f32.mrb[0].mxu0
        %635 = vmatprep.mubr.f32.mxu0 0.0
        %636 = vmatmul.mubr.f32.gmra.mrb[0].mxu0 %v440
        %v637 = vpop.f32.mrb[0].mxu0
        %v638 = vadd.f32 0.0, %v637
        %v639 = vpop.f32.mrb[0].mxu0
        %640 = vmatprep.mubr.f32.mxu0 0.0
        %641 = vmatmul.mubr.f32.gmra.mrb[0].mxu0 %v443
        %v642 = vpop.f32.mrb[0].mxu0
        %v643 = vadd.f32 0.0, %v642
        %v644 = vpop.f32.mrb[0].mxu0
        %645 = vmatprep.mubr.f32.mxu0 0.0
        %646 = vmatmul.mubr.f32.gmra.mrb[0].mxu0 %v446
        %v647 = vpop.f32.mrb[0].mxu0
        %v648 = vadd.f32 0.0, %v647
        %v649 = vpop.f32.mrb[0].mxu0
        %650 = vmatprep.mubr.f32.mxu0 0.0
        %651 = vmatmul.mubr.f32.gmra.mrb[0].mxu0 %v449
        %v652 = vpop.f32.mrb[0].mxu0
        %v653 = vadd.f32 0.0, %v652
        %v654 = vpop.f32.mrb[0].mxu0
        %655 = vmatprep.mubr.f32.mxu0 0.0
        %656 = vmatmul.mubr.f32.gmra.mrb[0].mxu0 %v452
        %v657 = vpop.f32.mrb[0].mxu0
        %v658 = vadd.f32 0.0, %v657
        %v659 = vpop.f32.mrb[0].mxu0
        %660 = vmatprep.mubr.f32.mxu0 0.0
        %661 = vmatmul.mubr.f32.gmra.mrb[0].mxu0 %v455
        %v662 = vpop.f32.mrb[0].mxu0
        %v663 = vadd.f32 0.0, %v662
        %v664 = vpop.f32.mrb[0].mxu0
        %665 = vmatprep.mubr.f32.mxu0 0.0
        %666 = vmatmul.mubr.f32.gmra.mrb[0].mxu0 %v458
        %v667 = vpop.f32.mrb[0].mxu0
        %v668 = vadd.f32 0.0, %v667
        %v669 = vpop.f32.mrb[0].mxu0
        %670 = vmatprep.mubr.f32.mxu0 0.0
        %671 = vmatmul.mubr.f32.gmra.mrb[0].mxu0 %v461
        %v672 = vpop.f32.mrb[0].mxu0
        %v673 = vadd.f32 0.0, %v672
        %v674 = vpop.f32.mrb[0].mxu0
        %675 = vmatprep.mubr.f32.mxu0 0.0
        %676 = vmatmul.mubr.f32.gmra.mrb[0].mxu0 %v464
        %v677 = vpop.f32.mrb[0].mxu0
        %v678 = vadd.f32 0.0, %v677
        %v679 = vpop.f32.mrb[0].mxu0
        %680 = vmatprep.mubr.f32.mxu0 0.0
        %681 = vmatmul.mubr.f32.gmra.mrb[0].mxu0 %v467
        %v682 = vpop.f32.mrb[0].mxu0
        %v683 = vadd.f32 0.0, %v682
        %v684 = vpop.f32.mrb[0].mxu0
        %685 = vmatprep.mubr.f32.mxu0 0.0
        %686 = vmatmul.mubr.f32.gmra.mrb[0].mxu0 %v470
        %v687 = vpop.f32.mrb[0].mxu0
        %v688 = vadd.f32 0.0, %v687
        %v689 = vpop.f32.mrb[0].mxu0
        %690 = vmatprep.mubr.f32.mxu0 0.0
        %691 = vmatmul.mubr.f32.gmra.mrb[0].mxu0 %v473
        %v692 = vpop.f32.mrb[0].mxu0
        %v693 = vadd.f32 0.0, %v692
        %v694 = vpop.f32.mrb[0].mxu0
        %695 = vmatprep.mubr.f32.mxu0 0.0
        %696 = vmatmul.mubr.f32.gmra.mrb[0].mxu0 %v476
        %v697 = vpop.f32.mrb[0].mxu0
        %v698 = vadd.f32 0.0, %v697
        %v699 = vpop.f32.mrb[0].mxu0
        %700 = vmatprep.mubr.f32.mxu0 0.0
        %701 = vmatmul.mubr.f32.gmra.mrb[0].mxu0 %v479
        %v702 = vpop.f32.mrb[0].mxu0
        %v703 = vadd.f32 0.0, %v702
        %v704 = vpop.f32.mrb[0].mxu0
        %705 = vmatprep.mubr.f32.mxu0 0.0
        %706 = vmatmul.mubr.f32.gmra.mrb[0].mxu0 %v482
        %v707 = vpop.f32.mrb[0].mxu0
        %v708 = vadd.f32 0.0, %v707
        %v709 = vpop.f32.mrb[0].mxu0
        %710 = vmatprep.mubr.f32.mxu0 0.0
        %711 = vmatmul.mubr.f32.gmra.mrb[0].mxu0 %v485
        %v712 = vpop.f32.mrb[0].mxu0
        %v713 = vadd.f32 0.0, %v712
        %v714 = vpop.f32.mrb[0].mxu0
        %715 = vdwg.mxu0
        %v716 = vadd.f32 %v321, %v558
        %v717 = vadd.f32 %v322, %v563
        %v718 = vadd.f32 %v323, %v568
        %v719 = vadd.f32 %v324, %v573
        %v720 = vadd.f32 %v325, %v578
        %v721 = vadd.f32 %v326, %v583
        %v722 = vadd.f32 %v327, %v588
        %v723 = vadd.f32 %v328, %v593
        %v724 = vadd.f32 %v329, %v598
        %v725 = vadd.f32 %v330, %v603
        %v726 = vadd.f32 %v331, %v608
        %v727 = vadd.f32 %v332, %v613
        %v728 = vadd.f32 %v333, %v618
        %v729 = vadd.f32 %v334, %v623
        %v730 = vadd.f32 %v335, %v628
        %v731 = vadd.f32 %v336, %v633
        %v732 = vadd.f32 %v337, %v638
        %v733 = vadd.f32 %v338, %v643
        %v734 = vadd.f32 %v339, %v648
        %v735 = vadd.f32 %v340, %v653
        %v736 = vadd.f32 %v341, %v658
        %v737 = vadd.f32 %v342, %v663
        %v738 = vadd.f32 %v343, %v668
        %v739 = vadd.f32 %v344, %v673
        %v740 = vadd.f32 %v345, %v678
        %v741 = vadd.f32 %v346, %v683
        %v742 = vadd.f32 %v347, %v688
        %v743 = vadd.f32 %v348, %v693
        %v744 = vadd.f32 %v349, %v698
        %v745 = vadd.f32 %v350, %v703
        %v746 = vadd.f32 %v351, %v708
        %v747 = vadd.f32 %v352, %v713
        %v748 = vld [vmem:[%s354 + $0x1] sm:$0xff]
        %v749 = vld [vmem:[%s354 + $0x9] sm:$0xff]
        %v750 = vld [vmem:[%s354 + $0x19] sm:$0xff]
        %v751 = vld [vmem:[%s354 + $0x21] sm:$0xff]
        %v752 = vld [vmem:[%s354 + $0x31] sm:$0xff]
        %v753 = vld [vmem:[%s354 + $0x39] sm:$0xff]
        %v754 = vld [vmem:[%s354 + $0x49] sm:$0xff]
        %v755 = vld [vmem:[%s354 + $0x51] sm:$0xff]
        %v756 = vld [vmem:[%s354 + $0x61] sm:$0xff]
        %v757 = vld [vmem:[%s354 + $0x69] sm:$0xff]
        %v758 = vld [vmem:[%s354 + $0x79] sm:$0xff]
        %v759 = vld [vmem:[%s354 + $0x81] sm:$0xff]
        %v760 = vld [vmem:[%s354 + $0x91] sm:$0xff]
        %v761 = vld [vmem:[%s354 + $0x99] sm:$0xff]
        %v762 = vld [vmem:[%s354 + $0xa9] sm:$0xff]
        %v763 = vld [vmem:[%s354 + $0xb1] sm:$0xff]
        %v764 = vld [vmem:[%s354 + $0xc1] sm:$0xff]
        %v765 = vld [vmem:[%s354 + $0xc9] sm:$0xff]
        %v766 = vld [vmem:[%s354 + $0xd9] sm:$0xff]
        %v767 = vld [vmem:[%s354 + $0xe1] sm:$0xff]
        %v768 = vld [vmem:[%s354 + $0xf1] sm:$0xff]
        %v769 = vld [vmem:[%s354 + $0xf9] sm:$0xff]
        %v770 = vld [vmem:[%s354 + $0x109] sm:$0xff]
        %v771 = vld [vmem:[%s354 + $0x111] sm:$0xff]
        %v772 = vld [vmem:[%s354 + $0x121] sm:$0xff]
        %v773 = vld [vmem:[%s354 + $0x129] sm:$0xff]
        %v774 = vld [vmem:[%s354 + $0x139] sm:$0xff]
        %v775 = vld [vmem:[%s354 + $0x141] sm:$0xff]
        %v776 = vld [vmem:[%s354 + $0x151] sm:$0xff]
        %v777 = vld [vmem:[%s354 + $0x159] sm:$0xff]
        %v778 = vld [vmem:[%s354 + $0x169] sm:$0xff]
        %v779 = vld [vmem:[%s354 + $0x171] sm:$0xff]
        %s780 = sadd.s32 %s387, 1
        %s781 = smul.u32 %s780, 4
        %s782 = scalar_lea.vmem %s1, %s781
        %v783 = vld [vmem:[%s782] sm:$0xf]
        %v785 = vsel %vm204, %v748, 0
        %v788 = vsel %vm204, %v749, 0
        %v791 = vsel %vm204, %v750, 0
        %v794 = vsel %vm204, %v751, 0
        %v797 = vsel %vm204, %v752, 0
        %v800 = vsel %vm204, %v753, 0
        %v803 = vsel %vm204, %v754, 0
        %v806 = vsel %vm204, %v755, 0
        %v809 = vsel %vm204, %v756, 0
        %v812 = vsel %vm204, %v757, 0
        %v815 = vsel %vm204, %v758, 0
        %v818 = vsel %vm204, %v759, 0
        %v821 = vsel %vm204, %v760, 0
        %v824 = vsel %vm204, %v761, 0
        %v827 = vsel %vm204, %v762, 0
        %v830 = vsel %vm204, %v763, 0
        %v833 = vsel %vm204, %v764, 0
        %v836 = vsel %vm204, %v765, 0
        %v839 = vsel %vm204, %v766, 0
        %v842 = vsel %vm204, %v767, 0
        %v845 = vsel %vm204, %v768, 0
        %v848 = vsel %vm204, %v769, 0
        %v851 = vsel %vm204, %v770, 0
        %v854 = vsel %vm204, %v771, 0
        %v857 = vsel %vm204, %v772, 0
        %v860 = vsel %vm204, %v773, 0
        %v863 = vsel %vm204, %v774, 0
        %v866 = vsel %vm204, %v775, 0
        %v869 = vsel %vm204, %v776, 0
        %v872 = vsel %vm204, %v777, 0
        %v875 = vsel %vm204, %v778, 0
        %v878 = vsel %vm204, %v779, 0
        %v881 = vsel %vm487, %v783, 0
        %883 = vmatprep.subr.mxu0 0.0
        %884 = vmatpush1.msra.mxu0 %v881
        %885 = vmatprep.subr.mxu0 0.0
        %886 = vmatpush1.msra.mxu0 0.0
        %887 = vmatprep.subr.mxu0 0.0
        %888 = vmatpush1.msra.mxu0 0.0
        %889 = vmatprep.subr.mxu0 0.0
        %890 = vmatpush1.msra.mxu0 0.0
        %891 = vmatprep.subr.mxu0 0.0
        %892 = vmatpush1.msra.mxu0 0.0
        %893 = vmatprep.subr.mxu0 0.0
        %894 = vmatpush1.msra.mxu0 0.0
        %895 = vmatprep.subr.mxu0 0.0
        %896 = vmatpush1.msra.mxu0 0.0
        %897 = vmatprep.subr.mxu0 0.0
        %898 = vmatpush1.msra.mxu0 0.0
        %899 = vmatprep.subr.mxu0 0.0
        %900 = vmatpush1.msra.mxu0 0.0
        %901 = vmatprep.subr.mxu0 0.0
        %902 = vmatpush1.msra.mxu0 0.0
        %903 = vmatprep.subr.mxu0 0.0
        %904 = vmatpush1.msra.mxu0 0.0
        %905 = vmatprep.subr.mxu0 0.0
        %906 = vmatpush1.msra.mxu0 0.0
        %907 = vmatprep.subr.mxu0 0.0
        %908 = vmatpush1.msra.mxu0 0.0
        %909 = vmatprep.subr.mxu0 0.0
        %910 = vmatpush1.msra.mxu0 0.0
        %911 = vmatprep.subr.mxu0 0.0
        %912 = vmatpush1.msra.mxu0 0.0
        %913 = vmatprep.subr.mxu0 0.0
        %914 = vmatpush1.msra.mxu0 0.0
        %915 = vmatprep.subr.mxu0 0.0
        %916 = vmatpush1.msra.mxu0 0.0
        %917 = vmatprep.subr.mxu0 0.0
        %918 = vmatpush1.msra.mxu0 0.0
        %919 = vmatprep.subr.mxu0 0.0
        %920 = vmatpush1.msra.mxu0 0.0
        %921 = vmatprep.subr.mxu0 0.0
        %922 = vmatpush1.msra.mxu0 0.0
        %923 = vmatprep.subr.mxu0 0.0
        %924 = vmatpush1.msra.mxu0 0.0
        %925 = vmatprep.subr.mxu0 0.0
        %926 = vmatpush1.msra.mxu0 0.0
        %927 = vmatprep.subr.mxu0 0.0
        %928 = vmatpush1.msra.mxu0 0.0
        %929 = vmatprep.subr.mxu0 0.0
        %930 = vmatpush1.msra.mxu0 0.0
        %931 = vmatprep.subr.mxu0 0.0
        %932 = vmatpush1.msra.mxu0 0.0
        %933 = vmatprep.subr.mxu0 0.0
        %934 = vmatpush1.msra.mxu0 0.0
        %935 = vmatprep.subr.mxu0 0.0
        %936 = vmatpush1.msra.mxu0 0.0
        %937 = vmatprep.subr.mxu0 0.0
        %938 = vmatpush1.msra.mxu0 0.0
        %939 = vmatprep.subr.mxu0 0.0
        %940 = vmatpush1.msra.mxu0 0.0
        %941 = vmatprep.subr.mxu0 0.0
        %942 = vmatpush1.msra.mxu0 0.0
        %943 = vmatprep.subr.mxu0 0.0
        %944 = vmatpush1.msra.mxu0 0.0
        %945 = vmatprep.subr.mxu0 0.0
        %946 = vmatpush1.msra.mxu0 0.0
        %947 = vmatprep.mubr.f32.mxu0 0.0
        %948 = vmatmul.mubr.f32.gmra.mrb[0].mxu0 %v785
        %v949 = vpop.f32.mrb[0].mxu0
        %v950 = vadd.f32 0.0, %v949
        %v951 = vpop.f32.mrb[0].mxu0
        %952 = vmatprep.mubr.f32.mxu0 0.0
        %953 = vmatmul.mubr.f32.gmra.mrb[0].mxu0 %v788
        %v954 = vpop.f32.mrb[0].mxu0
        %v955 = vadd.f32 0.0, %v954
        %v956 = vpop.f32.mrb[0].mxu0
        %957 = vmatprep.mubr.f32.mxu0 0.0
        %958 = vmatmul.mubr.f32.gmra.mrb[0].mxu0 %v791
        %v959 = vpop.f32.mrb[0].mxu0
        %v960 = vadd.f32 0.0, %v959
        %v961 = vpop.f32.mrb[0].mxu0
        %962 = vmatprep.mubr.f32.mxu0 0.0
        %963 = vmatmul.mubr.f32.gmra.mrb[0].mxu0 %v794
        %v964 = vpop.f32.mrb[0].mxu0
        %v965 = vadd.f32 0.0, %v964
        %v966 = vpop.f32.mrb[0].mxu0
        %967 = vmatprep.mubr.f32.mxu0 0.0
        %968 = vmatmul.mubr.f32.gmra.mrb[0].mxu0 %v797
        %v969 = vpop.f32.mrb[0].mxu0
        %v970 = vadd.f32 0.0, %v969
        %v971 = vpop.f32.mrb[0].mxu0
        %972 = vmatprep.mubr.f32.mxu0 0.0
        %973 = vmatmul.mubr.f32.gmra.mrb[0].mxu0 %v800
        %v974 = vpop.f32.mrb[0].mxu0
        %v975 = vadd.f32 0.0, %v974
        %v976 = vpop.f32.mrb[0].mxu0
        %977 = vmatprep.mubr.f32.mxu0 0.0
        %978 = vmatmul.mubr.f32.gmra.mrb[0].mxu0 %v803
        %v979 = vpop.f32.mrb[0].mxu0
        %v980 = vadd.f32 0.0, %v979
        %v981 = vpop.f32.mrb[0].mxu0
        %982 = vmatprep.mubr.f32.mxu0 0.0
        %983 = vmatmul.mubr.f32.gmra.mrb[0].mxu0 %v806
        %v984 = vpop.f32.mrb[0].mxu0
        %v985 = vadd.f32 0.0, %v984
        %v986 = vpop.f32.mrb[0].mxu0
        %987 = vmatprep.mubr.f32.mxu0 0.0
        %988 = vmatmul.mubr.f32.gmra.mrb[0].mxu0 %v809
        %v989 = vpop.f32.mrb[0].mxu0
        %v990 = vadd.f32 0.0, %v989
        %v991 = vpop.f32.mrb[0].mxu0
        %992 = vmatprep.mubr.f32.mxu0 0.0
        %993 = vmatmul.mubr.f32.gmra.mrb[0].mxu0 %v812
        %v994 = vpop.f32.mrb[0].mxu0
        %v995 = vadd.f32 0.0, %v994
        %v996 = vpop.f32.mrb[0].mxu0
        %997 = vmatprep.mubr.f32.mxu0 0.0
        %998 = vmatmul.mubr.f32.gmra.mrb[0].mxu0 %v815
        %v999 = vpop.f32.mrb[0].mxu0
        %v1000 = vadd.f32 0.0, %v999
        %v1001 = vpop.f32.mrb[0].mxu0
        %1002 = vmatprep.mubr.f32.mxu0 0.0
        %1003 = vmatmul.mubr.f32.gmra.mrb[0].mxu0 %v818
        %v1004 = vpop.f32.mrb[0].mxu0
        %v1005 = vadd.f32 0.0, %v1004
        %v1006 = vpop.f32.mrb[0].mxu0
        %1007 = vmatprep.mubr.f32.mxu0 0.0
        %1008 = vmatmul.mubr.f32.gmra.mrb[0].mxu0 %v821
        %v1009 = vpop.f32.mrb[0].mxu0
        %v1010 = vadd.f32 0.0, %v1009
        %v1011 = vpop.f32.mrb[0].mxu0
        %1012 = vmatprep.mubr.f32.mxu0 0.0
        %1013 = vmatmul.mubr.f32.gmra.mrb[0].mxu0 %v824
        %v1014 = vpop.f32.mrb[0].mxu0
        %v1015 = vadd.f32 0.0, %v1014
        %v1016 = vpop.f32.mrb[0].mxu0
        %1017 = vmatprep.mubr.f32.mxu0 0.0
        %1018 = vmatmul.mubr.f32.gmra.mrb[0].mxu0 %v827
        %v1019 = vpop.f32.mrb[0].mxu0
        %v1020 = vadd.f32 0.0, %v1019
        %v1021 = vpop.f32.mrb[0].mxu0
        %1022 = vmatprep.mubr.f32.mxu0 0.0
        %1023 = vmatmul.mubr.f32.gmra.mrb[0].mxu0 %v830
        %v1024 = vpop.f32.mrb[0].mxu0
        %v1025 = vadd.f32 0.0, %v1024
        %v1026 = vpop.f32.mrb[0].mxu0
        %1027 = vmatprep.mubr.f32.mxu0 0.0
        %1028 = vmatmul.mubr.f32.gmra.mrb[0].mxu0 %v833
        %v1029 = vpop.f32.mrb[0].mxu0
        %v1030 = vadd.f32 0.0, %v1029
        %v1031 = vpop.f32.mrb[0].mxu0
        %1032 = vmatprep.mubr.f32.mxu0 0.0
        %1033 = vmatmul.mubr.f32.gmra.mrb[0].mxu0 %v836
        %v1034 = vpop.f32.mrb[0].mxu0
        %v1035 = vadd.f32 0.0, %v1034
        %v1036 = vpop.f32.mrb[0].mxu0
        %1037 = vmatprep.mubr.f32.mxu0 0.0
        %1038 = vmatmul.mubr.f32.gmra.mrb[0].mxu0 %v839
        %v1039 = vpop.f32.mrb[0].mxu0
        %v1040 = vadd.f32 0.0, %v1039
        %v1041 = vpop.f32.mrb[0].mxu0
        %1042 = vmatprep.mubr.f32.mxu0 0.0
        %1043 = vmatmul.mubr.f32.gmra.mrb[0].mxu0 %v842
        %v1044 = vpop.f32.mrb[0].mxu0
        %v1045 = vadd.f32 0.0, %v1044
        %v1046 = vpop.f32.mrb[0].mxu0
        %1047 = vmatprep.mubr.f32.mxu0 0.0
        %1048 = vmatmul.mubr.f32.gmra.mrb[0].mxu0 %v845
        %v1049 = vpop.f32.mrb[0].mxu0
        %v1050 = vadd.f32 0.0, %v1049
        %v1051 = vpop.f32.mrb[0].mxu0
        %1052 = vmatprep.mubr.f32.mxu0 0.0
        %1053 = vmatmul.mubr.f32.gmra.mrb[0].mxu0 %v848
        %v1054 = vpop.f32.mrb[0].mxu0
        %v1055 = vadd.f32 0.0, %v1054
        %v1056 = vpop.f32.mrb[0].mxu0
        %1057 = vmatprep.mubr.f32.mxu0 0.0
        %1058 = vmatmul.mubr.f32.gmra.mrb[0].mxu0 %v851
        %v1059 = vpop.f32.mrb[0].mxu0
        %v1060 = vadd.f32 0.0, %v1059
        %v1061 = vpop.f32.mrb[0].mxu0
        %1062 = vmatprep.mubr.f32.mxu0 0.0
        %1063 = vmatmul.mubr.f32.gmra.mrb[0].mxu0 %v854
        %v1064 = vpop.f32.mrb[0].mxu0
        %v1065 = vadd.f32 0.0, %v1064
        %v1066 = vpop.f32.mrb[0].mxu0
        %1067 = vmatprep.mubr.f32.mxu0 0.0
        %1068 = vmatmul.mubr.f32.gmra.mrb[0].mxu0 %v857
        %v1069 = vpop.f32.mrb[0].mxu0
        %v1070 = vadd.f32 0.0, %v1069
        %v1071 = vpop.f32.mrb[0].mxu0
        %1072 = vmatprep.mubr.f32.mxu0 0.0
        %1073 = vmatmul.mubr.f32.gmra.mrb[0].mxu0 %v860
        %v1074 = vpop.f32.mrb[0].mxu0
        %v1075 = vadd.f32 0.0, %v1074
        %v1076 = vpop.f32.mrb[0].mxu0
        %1077 = vmatprep.mubr.f32.mxu0 0.0
        %1078 = vmatmul.mubr.f32.gmra.mrb[0].mxu0 %v863
        %v1079 = vpop.f32.mrb[0].mxu0
        %v1080 = vadd.f32 0.0, %v1079
        %v1081 = vpop.f32.mrb[0].mxu0
        %1082 = vmatprep.mubr.f32.mxu0 0.0
        %1083 = vmatmul.mubr.f32.gmra.mrb[0].mxu0 %v866
        %v1084 = vpop.f32.mrb[0].mxu0
        %v1085 = vadd.f32 0.0, %v1084
        %v1086 = vpop.f32.mrb[0].mxu0
        %1087 = vmatprep.mubr.f32.mxu0 0.0
        %1088 = vmatmul.mubr.f32.gmra.mrb[0].mxu0 %v869
        %v1089 = vpop.f32.mrb[0].mxu0
        %v1090 = vadd.f32 0.0, %v1089
        %v1091 = vpop.f32.mrb[0].mxu0
        %1092 = vmatprep.mubr.f32.mxu0 0.0
        %1093 = vmatmul.mubr.f32.gmra.mrb[0].mxu0 %v872
        %v1094 = vpop.f32.mrb[0].mxu0
        %v1095 = vadd.f32 0.0, %v1094
        %v1096 = vpop.f32.mrb[0].mxu0
        %1097 = vmatprep.mubr.f32.mxu0 0.0
        %1098 = vmatmul.mubr.f32.gmra.mrb[0].mxu0 %v875
        %v1099 = vpop.f32.mrb[0].mxu0
        %v1100 = vadd.f32 0.0, %v1099
        %v1101 = vpop.f32.mrb[0].mxu0
        %1102 = vmatprep.mubr.f32.mxu0 0.0
        %1103 = vmatmul.mubr.f32.gmra.mrb[0].mxu0 %v878
        %v1104 = vpop.f32.mrb[0].mxu0
        %v1105 = vadd.f32 0.0, %v1104
        %v1106 = vpop.f32.mrb[0].mxu0
        %1107 = vdwg.mxu0
        %v1108 = vadd.f32 %v716, %v950
        %v1109 = vadd.f32 %v717, %v955
        %v1110 = vadd.f32 %v718, %v960
        %v1111 = vadd.f32 %v719, %v965
        %v1112 = vadd.f32 %v720, %v970
        %v1113 = vadd.f32 %v721, %v975
        %v1114 = vadd.f32 %v722, %v980
        %v1115 = vadd.f32 %v723, %v985
        %v1116 = vadd.f32 %v724, %v990
        %v1117 = vadd.f32 %v725, %v995
        %v1118 = vadd.f32 %v726, %v1000
        %v1119 = vadd.f32 %v727, %v1005
        %v1120 = vadd.f32 %v728, %v1010
        %v1121 = vadd.f32 %v729, %v1015
        %v1122 = vadd.f32 %v730, %v1020
        %v1123 = vadd.f32 %v731, %v1025
        %v1124 = vadd.f32 %v732, %v1030
        %v1125 = vadd.f32 %v733, %v1035
        %v1126 = vadd.f32 %v734, %v1040
        %v1127 = vadd.f32 %v735, %v1045
        %v1128 = vadd.f32 %v736, %v1050
        %v1129 = vadd.f32 %v737, %v1055
        %v1130 = vadd.f32 %v738, %v1060
        %v1131 = vadd.f32 %v739, %v1065
        %v1132 = vadd.f32 %v740, %v1070
        %v1133 = vadd.f32 %v741, %v1075
        %v1134 = vadd.f32 %v742, %v1080
        %v1135 = vadd.f32 %v743, %v1085
        %v1136 = vadd.f32 %v744, %v1090
        %v1137 = vadd.f32 %v745, %v1095
        %v1138 = vadd.f32 %v746, %v1100
        %v1139 = vadd.f32 %v747, %v1105
        %v1140 = vld [vmem:[%s354 + $0x2] sm:$0xff]
        %v1141 = vld [vmem:[%s354 + $0xa] sm:$0xff]
        %v1142 = vld [vmem:[%s354 + $0x1a] sm:$0xff]
        %v1143 = vld [vmem:[%s354 + $0x22] sm:$0xff]
        %v1144 = vld [vmem:[%s354 + $0x32] sm:$0xff]
        %v1145 = vld [vmem:[%s354 + $0x3a] sm:$0xff]
        %v1146 = vld [vmem:[%s354 + $0x4a] sm:$0xff]
        %v1147 = vld [vmem:[%s354 + $0x52] sm:$0xff]
        %v1148 = vld [vmem:[%s354 + $0x62] sm:$0xff]
        %v1149 = vld [vmem:[%s354 + $0x6a] sm:$0xff]
        %v1150 = vld [vmem:[%s354 + $0x7a] sm:$0xff]
        %v1151 = vld [vmem:[%s354 + $0x82] sm:$0xff]
        %v1152 = vld [vmem:[%s354 + $0x92] sm:$0xff]
        %v1153 = vld [vmem:[%s354 + $0x9a] sm:$0xff]
        %v1154 = vld [vmem:[%s354 + $0xaa] sm:$0xff]
        %v1155 = vld [vmem:[%s354 + $0xb2] sm:$0xff]
        %v1156 = vld [vmem:[%s354 + $0xc2] sm:$0xff]
        %v1157 = vld [vmem:[%s354 + $0xca] sm:$0xff]
        %v1158 = vld [vmem:[%s354 + $0xda] sm:$0xff]
        %v1159 = vld [vmem:[%s354 + $0xe2] sm:$0xff]
        %v1160 = vld [vmem:[%s354 + $0xf2] sm:$0xff]
        %v1161 = vld [vmem:[%s354 + $0xfa] sm:$0xff]
        %v1162 = vld [vmem:[%s354 + $0x10a] sm:$0xff]
        %v1163 = vld [vmem:[%s354 + $0x112] sm:$0xff]
        %v1164 = vld [vmem:[%s354 + $0x122] sm:$0xff]
        %v1165 = vld [vmem:[%s354 + $0x12a] sm:$0xff]
        %v1166 = vld [vmem:[%s354 + $0x13a] sm:$0xff]
        %v1167 = vld [vmem:[%s354 + $0x142] sm:$0xff]
        %v1168 = vld [vmem:[%s354 + $0x152] sm:$0xff]
        %v1169 = vld [vmem:[%s354 + $0x15a] sm:$0xff]
        %v1170 = vld [vmem:[%s354 + $0x16a] sm:$0xff]
        %v1171 = vld [vmem:[%s354 + $0x172] sm:$0xff]
        %s1172 = sadd.s32 %s387, 2
        %s1173 = smul.u32 %s1172, 4
        %s1174 = scalar_lea.vmem %s1, %s1173
        %v1175 = vld [vmem:[%s1174] sm:$0xf]
        %v1177 = vsel %vm204, %v1140, 0
        %v1180 = vsel %vm204, %v1141, 0
        %v1183 = vsel %vm204, %v1142, 0
        %v1186 = vsel %vm204, %v1143, 0
        %v1189 = vsel %vm204, %v1144, 0
        %v1192 = vsel %vm204, %v1145, 0
        %v1195 = vsel %vm204, %v1146, 0
        %v1198 = vsel %vm204, %v1147, 0
        %v1201 = vsel %vm204, %v1148, 0
        %v1204 = vsel %vm204, %v1149, 0
        %v1207 = vsel %vm204, %v1150, 0
        %v1210 = vsel %vm204, %v1151, 0
        %v1213 = vsel %vm204, %v1152, 0
        %v1216 = vsel %vm204, %v1153, 0
        %v1219 = vsel %vm204, %v1154, 0
        %v1222 = vsel %vm204, %v1155, 0
        %v1225 = vsel %vm204, %v1156, 0
        %v1228 = vsel %vm204, %v1157, 0
        %v1231 = vsel %vm204, %v1158, 0
        %v1234 = vsel %vm204, %v1159, 0
        %v1237 = vsel %vm204, %v1160, 0
        %v1240 = vsel %vm204, %v1161, 0
        %v1243 = vsel %vm204, %v1162, 0
        %v1246 = vsel %vm204, %v1163, 0
        %v1249 = vsel %vm204, %v1164, 0
        %v1252 = vsel %vm204, %v1165, 0
        %v1255 = vsel %vm204, %v1166, 0
        %v1258 = vsel %vm204, %v1167, 0
        %v1261 = vsel %vm204, %v1168, 0
        %v1264 = vsel %vm204, %v1169, 0
        %v1267 = vsel %vm204, %v1170, 0
        %v1270 = vsel %vm204, %v1171, 0
        %v1273 = vsel %vm487, %v1175, 0
        %1275 = vmatprep.subr.mxu0 0.0
        %1276 = vmatpush1.msra.mxu0 %v1273
        %1277 = vmatprep.subr.mxu0 0.0
        %1278 = vmatpush1.msra.mxu0 0.0
        %1279 = vmatprep.subr.mxu0 0.0
        %1280 = vmatpush1.msra.mxu0 0.0
        %1281 = vmatprep.subr.mxu0 0.0
        %1282 = vmatpush1.msra.mxu0 0.0
        %1283 = vmatprep.subr.mxu0 0.0
        %1284 = vmatpush1.msra.mxu0 0.0
        %1285 = vmatprep.subr.mxu0 0.0
        %1286 = vmatpush1.msra.mxu0 0.0
        %1287 = vmatprep.subr.mxu0 0.0
        %1288 = vmatpush1.msra.mxu0 0.0
        %1289 = vmatprep.subr.mxu0 0.0
        %1290 = vmatpush1.msra.mxu0 0.0
        %1291 = vmatprep.subr.mxu0 0.0
        %1292 = vmatpush1.msra.mxu0 0.0
        %1293 = vmatprep.subr.mxu0 0.0
        %1294 = vmatpush1.msra.mxu0 0.0
        %1295 = vmatprep.subr.mxu0 0.0
        %1296 = vmatpush1.msra.mxu0 0.0
        %1297 = vmatprep.subr.mxu0 0.0
        %1298 = vmatpush1.msra.mxu0 0.0
        %1299 = vmatprep.subr.mxu0 0.0
        %1300 = vmatpush1.msra.mxu0 0.0
        %1301 = vmatprep.subr.mxu0 0.0
        %1302 = vmatpush1.msra.mxu0 0.0
        %1303 = vmatprep.subr.mxu0 0.0
        %1304 = vmatpush1.msra.mxu0 0.0
        %1305 = vmatprep.subr.mxu0 0.0
        %1306 = vmatpush1.msra.mxu0 0.0
        %1307 = vmatprep.subr.mxu0 0.0
        %1308 = vmatpush1.msra.mxu0 0.0
        %1309 = vmatprep.subr.mxu0 0.0
        %1310 = vmatpush1.msra.mxu0 0.0
        %1311 = vmatprep.subr.mxu0 0.0
        %1312 = vmatpush1.msra.mxu0 0.0
        %1313 = vmatprep.subr.mxu0 0.0
        %1314 = vmatpush1.msra.mxu0 0.0
        %1315 = vmatprep.subr.mxu0 0.0
        %1316 = vmatpush1.msra.mxu0 0.0
        %1317 = vmatprep.subr.mxu0 0.0
        %1318 = vmatpush1.msra.mxu0 0.0
        %1319 = vmatprep.subr.mxu0 0.0
        %1320 = vmatpush1.msra.mxu0 0.0
        %1321 = vmatprep.subr.mxu0 0.0
        %1322 = vmatpush1.msra.mxu0 0.0
        %1323 = vmatprep.subr.mxu0 0.0
        %1324 = vmatpush1.msra.mxu0 0.0
        %1325 = vmatprep.subr.mxu0 0.0
        %1326 = vmatpush1.msra.mxu0 0.0
        %1327 = vmatprep.subr.mxu0 0.0
        %1328 = vmatpush1.msra.mxu0 0.0
        %1329 = vmatprep.subr.mxu0 0.0
        %1330 = vmatpush1.msra.mxu0 0.0
        %1331 = vmatprep.subr.mxu0 0.0
        %1332 = vmatpush1.msra.mxu0 0.0
        %1333 = vmatprep.subr.mxu0 0.0
        %1334 = vmatpush1.msra.mxu0 0.0
        %1335 = vmatprep.subr.mxu0 0.0
        %1336 = vmatpush1.msra.mxu0 0.0
        %1337 = vmatprep.subr.mxu0 0.0
        %1338 = vmatpush1.msra.mxu0 0.0
        %1339 = vmatprep.mubr.f32.mxu0 0.0
        %1340 = vmatmul.mubr.f32.gmra.mrb[0].mxu0 %v1177
        %v1341 = vpop.f32.mrb[0].mxu0
        %v1342 = vadd.f32 0.0, %v1341
        %v1343 = vpop.f32.mrb[0].mxu0
        %1344 = vmatprep.mubr.f32.mxu0 0.0
        %1345 = vmatmul.mubr.f32.gmra.mrb[0].mxu0 %v1180
        %v1346 = vpop.f32.mrb[0].mxu0
        %v1347 = vadd.f32 0.0, %v1346
        %v1348 = vpop.f32.mrb[0].mxu0
        %1349 = vmatprep.mubr.f32.mxu0 0.0
        %1350 = vmatmul.mubr.f32.gmra.mrb[0].mxu0 %v1183
        %v1351 = vpop.f32.mrb[0].mxu0
        %v1352 = vadd.f32 0.0, %v1351
        %v1353 = vpop.f32.mrb[0].mxu0
        %1354 = vmatprep.mubr.f32.mxu0 0.0
        %1355 = vmatmul.mubr.f32.gmra.mrb[0].mxu0 %v1186
        %v1356 = vpop.f32.mrb[0].mxu0
        %v1357 = vadd.f32 0.0, %v1356
        %v1358 = vpop.f32.mrb[0].mxu0
        %1359 = vmatprep.mubr.f32.mxu0 0.0
        %1360 = vmatmul.mubr.f32.gmra.mrb[0].mxu0 %v1189
        %v1361 = vpop.f32.mrb[0].mxu0
        %v1362 = vadd.f32 0.0, %v1361
        %v1363 = vpop.f32.mrb[0].mxu0
        %1364 = vmatprep.mubr.f32.mxu0 0.0
        %1365 = vmatmul.mubr.f32.gmra.mrb[0].mxu0 %v1192
        %v1366 = vpop.f32.mrb[0].mxu0
        %v1367 = vadd.f32 0.0, %v1366
        %v1368 = vpop.f32.mrb[0].mxu0
        %1369 = vmatprep.mubr.f32.mxu0 0.0
        %1370 = vmatmul.mubr.f32.gmra.mrb[0].mxu0 %v1195
        %v1371 = vpop.f32.mrb[0].mxu0
        %v1372 = vadd.f32 0.0, %v1371
        %v1373 = vpop.f32.mrb[0].mxu0
        %1374 = vmatprep.mubr.f32.mxu0 0.0
        %1375 = vmatmul.mubr.f32.gmra.mrb[0].mxu0 %v1198
        %v1376 = vpop.f32.mrb[0].mxu0
        %v1377 = vadd.f32 0.0, %v1376
        %v1378 = vpop.f32.mrb[0].mxu0
        %1379 = vmatprep.mubr.f32.mxu0 0.0
        %1380 = vmatmul.mubr.f32.gmra.mrb[0].mxu0 %v1201
        %v1381 = vpop.f32.mrb[0].mxu0
        %v1382 = vadd.f32 0.0, %v1381
        %v1383 = vpop.f32.mrb[0].mxu0
        %1384 = vmatprep.mubr.f32.mxu0 0.0
        %1385 = vmatmul.mubr.f32.gmra.mrb[0].mxu0 %v1204
        %v1386 = vpop.f32.mrb[0].mxu0
        %v1387 = vadd.f32 0.0, %v1386
        %v1388 = vpop.f32.mrb[0].mxu0
        %1389 = vmatprep.mubr.f32.mxu0 0.0
        %1390 = vmatmul.mubr.f32.gmra.mrb[0].mxu0 %v1207
        %v1391 = vpop.f32.mrb[0].mxu0
        %v1392 = vadd.f32 0.0, %v1391
        %v1393 = vpop.f32.mrb[0].mxu0
        %1394 = vmatprep.mubr.f32.mxu0 0.0
        %1395 = vmatmul.mubr.f32.gmra.mrb[0].mxu0 %v1210
        %v1396 = vpop.f32.mrb[0].mxu0
        %v1397 = vadd.f32 0.0, %v1396
        %v1398 = vpop.f32.mrb[0].mxu0
        %1399 = vmatprep.mubr.f32.mxu0 0.0
        %1400 = vmatmul.mubr.f32.gmra.mrb[0].mxu0 %v1213
        %v1401 = vpop.f32.mrb[0].mxu0
        %v1402 = vadd.f32 0.0, %v1401
        %v1403 = vpop.f32.mrb[0].mxu0
        %1404 = vmatprep.mubr.f32.mxu0 0.0
        %1405 = vmatmul.mubr.f32.gmra.mrb[0].mxu0 %v1216
        %v1406 = vpop.f32.mrb[0].mxu0
        %v1407 = vadd.f32 0.0, %v1406
        %v1408 = vpop.f32.mrb[0].mxu0
        %1409 = vmatprep.mubr.f32.mxu0 0.0
        %1410 = vmatmul.mubr.f32.gmra.mrb[0].mxu0 %v1219
        %v1411 = vpop.f32.mrb[0].mxu0
        %v1412 = vadd.f32 0.0, %v1411
        %v1413 = vpop.f32.mrb[0].mxu0
        %1414 = vmatprep.mubr.f32.mxu0 0.0
        %1415 = vmatmul.mubr.f32.gmra.mrb[0].mxu0 %v1222
        %v1416 = vpop.f32.mrb[0].mxu0
        %v1417 = vadd.f32 0.0, %v1416
        %v1418 = vpop.f32.mrb[0].mxu0
        %1419 = vmatprep.mubr.f32.mxu0 0.0
        %1420 = vmatmul.mubr.f32.gmra.mrb[0].mxu0 %v1225
        %v1421 = vpop.f32.mrb[0].mxu0
        %v1422 = vadd.f32 0.0, %v1421
        %v1423 = vpop.f32.mrb[0].mxu0
        %1424 = vmatprep.mubr.f32.mxu0 0.0
        %1425 = vmatmul.mubr.f32.gmra.mrb[0].mxu0 %v1228
        %v1426 = vpop.f32.mrb[0].mxu0
        %v1427 = vadd.f32 0.0, %v1426
        %v1428 = vpop.f32.mrb[0].mxu0
        %1429 = vmatprep.mubr.f32.mxu0 0.0
        %1430 = vmatmul.mubr.f32.gmra.mrb[0].mxu0 %v1231
        %v1431 = vpop.f32.mrb[0].mxu0
        %v1432 = vadd.f32 0.0, %v1431
        %v1433 = vpop.f32.mrb[0].mxu0
        %1434 = vmatprep.mubr.f32.mxu0 0.0
        %1435 = vmatmul.mubr.f32.gmra.mrb[0].mxu0 %v1234
        %v1436 = vpop.f32.mrb[0].mxu0
        %v1437 = vadd.f32 0.0, %v1436
        %v1438 = vpop.f32.mrb[0].mxu0
        %1439 = vmatprep.mubr.f32.mxu0 0.0
        %1440 = vmatmul.mubr.f32.gmra.mrb[0].mxu0 %v1237
        %v1441 = vpop.f32.mrb[0].mxu0
        %v1442 = vadd.f32 0.0, %v1441
        %v1443 = vpop.f32.mrb[0].mxu0
        %1444 = vmatprep.mubr.f32.mxu0 0.0
        %1445 = vmatmul.mubr.f32.gmra.mrb[0].mxu0 %v1240
        %v1446 = vpop.f32.mrb[0].mxu0
        %v1447 = vadd.f32 0.0, %v1446
        %v1448 = vpop.f32.mrb[0].mxu0
        %1449 = vmatprep.mubr.f32.mxu0 0.0
        %1450 = vmatmul.mubr.f32.gmra.mrb[0].mxu0 %v1243
        %v1451 = vpop.f32.mrb[0].mxu0
        %v1452 = vadd.f32 0.0, %v1451
        %v1453 = vpop.f32.mrb[0].mxu0
        %1454 = vmatprep.mubr.f32.mxu0 0.0
        %1455 = vmatmul.mubr.f32.gmra.mrb[0].mxu0 %v1246
        %v1456 = vpop.f32.mrb[0].mxu0
        %v1457 = vadd.f32 0.0, %v1456
        %v1458 = vpop.f32.mrb[0].mxu0
        %1459 = vmatprep.mubr.f32.mxu0 0.0
        %1460 = vmatmul.mubr.f32.gmra.mrb[0].mxu0 %v1249
        %v1461 = vpop.f32.mrb[0].mxu0
        %v1462 = vadd.f32 0.0, %v1461
        %v1463 = vpop.f32.mrb[0].mxu0
        %1464 = vmatprep.mubr.f32.mxu0 0.0
        %1465 = vmatmul.mubr.f32.gmra.mrb[0].mxu0 %v1252
        %v1466 = vpop.f32.mrb[0].mxu0
        %v1467 = vadd.f32 0.0, %v1466
        %v1468 = vpop.f32.mrb[0].mxu0
        %1469 = vmatprep.mubr.f32.mxu0 0.0
        %1470 = vmatmul.mubr.f32.gmra.mrb[0].mxu0 %v1255
        %v1471 = vpop.f32.mrb[0].mxu0
        %v1472 = vadd.f32 0.0, %v1471
        %v1473 = vpop.f32.mrb[0].mxu0
        %1474 = vmatprep.mubr.f32.mxu0 0.0
        %1475 = vmatmul.mubr.f32.gmra.mrb[0].mxu0 %v1258
        %v1476 = vpop.f32.mrb[0].mxu0
        %v1477 = vadd.f32 0.0, %v1476
        %v1478 = vpop.f32.mrb[0].mxu0
        %1479 = vmatprep.mubr.f32.mxu0 0.0
        %1480 = vmatmul.mubr.f32.gmra.mrb[0].mxu0 %v1261
        %v1481 = vpop.f32.mrb[0].mxu0
        %v1482 = vadd.f32 0.0, %v1481
        %v1483 = vpop.f32.mrb[0].mxu0
        %1484 = vmatprep.mubr.f32.mxu0 0.0
        %1485 = vmatmul.mubr.f32.gmra.mrb[0].mxu0 %v1264
        %v1486 = vpop.f32.mrb[0].mxu0
        %v1487 = vadd.f32 0.0, %v1486
        %v1488 = vpop.f32.mrb[0].mxu0
        %1489 = vmatprep.mubr.f32.mxu0 0.0
        %1490 = vmatmul.mubr.f32.gmra.mrb[0].mxu0 %v1267
        %v1491 = vpop.f32.mrb[0].mxu0
        %v1492 = vadd.f32 0.0, %v1491
        %v1493 = vpop.f32.mrb[0].mxu0
        %1494 = vmatprep.mubr.f32.mxu0 0.0
        %1495 = vmatmul.mubr.f32.gmra.mrb[0].mxu0 %v1270
        %v1496 = vpop.f32.mrb[0].mxu0
        %v1497 = vadd.f32 0.0, %v1496
        %v1498 = vpop.f32.mrb[0].mxu0
        %1499 = vdwg.mxu0
        %v1500 = vadd.f32 %v1108, %v1342
        %v1501 = vadd.f32 %v1109, %v1347
        %v1502 = vadd.f32 %v1110, %v1352
        %v1503 = vadd.f32 %v1111, %v1357
        %v1504 = vadd.f32 %v1112, %v1362
        %v1505 = vadd.f32 %v1113, %v1367
        %v1506 = vadd.f32 %v1114, %v1372
        %v1507 = vadd.f32 %v1115, %v1377
        %v1508 = vadd.f32 %v1116, %v1382
        %v1509 = vadd.f32 %v1117, %v1387
        %v1510 = vadd.f32 %v1118, %v1392
        %v1511 = vadd.f32 %v1119, %v1397
        %v1512 = vadd.f32 %v1120, %v1402
        %v1513 = vadd.f32 %v1121, %v1407
        %v1514 = vadd.f32 %v1122, %v1412
        %v1515 = vadd.f32 %v1123, %v1417
        %v1516 = vadd.f32 %v1124, %v1422
        %v1517 = vadd.f32 %v1125, %v1427
        %v1518 = vadd.f32 %v1126, %v1432
        %v1519 = vadd.f32 %v1127, %v1437
        %v1520 = vadd.f32 %v1128, %v1442
        %v1521 = vadd.f32 %v1129, %v1447
        %v1522 = vadd.f32 %v1130, %v1452
        %v1523 = vadd.f32 %v1131, %v1457
        %v1524 = vadd.f32 %v1132, %v1462
        %v1525 = vadd.f32 %v1133, %v1467
        %v1526 = vadd.f32 %v1134, %v1472
        %v1527 = vadd.f32 %v1135, %v1477
        %v1528 = vadd.f32 %v1136, %v1482
        %v1529 = vadd.f32 %v1137, %v1487
        %v1530 = vadd.f32 %v1138, %v1492
        %v1531 = vadd.f32 %v1139, %v1497
      $region37: #{tpu_custom_call.1} parent=31 // loop_footer
        %s320 = sadd.s32 1, %s316
      $region38: #{tpu_custom_call.1} parent=31 // loop_footer_branch
        %315 = sbr.rel target = $region34
      $region39: #{tpu_custom_call.1} parent=31 // loop_exit
        _
      %v1532 = vsel %vm204, %v321, 0.0
      %v1533 = vsel %vm204, %v322, 0.0
      %v1534 = vadd.f32 %v1532, %v1533
      %v1535 = vsel %vm204, %v323, 0.0
      %v1536 = vadd.f32 %v1534, %v1535
      %v1537 = vsel %vm204, %v324, 0.0
      %v1538 = vadd.f32 %v1536, %v1537
      %v1539 = vsel %vm204, %v325, 0.0
      %v1540 = vadd.f32 %v1538, %v1539
      %v1541 = vsel %vm204, %v326, 0.0
      %v1542 = vadd.f32 %v1540, %v1541
      %v1543 = vsel %vm204, %v327, 0.0
      %v1544 = vadd.f32 %v1542, %v1543
      %v1545 = vsel %vm204, %v328, 0.0
      %v1546 = vadd.f32 %v1544, %v1545
      %v1547 = vsel %vm204, %v329, 0.0
      %v1548 = vadd.f32 %v1546, %v1547
      %v1549 = vsel %vm204, %v330, 0.0
      %v1550 = vadd.f32 %v1548, %v1549
      %v1551 = vsel %vm204, %v331, 0.0
      %v1552 = vadd.f32 %v1550, %v1551
      %v1553 = vsel %vm204, %v332, 0.0
      %v1554 = vadd.f32 %v1552, %v1553
      %v1555 = vsel %vm204, %v333, 0.0
      %v1556 = vadd.f32 %v1554, %v1555
      %v1557 = vsel %vm204, %v334, 0.0
      %v1558 = vadd.f32 %v1556, %v1557
      %v1559 = vsel %vm204, %v335, 0.0
      %v1560 = vadd.f32 %v1558, %v1559
      %v1561 = vsel %vm204, %v336, 0.0
      %v1562 = vadd.f32 %v1560, %v1561
      %v1563 = vsel %vm204, %v337, 0.0
      %v1564 = vadd.f32 %v1562, %v1563
      %v1565 = vsel %vm204, %v338, 0.0
      %v1566 = vadd.f32 %v1564, %v1565
      %v1567 = vsel %vm204, %v339, 0.0
      %v1568 = vadd.f32 %v1566, %v1567
      %v1569 = vsel %vm204, %v340, 0.0
      %v1570 = vadd.f32 %v1568, %v1569
      %v1571 = vsel %vm204, %v341, 0.0
      %v1572 = vadd.f32 %v1570, %v1571
      %v1573 = vsel %vm204, %v342, 0.0
      %v1574 = vadd.f32 %v1572, %v1573
      %v1575 = vsel %vm204, %v343, 0.0
      %v1576 = vadd.f32 %v1574, %v1575
      %v1577 = vsel %vm204, %v344, 0.0
      %v1578 = vadd.f32 %v1576, %v1577
      %v1579 = vsel %vm204, %v345, 0.0
      %v1580 = vadd.f32 %v1578, %v1579
      %v1581 = vsel %vm204, %v346, 0.0
      %v1582 = vadd.f32 %v1580, %v1581
      %v1583 = vsel %vm204, %v347, 0.0
      %v1584 = vadd.f32 %v1582, %v1583
      %v1585 = vsel %vm204, %v348, 0.0
      %v1586 = vadd.f32 %v1584, %v1585
      %v1587 = vsel %vm204, %v349, 0.0
      %v1588 = vadd.f32 %v1586, %v1587
      %v1589 = vsel %vm204, %v350, 0.0
      %v1590 = vadd.f32 %v1588, %v1589
      %v1591 = vsel %vm204, %v351, 0.0
      %v1592 = vadd.f32 %v1590, %v1591
      %v1593 = vsel %vm204, %v352, 0.0
      %v1594 = vadd.f32 %v1592, %v1593
      %v1595 = vrot.slane %v1594, 4
      %v1596 = vadd.f32 %v1594, %v1595
      %v1597 = vrot.slane %v1596, 2
      %v1598 = vadd.f32 %v1596, %v1597
      %v1599 = vrot.slane %v1598, 1
      %v1600 = vadd.f32 %v1598, %v1599
      %v1601 = vmul.f32 %v1600, 0.00390625
      %v1602 = vmul.f32 %v321, %v321
      %v1603 = vmul.f32 %v322, %v322
      %v1604 = vmul.f32 %v323, %v323
      %v1605 = vmul.f32 %v324, %v324
      %v1606 = vmul.f32 %v325, %v325
      %v1607 = vmul.f32 %v326, %v326
      %v1608 = vmul.f32 %v327, %v327
      %v1609 = vmul.f32 %v328, %v328
      %v1610 = vmul.f32 %v329, %v329
      %v1611 = vmul.f32 %v330, %v330
      %v1612 = vmul.f32 %v331, %v331
      %v1613 = vmul.f32 %v332, %v332
      %v1614 = vmul.f32 %v333, %v333
      %v1615 = vmul.f32 %v334, %v334
      %v1616 = vmul.f32 %v335, %v335
      %v1617 = vmul.f32 %v336, %v336
      %v1618 = vmul.f32 %v337, %v337
      %v1619 = vmul.f32 %v338, %v338
      %v1620 = vmul.f32 %v339, %v339
      %v1621 = vmul.f32 %v340, %v340
      %v1622 = vmul.f32 %v341, %v341
      %v1623 = vmul.f32 %v342, %v342
      %v1624 = vmul.f32 %v343, %v343
      %v1625 = vmul.f32 %v344, %v344
      %v1626 = vmul.f32 %v345, %v345
      %v1627 = vmul.f32 %v346, %v346
      %v1628 = vmul.f32 %v347, %v347
      %v1629 = vmul.f32 %v348, %v348
      %v1630 = vmul.f32 %v349, %v349
      %v1631 = vmul.f32 %v350, %v350
      %v1632 = vmul.f32 %v351, %v351
      %v1633 = vmul.f32 %v352, %v352
      %v1634 = vsel %vm204, %v1602, 0.0
      %v1635 = vsel %vm204, %v1603, 0.0
      %v1636 = vadd.f32 %v1634, %v1635
      %v1637 = vsel %vm204, %v1604, 0.0
      %v1638 = vadd.f32 %v1636, %v1637
      %v1639 = vsel %vm204, %v1605, 0.0
      %v1640 = vadd.f32 %v1638, %v1639
      %v1641 = vsel %vm204, %v1606, 0.0
      %v1642 = vadd.f32 %v1640, %v1641
      %v1643 = vsel %vm204, %v1607, 0.0
      %v1644 = vadd.f32 %v1642, %v1643
      %v1645 = vsel %vm204, %v1608, 0.0
      %v1646 = vadd.f32 %v1644, %v1645
      %v1647 = vsel %vm204, %v1609, 0.0
      %v1648 = vadd.f32 %v1646, %v1647
      %v1649 = vsel %vm204, %v1610, 0.0
      %v1650 = vadd.f32 %v1648, %v1649
      %v1651 = vsel %vm204, %v1611, 0.0
      %v1652 = vadd.f32 %v1650, %v1651
      %v1653 = vsel %vm204, %v1612, 0.0
      %v1654 = vadd.f32 %v1652, %v1653
      %v1655 = vsel %vm204, %v1613, 0.0
      %v1656 = vadd.f32 %v1654, %v1655
      %v1657 = vsel %vm204, %v1614, 0.0
      %v1658 = vadd.f32 %v1656, %v1657
      %v1659 = vsel %vm204, %v1615, 0.0
      %v1660 = vadd.f32 %v1658, %v1659
      %v1661 = vsel %vm204, %v1616, 0.0
      %v1662 = vadd.f32 %v1660, %v1661
      %v1663 = vsel %vm204, %v1617, 0.0
      %v1664 = vadd.f32 %v1662, %v1663
      %v1665 = vsel %vm204, %v1618, 0.0
      %v1666 = vadd.f32 %v1664, %v1665
      %v1667 = vsel %vm204, %v1619, 0.0
      %v1668 = vadd.f32 %v1666, %v1667
      %v1669 = vsel %vm204, %v1620, 0.0
      %v1670 = vadd.f32 %v1668, %v1669
      %v1671 = vsel %vm204, %v1621, 0.0
      %v1672 = vadd.f32 %v1670, %v1671
      %v1673 = vsel %vm204, %v1622, 0.0
      %v1674 = vadd.f32 %v1672, %v1673
      %v1675 = vsel %vm204, %v1623, 0.0
      %v1676 = vadd.f32 %v1674, %v1675
      %v1677 = vsel %vm204, %v1624, 0.0
      %v1678 = vadd.f32 %v1676, %v1677
      %v1679 = vsel %vm204, %v1625, 0.0
      %v1680 = vadd.f32 %v1678, %v1679
      %v1681 = vsel %vm204, %v1626, 0.0
      %v1682 = vadd.f32 %v1680, %v1681
      %v1683 = vsel %vm204, %v1627, 0.0
      %v1684 = vadd.f32 %v1682, %v1683
      %v1685 = vsel %vm204, %v1628, 0.0
      %v1686 = vadd.f32 %v1684, %v1685
      %v1687 = vsel %vm204, %v1629, 0.0
      %v1688 = vadd.f32 %v1686, %v1687
      %v1689 = vsel %vm204, %v1630, 0.0
      %v1690 = vadd.f32 %v1688, %v1689
      %v1691 = vsel %vm204, %v1631, 0.0
      %v1692 = vadd.f32 %v1690, %v1691
      %v1693 = vsel %vm204, %v1632, 0.0
      %v1694 = vadd.f32 %v1692, %v1693
      %v1695 = vsel %vm204, %v1633, 0.0
      %v1696 = vadd.f32 %v1694, %v1695
      %v1697 = vrot.slane %v1696, 4
      %v1698 = vadd.f32 %v1696, %v1697
      %v1699 = vrot.slane %v1698, 2
      %v1700 = vadd.f32 %v1698, %v1699
      %v1701 = vrot.slane %v1700, 1
      %v1702 = vadd.f32 %v1700, %v1701
      %v1703 = vmul.f32 %v1702, 0.00390625
      %v1704 = vmul.f32 %v1601, %v1601
      %v1705 = vsub.f32 %v1703, %v1704
      %v1706 = vmax.f32 %v1705, 0.0
      %v1707 = vsub.f32 %v321, %v1601
      %v1708 = vsub.f32 %v322, %v1601
      %v1709 = vsub.f32 %v323, %v1601
      %v1710 = vsub.f32 %v324, %v1601
      %v1711 = vsub.f32 %v325, %v1601
      %v1712 = vsub.f32 %v326, %v1601
      %v1713 = vsub.f32 %v327, %v1601
      %v1714 = vsub.f32 %v328, %v1601
      %v1715 = vsub.f32 %v329, %v1601
      %v1716 = vsub.f32 %v330, %v1601
      %v1717 = vsub.f32 %v331, %v1601
      %v1718 = vsub.f32 %v332, %v1601
      %v1719 = vsub.f32 %v333, %v1601
      %v1720 = vsub.f32 %v334, %v1601
      %v1721 = vsub.f32 %v335, %v1601
      %v1722 = vsub.f32 %v336, %v1601
      %v1723 = vsub.f32 %v337, %v1601
      %v1724 = vsub.f32 %v338, %v1601
      %v1725 = vsub.f32 %v339, %v1601
      %v1726 = vsub.f32 %v340, %v1601
      %v1727 = vsub.f32 %v341, %v1601
      %v1728 = vsub.f32 %v342, %v1601
      %v1729 = vsub.f32 %v343, %v1601
      %v1730 = vsub.f32 %v344, %v1601
      %v1731 = vsub.f32 %v345, %v1601
      %v1732 = vsub.f32 %v346, %v1601
      %v1733 = vsub.f32 %v347, %v1601
      %v1734 = vsub.f32 %v348, %v1601
      %v1735 = vsub.f32 %v349, %v1601
      %v1736 = vsub.f32 %v350, %v1601
      %v1737 = vsub.f32 %v351, %v1601
      %v1738 = vsub.f32 %v352, %v1601
      %v1739 = vadd.f32 %v1706, 1e-05
      %v1740 = vrsqrt.pop %v1739
      %v1741 = vmul.f32 %v1707, %v1740
      %v1742 = vmul.f32 %v1708, %v1740
      %v1743 = vmul.f32 %v1709, %v1740
      %v1744 = vmul.f32 %v1710, %v1740
      %v1745 = vmul.f32 %v1711, %v1740
      %v1746 = vmul.f32 %v1712, %v1740
      %v1747 = vmul.f32 %v1713, %v1740
      %v1748 = vmul.f32 %v1714, %v1740
      %v1749 = vmul.f32 %v1715, %v1740
      %v1750 = vmul.f32 %v1716, %v1740
      %v1751 = vmul.f32 %v1717, %v1740
      %v1752 = vmul.f32 %v1718, %v1740
      %v1753 = vmul.f32 %v1719, %v1740
      %v1754 = vmul.f32 %v1720, %v1740
      %v1755 = vmul.f32 %v1721, %v1740
      %v1756 = vmul.f32 %v1722, %v1740
      %v1757 = vmul.f32 %v1723, %v1740
      %v1758 = vmul.f32 %v1724, %v1740
      %v1759 = vmul.f32 %v1725, %v1740
      %v1760 = vmul.f32 %v1726, %v1740
      %v1761 = vmul.f32 %v1727, %v1740
      %v1762 = vmul.f32 %v1728, %v1740
      %v1763 = vmul.f32 %v1729, %v1740
      %v1764 = vmul.f32 %v1730, %v1740
      %v1765 = vmul.f32 %v1731, %v1740
      %v1766 = vmul.f32 %v1732, %v1740
      %v1767 = vmul.f32 %v1733, %v1740
      %v1768 = vmul.f32 %v1734, %v1740
      %v1769 = vmul.f32 %v1735, %v1740
      %v1770 = vmul.f32 %v1736, %v1740
      %v1771 = vmul.f32 %v1737, %v1740
      %v1772 = vmul.f32 %v1738, %v1740
      %v1773 = vmax.f32 %v1741, 0.0
      %v1774 = vmax.f32 %v1742, 0.0
      %v1775 = vmax.f32 %v1743, 0.0
      %v1776 = vmax.f32 %v1744, 0.0
      %v1777 = vmax.f32 %v1745, 0.0
      %v1778 = vmax.f32 %v1746, 0.0
      %v1779 = vmax.f32 %v1747, 0.0
      %v1780 = vmax.f32 %v1748, 0.0
      %v1781 = vmax.f32 %v1749, 0.0
      %v1782 = vmax.f32 %v1750, 0.0
      %v1783 = vmax.f32 %v1751, 0.0
      %v1784 = vmax.f32 %v1752, 0.0
      %v1785 = vmax.f32 %v1753, 0.0
      %v1786 = vmax.f32 %v1754, 0.0
      %v1787 = vmax.f32 %v1755, 0.0
      %v1788 = vmax.f32 %v1756, 0.0
      %v1789 = vmax.f32 %v1757, 0.0
      %v1790 = vmax.f32 %v1758, 0.0
      %v1791 = vmax.f32 %v1759, 0.0
      %v1792 = vmax.f32 %v1760, 0.0
      %v1793 = vmax.f32 %v1761, 0.0
      %v1794 = vmax.f32 %v1762, 0.0
      %v1795 = vmax.f32 %v1763, 0.0
      %v1796 = vmax.f32 %v1764, 0.0
      %v1797 = vmax.f32 %v1765, 0.0
      %v1798 = vmax.f32 %v1766, 0.0
      %v1799 = vmax.f32 %v1767, 0.0
      %v1800 = vmax.f32 %v1768, 0.0
      %v1801 = vmax.f32 %v1769, 0.0
      %v1802 = vmax.f32 %v1770, 0.0
      %v1803 = vmax.f32 %v1771, 0.0
      %v1804 = vmax.f32 %v1772, 0.0
      %1805 = vst.msk [vmem:[%s203 + $0x1] sm:$0xff] %vm204, %v1773
      %1806 = vst.msk [vmem:[%s203 + $0x9] sm:$0xff] %vm204, %v1774
      %1807 = vst.msk [vmem:[%s203 + $0x19] sm:$0xff] %vm204, %v1775
      %1808 = vst.msk [vmem:[%s203 + $0x21] sm:$0xff] %vm204, %v1776
      %1809 = vst.msk [vmem:[%s203 + $0x31] sm:$0xff] %vm204, %v1777
      %1810 = vst.msk [vmem:[%s203 + $0x39] sm:$0xff] %vm204, %v1778
      %1811 = vst.msk [vmem:[%s203 + $0x49] sm:$0xff] %vm204, %v1779
      %1812 = vst.msk [vmem:[%s203 + $0x51] sm:$0xff] %vm204, %v1780
      %1813 = vst.msk [vmem:[%s203 + $0x61] sm:$0xff] %vm204, %v1781
      %1814 = vst.msk [vmem:[%s203 + $0x69] sm:$0xff] %vm204, %v1782
      %1815 = vst.msk [vmem:[%s203 + $0x79] sm:$0xff] %vm204, %v1783
      %1816 = vst.msk [vmem:[%s203 + $0x81] sm:$0xff] %vm204, %v1784
      %1817 = vst.msk [vmem:[%s203 + $0x91] sm:$0xff] %vm204, %v1785
      %1818 = vst.msk [vmem:[%s203 + $0x99] sm:$0xff] %vm204, %v1786
      %1819 = vst.msk [vmem:[%s203 + $0xa9] sm:$0xff] %vm204, %v1787
      %1820 = vst.msk [vmem:[%s203 + $0xb1] sm:$0xff] %vm204, %v1788
      %1821 = vst.msk [vmem:[%s203 + $0xc1] sm:$0xff] %vm204, %v1789
      %1822 = vst.msk [vmem:[%s203 + $0xc9] sm:$0xff] %vm204, %v1790
      %1823 = vst.msk [vmem:[%s203 + $0xd9] sm:$0xff] %vm204, %v1791
      %1824 = vst.msk [vmem:[%s203 + $0xe1] sm:$0xff] %vm204, %v1792
      %1825 = vst.msk [vmem:[%s203 + $0xf1] sm:$0xff] %vm204, %v1793
      %1826 = vst.msk [vmem:[%s203 + $0xf9] sm:$0xff] %vm204, %v1794
      %1827 = vst.msk [vmem:[%s203 + $0x109] sm:$0xff] %vm204, %v1795
      %1828 = vst.msk [vmem:[%s203 + $0x111] sm:$0xff] %vm204, %v1796
      %1829 = vst.msk [vmem:[%s203 + $0x121] sm:$0xff] %vm204, %v1797
      %1830 = vst.msk [vmem:[%s203 + $0x129] sm:$0xff] %vm204, %v1798
      %1831 = vst.msk [vmem:[%s203 + $0x139] sm:$0xff] %vm204, %v1799
      %1832 = vst.msk [vmem:[%s203 + $0x141] sm:$0xff] %vm204, %v1800
      %1833 = vst.msk [vmem:[%s203 + $0x151] sm:$0xff] %vm204, %v1801
      %1834 = vst.msk [vmem:[%s203 + $0x159] sm:$0xff] %vm204, %v1802
      %1835 = vst.msk [vmem:[%s203 + $0x169] sm:$0xff] %vm204, %v1803
      %1836 = vst.msk [vmem:[%s203 + $0x171] sm:$0xff] %vm204, %v1804
      %1837 = vst.msk [vmem:[#allocation2 + $0x1] sm:$0xff] %vm204, %v1775
      %1838 = vst.msk [vmem:[#allocation2 + $0x9] sm:$0xff] %vm204, %v1776
      %1839 = vst.msk [vmem:[%s239 + $0x1] sm:$0xff] %vm204, %v1801
      %1840 = vst.msk [vmem:[%s239 + $0x9] sm:$0xff] %vm204, %v1802
      %v1841 = vld [vmem:[#allocation2 + $0x2] sm:$0x1]
      %v1842 = vld [vmem:[#allocation2 + $0x1a] sm:$0x1]
      %v1843 = vld [vmem:[#allocation2 + $0x32] sm:$0x1]
      %v1844 = vld [vmem:[#allocation2 + $0x4a] sm:$0x1]
      %v1845 = vld [vmem:[#allocation2 + $0x62] sm:$0x1]
      %v1846 = vld [vmem:[#allocation2 + $0x7a] sm:$0x1]
      %v1847 = vld [vmem:[#allocation2 + $0x92] sm:$0x1]
      %v1848 = vld [vmem:[#allocation2 + $0xaa] sm:$0x1]
      %v1849 = vld [vmem:[#allocation2 + $0xc2] sm:$0x1]
      %v1850 = vld [vmem:[#allocation2 + $0xda] sm:$0x1]
      %v1851 = vld [vmem:[#allocation2 + $0xf2] sm:$0x1]
      %v1852 = vld [vmem:[#allocation2 + $0x10a] sm:$0x1]
      %v1853 = vld [vmem:[#allocation2 + $0x122] sm:$0x1]
      %v1854 = vld [vmem:[#allocation2 + $0x13a] sm:$0x1]
      %v1855 = vld [vmem:[#allocation2 + $0x152] sm:$0x1]
      %v1856 = vld [vmem:[#allocation2 + $0x16a] sm:$0x1]
      %v1857 = vld [vmem:[#allocation2 + $0x182] sm:$0x1]
      %v1858 = vld [vmem:[#allocation2 + $0x19a] sm:$0x1]
      %1859 = vst.msk [vmem:[#allocation2] sm:$0x1] %vm260, %v1841
      %1860 = vst.msk [vmem:[#allocation2 + $0x18] sm:$0x1] %vm260, %v1842
      %1861 = vst.msk [vmem:[#allocation2 + $0x30] sm:$0x1] %vm260, %v1843
      %1862 = vst.msk [vmem:[#allocation2 + $0x48] sm:$0x1] %vm260, %v1844
      %1863 = vst.msk [vmem:[#allocation2 + $0x60] sm:$0x1] %vm260, %v1845
      %1864 = vst.msk [vmem:[#allocation2 + $0x78] sm:$0x1] %vm260, %v1846
      %1865 = vst.msk [vmem:[#allocation2 + $0x90] sm:$0x1] %vm260, %v1847
      %1866 = vst.msk [vmem:[#allocation2 + $0xa8] sm:$0x1] %vm260, %v1848
      %1867 = vst.msk [vmem:[#allocation2 + $0xc0] sm:$0x1] %vm260, %v1849
      %1868 = vst.msk [vmem:[#allocation2 + $0xd8] sm:$0x1] %vm260, %v1850
      %1869 = vst.msk [vmem:[#allocation2 + $0xf0] sm:$0x1] %vm260, %v1851
      %1870 = vst.msk [vmem:[#allocation2 + $0x108] sm:$0x1] %vm260, %v1852
      %1871 = vst.msk [vmem:[#allocation2 + $0x120] sm:$0x1] %vm260, %v1853
      %1872 = vst.msk [vmem:[#allocation2 + $0x138] sm:$0x1] %vm260, %v1854
      %1873 = vst.msk [vmem:[#allocation2 + $0x150] sm:$0x1] %vm260, %v1855
      %1874 = vst.msk [vmem:[#allocation2 + $0x168] sm:$0x1] %vm260, %v1856
      %1875 = vst.msk [vmem:[#allocation2 + $0x180] sm:$0x1] %vm260, %v1857
      %1876 = vst.msk [vmem:[#allocation2 + $0x198] sm:$0x1] %vm260, %v1858
      %v1877 = vld [vmem:[#allocation2 + $0xf] sm:$0x1]
      %v1878 = vld [vmem:[#allocation2 + $0x27] sm:$0x1]
      %v1879 = vld [vmem:[#allocation2 + $0x3f] sm:$0x1]
      %v1880 = vld [vmem:[#allocation2 + $0x57] sm:$0x1]
      %v1881 = vld [vmem:[#allocation2 + $0x6f] sm:$0x1]
      %v1882 = vld [vmem:[#allocation2 + $0x87] sm:$0x1]
      %v1883 = vld [vmem:[#allocation2 + $0x9f] sm:$0x1]
      %v1884 = vld [vmem:[#allocation2 + $0xb7] sm:$0x1]
      %v1885 = vld [vmem:[#allocation2 + $0xcf] sm:$0x1]
      %v1886 = vld [vmem:[#allocation2 + $0xe7] sm:$0x1]
      %v1887 = vld [vmem:[#allocation2 + $0xff] sm:$0x1]
      %v1888 = vld [vmem:[#allocation2 + $0x117] sm:$0x1]
      %v1889 = vld [vmem:[#allocation2 + $0x12f] sm:$0x1]
      %v1890 = vld [vmem:[#allocation2 + $0x147] sm:$0x1]
      %v1891 = vld [vmem:[#allocation2 + $0x15f] sm:$0x1]
      %v1892 = vld [vmem:[#allocation2 + $0x177] sm:$0x1]
      %v1893 = vld [vmem:[#allocation2 + $0x18f] sm:$0x1]
      %v1894 = vld [vmem:[#allocation2 + $0x1a7] sm:$0x1]
      %1895 = vst.msk [vmem:[#allocation2 + $0x11] sm:$0x1] %vm260, %v1877
      %1896 = vst.msk [vmem:[#allocation2 + $0x29] sm:$0x1] %vm260, %v1878
      %1897 = vst.msk [vmem:[#allocation2 + $0x41] sm:$0x1] %vm260, %v1879
      %1898 = vst.msk [vmem:[#allocation2 + $0x59] sm:$0x1] %vm260, %v1880
      %1899 = vst.msk [vmem:[#allocation2 + $0x71] sm:$0x1] %vm260, %v1881
      %1900 = vst.msk [vmem:[#allocation2 + $0x89] sm:$0x1] %vm260, %v1882
      %1901 = vst.msk [vmem:[#allocation2 + $0xa1] sm:$0x1] %vm260, %v1883
      %1902 = vst.msk [vmem:[#allocation2 + $0xb9] sm:$0x1] %vm260, %v1884
      %1903 = vst.msk [vmem:[#allocation2 + $0xd1] sm:$0x1] %vm260, %v1885
      %1904 = vst.msk [vmem:[#allocation2 + $0xe9] sm:$0x1] %vm260, %v1886
      %1905 = vst.msk [vmem:[#allocation2 + $0x101] sm:$0x1] %vm260, %v1887
      %1906 = vst.msk [vmem:[#allocation2 + $0x119] sm:$0x1] %vm260, %v1888
      %1907 = vst.msk [vmem:[#allocation2 + $0x131] sm:$0x1] %vm260, %v1889
      %1908 = vst.msk [vmem:[#allocation2 + $0x149] sm:$0x1] %vm260, %v1890
      %1909 = vst.msk [vmem:[#allocation2 + $0x161] sm:$0x1] %vm260, %v1891
      %1910 = vst.msk [vmem:[#allocation2 + $0x179] sm:$0x1] %vm260, %v1892
      %1911 = vst.msk [vmem:[#allocation2 + $0x191] sm:$0x1] %vm260, %v1893
      %1912 = vst.msk [vmem:[#allocation2 + $0x1a9] sm:$0x1] %vm260, %v1894
      loop: start=0, step=1, limit=3
      $region40: #{tpu_custom_call.1} parent=31 // loop_pre_header
        _
      $region41: #{tpu_custom_call.1} parent=31 // loop_header
        %s1914 = sphi 0, %s1918
        %p1915 = scmp.ge.s32.totalorder %s1914, 3
        %v1919 = vphi 0.0, %v3098
        %v1920 = vphi 0.0, %v3099
        %v1921 = vphi 0.0, %v3100
        %v1922 = vphi 0.0, %v3101
        %v1923 = vphi 0.0, %v3102
        %v1924 = vphi 0.0, %v3103
        %v1925 = vphi 0.0, %v3104
        %v1926 = vphi 0.0, %v3105
        %v1927 = vphi 0.0, %v3106
        %v1928 = vphi 0.0, %v3107
        %v1929 = vphi 0.0, %v3108
        %v1930 = vphi 0.0, %v3109
        %v1931 = vphi 0.0, %v3110
        %v1932 = vphi 0.0, %v3111
        %v1933 = vphi 0.0, %v3112
        %v1934 = vphi 0.0, %v3113
        %v1935 = vphi 0.0, %v3114
        %v1936 = vphi 0.0, %v3115
        %v1937 = vphi 0.0, %v3116
        %v1938 = vphi 0.0, %v3117
        %v1939 = vphi 0.0, %v3118
        %v1940 = vphi 0.0, %v3119
        %v1941 = vphi 0.0, %v3120
        %v1942 = vphi 0.0, %v3121
        %v1943 = vphi 0.0, %v3122
        %v1944 = vphi 0.0, %v3123
        %v1945 = vphi 0.0, %v3124
        %v1946 = vphi 0.0, %v3125
        %v1947 = vphi 0.0, %v3126
        %v1948 = vphi 0.0, %v3127
        %v1949 = vphi 0.0, %v3128
        %v1950 = vphi 0.0, %v3129
      $region42: #{tpu_custom_call.1} parent=31 // loop_header_branch
        %1917 = sbr.rel (%p1915) target = $region46
      $region43: #{tpu_custom_call.1} parent=31 // loop_body
        %s1951 = smul.u32 %s1914, 24
        %s1952 = scalar_lea.vmem [#allocation2], %s1951
        %v1953 = vld [vmem:[%s1952] sm:$0xff]
        %v1954 = vld [vmem:[%s1952 + $0x8] sm:$0xff]
        %v1955 = vld [vmem:[%s1952 + $0x18] sm:$0xff]
        %v1956 = vld [vmem:[%s1952 + $0x20] sm:$0xff]
        %v1957 = vld [vmem:[%s1952 + $0x30] sm:$0xff]
        %v1958 = vld [vmem:[%s1952 + $0x38] sm:$0xff]
        %v1959 = vld [vmem:[%s1952 + $0x48] sm:$0xff]
        %v1960 = vld [vmem:[%s1952 + $0x50] sm:$0xff]
        %v1961 = vld [vmem:[%s1952 + $0x60] sm:$0xff]
        %v1962 = vld [vmem:[%s1952 + $0x68] sm:$0xff]
        %v1963 = vld [vmem:[%s1952 + $0x78] sm:$0xff]
        %v1964 = vld [vmem:[%s1952 + $0x80] sm:$0xff]
        %v1965 = vld [vmem:[%s1952 + $0x90] sm:$0xff]
        %v1966 = vld [vmem:[%s1952 + $0x98] sm:$0xff]
        %v1967 = vld [vmem:[%s1952 + $0xa8] sm:$0xff]
        %v1968 = vld [vmem:[%s1952 + $0xb0] sm:$0xff]
        %v1969 = vld [vmem:[%s1952 + $0xc0] sm:$0xff]
        %v1970 = vld [vmem:[%s1952 + $0xc8] sm:$0xff]
        %v1971 = vld [vmem:[%s1952 + $0xd8] sm:$0xff]
        %v1972 = vld [vmem:[%s1952 + $0xe0] sm:$0xff]
        %v1973 = vld [vmem:[%s1952 + $0xf0] sm:$0xff]
        %v1974 = vld [vmem:[%s1952 + $0xf8] sm:$0xff]
        %v1975 = vld [vmem:[%s1952 + $0x108] sm:$0xff]
        %v1976 = vld [vmem:[%s1952 + $0x110] sm:$0xff]
        %v1977 = vld [vmem:[%s1952 + $0x120] sm:$0xff]
        %v1978 = vld [vmem:[%s1952 + $0x128] sm:$0xff]
        %v1979 = vld [vmem:[%s1952 + $0x138] sm:$0xff]
        %v1980 = vld [vmem:[%s1952 + $0x140] sm:$0xff]
        %v1981 = vld [vmem:[%s1952 + $0x150] sm:$0xff]
        %v1982 = vld [vmem:[%s1952 + $0x158] sm:$0xff]
        %v1983 = vld [vmem:[%s1952 + $0x168] sm:$0xff]
        %v1984 = vld [vmem:[%s1952 + $0x170] sm:$0xff]
        %s1985 = smul.u32 %s1914, 3
        %s1986 = smul.u32 %s1985, 4
        %s1987 = scalar_lea.vmem %s2, %s1986
        %v1988 = vld [vmem:[%s1987] sm:$0xf]
        %v1990 = vsel %vm204, %v1953, 0
        %v1993 = vsel %vm204, %v1954, 0
        %v1996 = vsel %vm204, %v1955, 0
        %v1999 = vsel %vm204, %v1956, 0
        %v2002 = vsel %vm204, %v1957, 0
        %v2005 = vsel %vm204, %v1958, 0
        %v2008 = vsel %vm204, %v1959, 0
        %v2011 = vsel %vm204, %v1960, 0
        %v2014 = vsel %vm204, %v1961, 0
        %v2017 = vsel %vm204, %v1962, 0
        %v2020 = vsel %vm204, %v1963, 0
        %v2023 = vsel %vm204, %v1964, 0
        %v2026 = vsel %vm204, %v1965, 0
        %v2029 = vsel %vm204, %v1966, 0
        %v2032 = vsel %vm204, %v1967, 0
        %v2035 = vsel %vm204, %v1968, 0
        %v2038 = vsel %vm204, %v1969, 0
        %v2041 = vsel %vm204, %v1970, 0
        %v2044 = vsel %vm204, %v1971, 0
        %v2047 = vsel %vm204, %v1972, 0
        %v2050 = vsel %vm204, %v1973, 0
        %v2053 = vsel %vm204, %v1974, 0
        %v2056 = vsel %vm204, %v1975, 0
        %v2059 = vsel %vm204, %v1976, 0
        %v2062 = vsel %vm204, %v1977, 0
        %v2065 = vsel %vm204, %v1978, 0
        %v2068 = vsel %vm204, %v1979, 0
        %v2071 = vsel %vm204, %v1980, 0
        %v2074 = vsel %vm204, %v1981, 0
        %v2077 = vsel %vm204, %v1982, 0
        %v2080 = vsel %vm204, %v1983, 0
        %v2083 = vsel %vm204, %v1984, 0
        %vm2085 = vcmask 1043456
        %v2087 = vsel %vm2085, %v1988, 0
        %2089 = vmatprep.subr.mxu0 0.0
        %2090 = vmatpush1.msra.mxu0 %v2087
        %2091 = vmatprep.subr.mxu0 0.0
        %2092 = vmatpush1.msra.mxu0 0.0
        %2093 = vmatprep.subr.mxu0 0.0
        %2094 = vmatpush1.msra.mxu0 0.0
        %2095 = vmatprep.subr.mxu0 0.0
        %2096 = vmatpush1.msra.mxu0 0.0
        %2097 = vmatprep.subr.mxu0 0.0
        %2098 = vmatpush1.msra.mxu0 0.0
        %2099 = vmatprep.subr.mxu0 0.0
        %2100 = vmatpush1.msra.mxu0 0.0
        %2101 = vmatprep.subr.mxu0 0.0
        %2102 = vmatpush1.msra.mxu0 0.0
        %2103 = vmatprep.subr.mxu0 0.0
        %2104 = vmatpush1.msra.mxu0 0.0
        %2105 = vmatprep.subr.mxu0 0.0
        %2106 = vmatpush1.msra.mxu0 0.0
        %2107 = vmatprep.subr.mxu0 0.0
        %2108 = vmatpush1.msra.mxu0 0.0
        %2109 = vmatprep.subr.mxu0 0.0
        %2110 = vmatpush1.msra.mxu0 0.0
        %2111 = vmatprep.subr.mxu0 0.0
        %2112 = vmatpush1.msra.mxu0 0.0
        %2113 = vmatprep.subr.mxu0 0.0
        %2114 = vmatpush1.msra.mxu0 0.0
        %2115 = vmatprep.subr.mxu0 0.0
        %2116 = vmatpush1.msra.mxu0 0.0
        %2117 = vmatprep.subr.mxu0 0.0
        %2118 = vmatpush1.msra.mxu0 0.0
        %2119 = vmatprep.subr.mxu0 0.0
        %2120 = vmatpush1.msra.mxu0 0.0
        %2121 = vmatprep.subr.mxu0 0.0
        %2122 = vmatpush1.msra.mxu0 0.0
        %2123 = vmatprep.subr.mxu0 0.0
        %2124 = vmatpush1.msra.mxu0 0.0
        %2125 = vmatprep.subr.mxu0 0.0
        %2126 = vmatpush1.msra.mxu0 0.0
        %2127 = vmatprep.subr.mxu0 0.0
        %2128 = vmatpush1.msra.mxu0 0.0
        %2129 = vmatprep.subr.mxu0 0.0
        %2130 = vmatpush1.msra.mxu0 0.0
        %2131 = vmatprep.subr.mxu0 0.0
        %2132 = vmatpush1.msra.mxu0 0.0
        %2133 = vmatprep.subr.mxu0 0.0
        %2134 = vmatpush1.msra.mxu0 0.0
        %2135 = vmatprep.subr.mxu0 0.0
        %2136 = vmatpush1.msra.mxu0 0.0
        %2137 = vmatprep.subr.mxu0 0.0
        %2138 = vmatpush1.msra.mxu0 0.0
        %2139 = vmatprep.subr.mxu0 0.0
        %2140 = vmatpush1.msra.mxu0 0.0
        %2141 = vmatprep.subr.mxu0 0.0
        %2142 = vmatpush1.msra.mxu0 0.0
        %2143 = vmatprep.subr.mxu0 0.0
        %2144 = vmatpush1.msra.mxu0 0.0
        %2145 = vmatprep.subr.mxu0 0.0
        %2146 = vmatpush1.msra.mxu0 0.0
        %2147 = vmatprep.subr.mxu0 0.0
        %2148 = vmatpush1.msra.mxu0 0.0
        %2149 = vmatprep.subr.mxu0 0.0
        %2150 = vmatpush1.msra.mxu0 0.0
        %2151 = vmatprep.subr.mxu0 0.0
        %2152 = vmatpush1.msra.mxu0 0.0
        %2153 = vmatprep.mubr.f32.mxu0 0.0
        %2154 = vmatmul.mubr.f32.gmra.mrb[0].mxu0 %v1990
        %v2155 = vpop.f32.mrb[0].mxu0
        %v2156 = vadd.f32 0.0, %v2155
        %v2157 = vpop.f32.mrb[0].mxu0
        %2158 = vmatprep.mubr.f32.mxu0 0.0
        %2159 = vmatmul.mubr.f32.gmra.mrb[0].mxu0 %v1993
        %v2160 = vpop.f32.mrb[0].mxu0
        %v2161 = vadd.f32 0.0, %v2160
        %v2162 = vpop.f32.mrb[0].mxu0
        %2163 = vmatprep.mubr.f32.mxu0 0.0
        %2164 = vmatmul.mubr.f32.gmra.mrb[0].mxu0 %v1996
        %v2165 = vpop.f32.mrb[0].mxu0
        %v2166 = vadd.f32 0.0, %v2165
        %v2167 = vpop.f32.mrb[0].mxu0
        %2168 = vmatprep.mubr.f32.mxu0 0.0
        %2169 = vmatmul.mubr.f32.gmra.mrb[0].mxu0 %v1999
        %v2170 = vpop.f32.mrb[0].mxu0
        %v2171 = vadd.f32 0.0, %v2170
        %v2172 = vpop.f32.mrb[0].mxu0
        %2173 = vmatprep.mubr.f32.mxu0 0.0
        %2174 = vmatmul.mubr.f32.gmra.mrb[0].mxu0 %v2002
        %v2175 = vpop.f32.mrb[0].mxu0
        %v2176 = vadd.f32 0.0, %v2175
        %v2177 = vpop.f32.mrb[0].mxu0
        %2178 = vmatprep.mubr.f32.mxu0 0.0
        %2179 = vmatmul.mubr.f32.gmra.mrb[0].mxu0 %v2005
        %v2180 = vpop.f32.mrb[0].mxu0
        %v2181 = vadd.f32 0.0, %v2180
        %v2182 = vpop.f32.mrb[0].mxu0
        %2183 = vmatprep.mubr.f32.mxu0 0.0
        %2184 = vmatmul.mubr.f32.gmra.mrb[0].mxu0 %v2008
        %v2185 = vpop.f32.mrb[0].mxu0
        %v2186 = vadd.f32 0.0, %v2185
        %v2187 = vpop.f32.mrb[0].mxu0
        %2188 = vmatprep.mubr.f32.mxu0 0.0
        %2189 = vmatmul.mubr.f32.gmra.mrb[0].mxu0 %v2011
        %v2190 = vpop.f32.mrb[0].mxu0
        %v2191 = vadd.f32 0.0, %v2190
        %v2192 = vpop.f32.mrb[0].mxu0
        %2193 = vmatprep.mubr.f32.mxu0 0.0
        %2194 = vmatmul.mubr.f32.gmra.mrb[0].mxu0 %v2014
        %v2195 = vpop.f32.mrb[0].mxu0
        %v2196 = vadd.f32 0.0, %v2195
        %v2197 = vpop.f32.mrb[0].mxu0
        %2198 = vmatprep.mubr.f32.mxu0 0.0
        %2199 = vmatmul.mubr.f32.gmra.mrb[0].mxu0 %v2017
        %v2200 = vpop.f32.mrb[0].mxu0
        %v2201 = vadd.f32 0.0, %v2200
        %v2202 = vpop.f32.mrb[0].mxu0
        %2203 = vmatprep.mubr.f32.mxu0 0.0
        %2204 = vmatmul.mubr.f32.gmra.mrb[0].mxu0 %v2020
        %v2205 = vpop.f32.mrb[0].mxu0
        %v2206 = vadd.f32 0.0, %v2205
        %v2207 = vpop.f32.mrb[0].mxu0
        %2208 = vmatprep.mubr.f32.mxu0 0.0
        %2209 = vmatmul.mubr.f32.gmra.mrb[0].mxu0 %v2023
        %v2210 = vpop.f32.mrb[0].mxu0
        %v2211 = vadd.f32 0.0, %v2210
        %v2212 = vpop.f32.mrb[0].mxu0
        %2213 = vmatprep.mubr.f32.mxu0 0.0
        %2214 = vmatmul.mubr.f32.gmra.mrb[0].mxu0 %v2026
        %v2215 = vpop.f32.mrb[0].mxu0
        %v2216 = vadd.f32 0.0, %v2215
        %v2217 = vpop.f32.mrb[0].mxu0
        %2218 = vmatprep.mubr.f32.mxu0 0.0
        %2219 = vmatmul.mubr.f32.gmra.mrb[0].mxu0 %v2029
        %v2220 = vpop.f32.mrb[0].mxu0
        %v2221 = vadd.f32 0.0, %v2220
        %v2222 = vpop.f32.mrb[0].mxu0
        %2223 = vmatprep.mubr.f32.mxu0 0.0
        %2224 = vmatmul.mubr.f32.gmra.mrb[0].mxu0 %v2032
        %v2225 = vpop.f32.mrb[0].mxu0
        %v2226 = vadd.f32 0.0, %v2225
        %v2227 = vpop.f32.mrb[0].mxu0
        %2228 = vmatprep.mubr.f32.mxu0 0.0
        %2229 = vmatmul.mubr.f32.gmra.mrb[0].mxu0 %v2035
        %v2230 = vpop.f32.mrb[0].mxu0
        %v2231 = vadd.f32 0.0, %v2230
        %v2232 = vpop.f32.mrb[0].mxu0
        %2233 = vmatprep.mubr.f32.mxu0 0.0
        %2234 = vmatmul.mubr.f32.gmra.mrb[0].mxu0 %v2038
        %v2235 = vpop.f32.mrb[0].mxu0
        %v2236 = vadd.f32 0.0, %v2235
        %v2237 = vpop.f32.mrb[0].mxu0
        %2238 = vmatprep.mubr.f32.mxu0 0.0
        %2239 = vmatmul.mubr.f32.gmra.mrb[0].mxu0 %v2041
        %v2240 = vpop.f32.mrb[0].mxu0
        %v2241 = vadd.f32 0.0, %v2240
        %v2242 = vpop.f32.mrb[0].mxu0
        %2243 = vmatprep.mubr.f32.mxu0 0.0
        %2244 = vmatmul.mubr.f32.gmra.mrb[0].mxu0 %v2044
        %v2245 = vpop.f32.mrb[0].mxu0
        %v2246 = vadd.f32 0.0, %v2245
        %v2247 = vpop.f32.mrb[0].mxu0
        %2248 = vmatprep.mubr.f32.mxu0 0.0
        %2249 = vmatmul.mubr.f32.gmra.mrb[0].mxu0 %v2047
        %v2250 = vpop.f32.mrb[0].mxu0
        %v2251 = vadd.f32 0.0, %v2250
        %v2252 = vpop.f32.mrb[0].mxu0
        %2253 = vmatprep.mubr.f32.mxu0 0.0
        %2254 = vmatmul.mubr.f32.gmra.mrb[0].mxu0 %v2050
        %v2255 = vpop.f32.mrb[0].mxu0
        %v2256 = vadd.f32 0.0, %v2255
        %v2257 = vpop.f32.mrb[0].mxu0
        %2258 = vmatprep.mubr.f32.mxu0 0.0
        %2259 = vmatmul.mubr.f32.gmra.mrb[0].mxu0 %v2053
        %v2260 = vpop.f32.mrb[0].mxu0
        %v2261 = vadd.f32 0.0, %v2260
        %v2262 = vpop.f32.mrb[0].mxu0
        %2263 = vmatprep.mubr.f32.mxu0 0.0
        %2264 = vmatmul.mubr.f32.gmra.mrb[0].mxu0 %v2056
        %v2265 = vpop.f32.mrb[0].mxu0
        %v2266 = vadd.f32 0.0, %v2265
        %v2267 = vpop.f32.mrb[0].mxu0
        %2268 = vmatprep.mubr.f32.mxu0 0.0
        %2269 = vmatmul.mubr.f32.gmra.mrb[0].mxu0 %v2059
        %v2270 = vpop.f32.mrb[0].mxu0
        %v2271 = vadd.f32 0.0, %v2270
        %v2272 = vpop.f32.mrb[0].mxu0
        %2273 = vmatprep.mubr.f32.mxu0 0.0
        %2274 = vmatmul.mubr.f32.gmra.mrb[0].mxu0 %v2062
        %v2275 = vpop.f32.mrb[0].mxu0
        %v2276 = vadd.f32 0.0, %v2275
        %v2277 = vpop.f32.mrb[0].mxu0
        %2278 = vmatprep.mubr.f32.mxu0 0.0
        %2279 = vmatmul.mubr.f32.gmra.mrb[0].mxu0 %v2065
        %v2280 = vpop.f32.mrb[0].mxu0
        %v2281 = vadd.f32 0.0, %v2280
        %v2282 = vpop.f32.mrb[0].mxu0
        %2283 = vmatprep.mubr.f32.mxu0 0.0
        %2284 = vmatmul.mubr.f32.gmra.mrb[0].mxu0 %v2068
        %v2285 = vpop.f32.mrb[0].mxu0
        %v2286 = vadd.f32 0.0, %v2285
        %v2287 = vpop.f32.mrb[0].mxu0
        %2288 = vmatprep.mubr.f32.mxu0 0.0
        %2289 = vmatmul.mubr.f32.gmra.mrb[0].mxu0 %v2071
        %v2290 = vpop.f32.mrb[0].mxu0
        %v2291 = vadd.f32 0.0, %v2290
        %v2292 = vpop.f32.mrb[0].mxu0
        %2293 = vmatprep.mubr.f32.mxu0 0.0
        %2294 = vmatmul.mubr.f32.gmra.mrb[0].mxu0 %v2074
        %v2295 = vpop.f32.mrb[0].mxu0
        %v2296 = vadd.f32 0.0, %v2295
        %v2297 = vpop.f32.mrb[0].mxu0
        %2298 = vmatprep.mubr.f32.mxu0 0.0
        %2299 = vmatmul.mubr.f32.gmra.mrb[0].mxu0 %v2077
        %v2300 = vpop.f32.mrb[0].mxu0
        %v2301 = vadd.f32 0.0, %v2300
        %v2302 = vpop.f32.mrb[0].mxu0
        %2303 = vmatprep.mubr.f32.mxu0 0.0
        %2304 = vmatmul.mubr.f32.gmra.mrb[0].mxu0 %v2080
        %v2305 = vpop.f32.mrb[0].mxu0
        %v2306 = vadd.f32 0.0, %v2305
        %v2307 = vpop.f32.mrb[0].mxu0
        %2308 = vmatprep.mubr.f32.mxu0 0.0
        %2309 = vmatmul.mubr.f32.gmra.mrb[0].mxu0 %v2083
        %v2310 = vpop.f32.mrb[0].mxu0
        %v2311 = vadd.f32 0.0, %v2310
        %v2312 = vpop.f32.mrb[0].mxu0
        %2313 = vdwg.mxu0
        %v2314 = vadd.f32 %v1919, %v2156
        %v2315 = vadd.f32 %v1920, %v2161
        %v2316 = vadd.f32 %v1921, %v2166
        %v2317 = vadd.f32 %v1922, %v2171
        %v2318 = vadd.f32 %v1923, %v2176
        %v2319 = vadd.f32 %v1924, %v2181
        %v2320 = vadd.f32 %v1925, %v2186
        %v2321 = vadd.f32 %v1926, %v2191
        %v2322 = vadd.f32 %v1927, %v2196
        %v2323 = vadd.f32 %v1928, %v2201
        %v2324 = vadd.f32 %v1929, %v2206
        %v2325 = vadd.f32 %v1930, %v2211
        %v2326 = vadd.f32 %v1931, %v2216
        %v2327 = vadd.f32 %v1932, %v2221
        %v2328 = vadd.f32 %v1933, %v2226
        %v2329 = vadd.f32 %v1934, %v2231
        %v2330 = vadd.f32 %v1935, %v2236
        %v2331 = vadd.f32 %v1936, %v2241
        %v2332 = vadd.f32 %v1937, %v2246
        %v2333 = vadd.f32 %v1938, %v2251
        %v2334 = vadd.f32 %v1939, %v2256
        %v2335 = vadd.f32 %v1940, %v2261
        %v2336 = vadd.f32 %v1941, %v2266
        %v2337 = vadd.f32 %v1942, %v2271
        %v2338 = vadd.f32 %v1943, %v2276
        %v2339 = vadd.f32 %v1944, %v2281
        %v2340 = vadd.f32 %v1945, %v2286
        %v2341 = vadd.f32 %v1946, %v2291
        %v2342 = vadd.f32 %v1947, %v2296
        %v2343 = vadd.f32 %v1948, %v2301
        %v2344 = vadd.f32 %v1949, %v2306
        %v2345 = vadd.f32 %v1950, %v2311
        %v2346 = vld [vmem:[%s1952 + $0x1] sm:$0xff]
        %v2347 = vld [vmem:[%s1952 + $0x9] sm:$0xff]
        %v2348 = vld [vmem:[%s1952 + $0x19] sm:$0xff]
        %v2349 = vld [vmem:[%s1952 + $0x21] sm:$0xff]
        %v2350 = vld [vmem:[%s1952 + $0x31] sm:$0xff]
        %v2351 = vld [vmem:[%s1952 + $0x39] sm:$0xff]
        %v2352 = vld [vmem:[%s1952 + $0x49] sm:$0xff]
        %v2353 = vld [vmem:[%s1952 + $0x51] sm:$0xff]
        %v2354 = vld [vmem:[%s1952 + $0x61] sm:$0xff]
        %v2355 = vld [vmem:[%s1952 + $0x69] sm:$0xff]
        %v2356 = vld [vmem:[%s1952 + $0x79] sm:$0xff]
        %v2357 = vld [vmem:[%s1952 + $0x81] sm:$0xff]
        %v2358 = vld [vmem:[%s1952 + $0x91] sm:$0xff]
        %v2359 = vld [vmem:[%s1952 + $0x99] sm:$0xff]
        %v2360 = vld [vmem:[%s1952 + $0xa9] sm:$0xff]
        %v2361 = vld [vmem:[%s1952 + $0xb1] sm:$0xff]
        %v2362 = vld [vmem:[%s1952 + $0xc1] sm:$0xff]
        %v2363 = vld [vmem:[%s1952 + $0xc9] sm:$0xff]
        %v2364 = vld [vmem:[%s1952 + $0xd9] sm:$0xff]
        %v2365 = vld [vmem:[%s1952 + $0xe1] sm:$0xff]
        %v2366 = vld [vmem:[%s1952 + $0xf1] sm:$0xff]
        %v2367 = vld [vmem:[%s1952 + $0xf9] sm:$0xff]
        %v2368 = vld [vmem:[%s1952 + $0x109] sm:$0xff]
        %v2369 = vld [vmem:[%s1952 + $0x111] sm:$0xff]
        %v2370 = vld [vmem:[%s1952 + $0x121] sm:$0xff]
        %v2371 = vld [vmem:[%s1952 + $0x129] sm:$0xff]
        %v2372 = vld [vmem:[%s1952 + $0x139] sm:$0xff]
        %v2373 = vld [vmem:[%s1952 + $0x141] sm:$0xff]
        %v2374 = vld [vmem:[%s1952 + $0x151] sm:$0xff]
        %v2375 = vld [vmem:[%s1952 + $0x159] sm:$0xff]
        %v2376 = vld [vmem:[%s1952 + $0x169] sm:$0xff]
        %v2377 = vld [vmem:[%s1952 + $0x171] sm:$0xff]
        %s2378 = sadd.s32 %s1985, 1
        %s2379 = smul.u32 %s2378, 4
        %s2380 = scalar_lea.vmem %s2, %s2379
        %v2381 = vld [vmem:[%s2380] sm:$0xf]
        %v2383 = vsel %vm204, %v2346, 0
        %v2386 = vsel %vm204, %v2347, 0
        %v2389 = vsel %vm204, %v2348, 0
        %v2392 = vsel %vm204, %v2349, 0
        %v2395 = vsel %vm204, %v2350, 0
        %v2398 = vsel %vm204, %v2351, 0
        %v2401 = vsel %vm204, %v2352, 0
        %v2404 = vsel %vm204, %v2353, 0
        %v2407 = vsel %vm204, %v2354, 0
        %v2410 = vsel %vm204, %v2355, 0
        %v2413 = vsel %vm204, %v2356, 0
        %v2416 = vsel %vm204, %v2357, 0
        %v2419 = vsel %vm204, %v2358, 0
        %v2422 = vsel %vm204, %v2359, 0
        %v2425 = vsel %vm204, %v2360, 0
        %v2428 = vsel %vm204, %v2361, 0
        %v2431 = vsel %vm204, %v2362, 0
        %v2434 = vsel %vm204, %v2363, 0
        %v2437 = vsel %vm204, %v2364, 0
        %v2440 = vsel %vm204, %v2365, 0
        %v2443 = vsel %vm204, %v2366, 0
        %v2446 = vsel %vm204, %v2367, 0
        %v2449 = vsel %vm204, %v2368, 0
        %v2452 = vsel %vm204, %v2369, 0
        %v2455 = vsel %vm204, %v2370, 0
        %v2458 = vsel %vm204, %v2371, 0
        %v2461 = vsel %vm204, %v2372, 0
        %v2464 = vsel %vm204, %v2373, 0
        %v2467 = vsel %vm204, %v2374, 0
        %v2470 = vsel %vm204, %v2375, 0
        %v2473 = vsel %vm204, %v2376, 0
        %v2476 = vsel %vm204, %v2377, 0
        %v2479 = vsel %vm2085, %v2381, 0
        %2481 = vmatprep.subr.mxu0 0.0
        %2482 = vmatpush1.msra.mxu0 %v2479
        %2483 = vmatprep.subr.mxu0 0.0
        %2484 = vmatpush1.msra.mxu0 0.0
        %2485 = vmatprep.subr.mxu0 0.0
        %2486 = vmatpush1.msra.mxu0 0.0
        %2487 = vmatprep.subr.mxu0 0.0
        %2488 = vmatpush1.msra.mxu0 0.0
        %2489 = vmatprep.subr.mxu0 0.0
        %2490 = vmatpush1.msra.mxu0 0.0
        %2491 = vmatprep.subr.mxu0 0.0
        %2492 = vmatpush1.msra.mxu0 0.0
        %2493 = vmatprep.subr.mxu0 0.0
        %2494 = vmatpush1.msra.mxu0 0.0
        %2495 = vmatprep.subr.mxu0 0.0
        %2496 = vmatpush1.msra.mxu0 0.0
        %2497 = vmatprep.subr.mxu0 0.0
        %2498 = vmatpush1.msra.mxu0 0.0
        %2499 = vmatprep.subr.mxu0 0.0
        %2500 = vmatpush1.msra.mxu0 0.0
        %2501 = vmatprep.subr.mxu0 0.0
        %2502 = vmatpush1.msra.mxu0 0.0
        %2503 = vmatprep.subr.mxu0 0.0
        %2504 = vmatpush1.msra.mxu0 0.0
        %2505 = vmatprep.subr.mxu0 0.0
        %2506 = vmatpush1.msra.mxu0 0.0
        %2507 = vmatprep.subr.mxu0 0.0
        %2508 = vmatpush1.msra.mxu0 0.0
        %2509 = vmatprep.subr.mxu0 0.0
        %2510 = vmatpush1.msra.mxu0 0.0
        %2511 = vmatprep.subr.mxu0 0.0
        %2512 = vmatpush1.msra.mxu0 0.0
        %2513 = vmatprep.subr.mxu0 0.0
        %2514 = vmatpush1.msra.mxu0 0.0
        %2515 = vmatprep.subr.mxu0 0.0
        %2516 = vmatpush1.msra.mxu0 0.0
        %2517 = vmatprep.subr.mxu0 0.0
        %2518 = vmatpush1.msra.mxu0 0.0
        %2519 = vmatprep.subr.mxu0 0.0
        %2520 = vmatpush1.msra.mxu0 0.0
        %2521 = vmatprep.subr.mxu0 0.0
        %2522 = vmatpush1.msra.mxu0 0.0
        %2523 = vmatprep.subr.mxu0 0.0
        %2524 = vmatpush1.msra.mxu0 0.0
        %2525 = vmatprep.subr.mxu0 0.0
        %2526 = vmatpush1.msra.mxu0 0.0
        %2527 = vmatprep.subr.mxu0 0.0
        %2528 = vmatpush1.msra.mxu0 0.0
        %2529 = vmatprep.subr.mxu0 0.0
        %2530 = vmatpush1.msra.mxu0 0.0
        %2531 = vmatprep.subr.mxu0 0.0
        %2532 = vmatpush1.msra.mxu0 0.0
        %2533 = vmatprep.subr.mxu0 0.0
        %2534 = vmatpush1.msra.mxu0 0.0
        %2535 = vmatprep.subr.mxu0 0.0
        %2536 = vmatpush1.msra.mxu0 0.0
        %2537 = vmatprep.subr.mxu0 0.0
        %2538 = vmatpush1.msra.mxu0 0.0
        %2539 = vmatprep.subr.mxu0 0.0
        %2540 = vmatpush1.msra.mxu0 0.0
        %2541 = vmatprep.subr.mxu0 0.0
        %2542 = vmatpush1.msra.mxu0 0.0
        %2543 = vmatprep.subr.mxu0 0.0
        %2544 = vmatpush1.msra.mxu0 0.0
        %2545 = vmatprep.mubr.f32.mxu0 0.0
        %2546 = vmatmul.mubr.f32.gmra.mrb[0].mxu0 %v2383
        %v2547 = vpop.f32.mrb[0].mxu0
        %v2548 = vadd.f32 0.0, %v2547
        %v2549 = vpop.f32.mrb[0].mxu0
        %2550 = vmatprep.mubr.f32.mxu0 0.0
        %2551 = vmatmul.mubr.f32.gmra.mrb[0].mxu0 %v2386
        %v2552 = vpop.f32.mrb[0].mxu0
        %v2553 = vadd.f32 0.0, %v2552
        %v2554 = vpop.f32.mrb[0].mxu0
        %2555 = vmatprep.mubr.f32.mxu0 0.0
        %2556 = vmatmul.mubr.f32.gmra.mrb[0].mxu0 %v2389
        %v2557 = vpop.f32.mrb[0].mxu0
        %v2558 = vadd.f32 0.0, %v2557
        %v2559 = vpop.f32.mrb[0].mxu0
        %2560 = vmatprep.mubr.f32.mxu0 0.0
        %2561 = vmatmul.mubr.f32.gmra.mrb[0].mxu0 %v2392
        %v2562 = vpop.f32.mrb[0].mxu0
        %v2563 = vadd.f32 0.0, %v2562
        %v2564 = vpop.f32.mrb[0].mxu0
        %2565 = vmatprep.mubr.f32.mxu0 0.0
        %2566 = vmatmul.mubr.f32.gmra.mrb[0].mxu0 %v2395
        %v2567 = vpop.f32.mrb[0].mxu0
        %v2568 = vadd.f32 0.0, %v2567
        %v2569 = vpop.f32.mrb[0].mxu0
        %2570 = vmatprep.mubr.f32.mxu0 0.0
        %2571 = vmatmul.mubr.f32.gmra.mrb[0].mxu0 %v2398
        %v2572 = vpop.f32.mrb[0].mxu0
        %v2573 = vadd.f32 0.0, %v2572
        %v2574 = vpop.f32.mrb[0].mxu0
        %2575 = vmatprep.mubr.f32.mxu0 0.0
        %2576 = vmatmul.mubr.f32.gmra.mrb[0].mxu0 %v2401
        %v2577 = vpop.f32.mrb[0].mxu0
        %v2578 = vadd.f32 0.0, %v2577
        %v2579 = vpop.f32.mrb[0].mxu0
        %2580 = vmatprep.mubr.f32.mxu0 0.0
        %2581 = vmatmul.mubr.f32.gmra.mrb[0].mxu0 %v2404
        %v2582 = vpop.f32.mrb[0].mxu0
        %v2583 = vadd.f32 0.0, %v2582
        %v2584 = vpop.f32.mrb[0].mxu0
        %2585 = vmatprep.mubr.f32.mxu0 0.0
        %2586 = vmatmul.mubr.f32.gmra.mrb[0].mxu0 %v2407
        %v2587 = vpop.f32.mrb[0].mxu0
        %v2588 = vadd.f32 0.0, %v2587
        %v2589 = vpop.f32.mrb[0].mxu0
        %2590 = vmatprep.mubr.f32.mxu0 0.0
        %2591 = vmatmul.mubr.f32.gmra.mrb[0].mxu0 %v2410
        %v2592 = vpop.f32.mrb[0].mxu0
        %v2593 = vadd.f32 0.0, %v2592
        %v2594 = vpop.f32.mrb[0].mxu0
        %2595 = vmatprep.mubr.f32.mxu0 0.0
        %2596 = vmatmul.mubr.f32.gmra.mrb[0].mxu0 %v2413
        %v2597 = vpop.f32.mrb[0].mxu0
        %v2598 = vadd.f32 0.0, %v2597
        %v2599 = vpop.f32.mrb[0].mxu0
        %2600 = vmatprep.mubr.f32.mxu0 0.0
        %2601 = vmatmul.mubr.f32.gmra.mrb[0].mxu0 %v2416
        %v2602 = vpop.f32.mrb[0].mxu0
        %v2603 = vadd.f32 0.0, %v2602
        %v2604 = vpop.f32.mrb[0].mxu0
        %2605 = vmatprep.mubr.f32.mxu0 0.0
        %2606 = vmatmul.mubr.f32.gmra.mrb[0].mxu0 %v2419
        %v2607 = vpop.f32.mrb[0].mxu0
        %v2608 = vadd.f32 0.0, %v2607
        %v2609 = vpop.f32.mrb[0].mxu0
        %2610 = vmatprep.mubr.f32.mxu0 0.0
        %2611 = vmatmul.mubr.f32.gmra.mrb[0].mxu0 %v2422
        %v2612 = vpop.f32.mrb[0].mxu0
        %v2613 = vadd.f32 0.0, %v2612
        %v2614 = vpop.f32.mrb[0].mxu0
        %2615 = vmatprep.mubr.f32.mxu0 0.0
        %2616 = vmatmul.mubr.f32.gmra.mrb[0].mxu0 %v2425
        %v2617 = vpop.f32.mrb[0].mxu0
        %v2618 = vadd.f32 0.0, %v2617
        %v2619 = vpop.f32.mrb[0].mxu0
        %2620 = vmatprep.mubr.f32.mxu0 0.0
        %2621 = vmatmul.mubr.f32.gmra.mrb[0].mxu0 %v2428
        %v2622 = vpop.f32.mrb[0].mxu0
        %v2623 = vadd.f32 0.0, %v2622
        %v2624 = vpop.f32.mrb[0].mxu0
        %2625 = vmatprep.mubr.f32.mxu0 0.0
        %2626 = vmatmul.mubr.f32.gmra.mrb[0].mxu0 %v2431
        %v2627 = vpop.f32.mrb[0].mxu0
        %v2628 = vadd.f32 0.0, %v2627
        %v2629 = vpop.f32.mrb[0].mxu0
        %2630 = vmatprep.mubr.f32.mxu0 0.0
        %2631 = vmatmul.mubr.f32.gmra.mrb[0].mxu0 %v2434
        %v2632 = vpop.f32.mrb[0].mxu0
        %v2633 = vadd.f32 0.0, %v2632
        %v2634 = vpop.f32.mrb[0].mxu0
        %2635 = vmatprep.mubr.f32.mxu0 0.0
        %2636 = vmatmul.mubr.f32.gmra.mrb[0].mxu0 %v2437
        %v2637 = vpop.f32.mrb[0].mxu0
        %v2638 = vadd.f32 0.0, %v2637
        %v2639 = vpop.f32.mrb[0].mxu0
        %2640 = vmatprep.mubr.f32.mxu0 0.0
        %2641 = vmatmul.mubr.f32.gmra.mrb[0].mxu0 %v2440
        %v2642 = vpop.f32.mrb[0].mxu0
        %v2643 = vadd.f32 0.0, %v2642
        %v2644 = vpop.f32.mrb[0].mxu0
        %2645 = vmatprep.mubr.f32.mxu0 0.0
        %2646 = vmatmul.mubr.f32.gmra.mrb[0].mxu0 %v2443
        %v2647 = vpop.f32.mrb[0].mxu0
        %v2648 = vadd.f32 0.0, %v2647
        %v2649 = vpop.f32.mrb[0].mxu0
        %2650 = vmatprep.mubr.f32.mxu0 0.0
        %2651 = vmatmul.mubr.f32.gmra.mrb[0].mxu0 %v2446
        %v2652 = vpop.f32.mrb[0].mxu0
        %v2653 = vadd.f32 0.0, %v2652
        %v2654 = vpop.f32.mrb[0].mxu0
        %2655 = vmatprep.mubr.f32.mxu0 0.0
        %2656 = vmatmul.mubr.f32.gmra.mrb[0].mxu0 %v2449
        %v2657 = vpop.f32.mrb[0].mxu0
        %v2658 = vadd.f32 0.0, %v2657
        %v2659 = vpop.f32.mrb[0].mxu0
        %2660 = vmatprep.mubr.f32.mxu0 0.0
        %2661 = vmatmul.mubr.f32.gmra.mrb[0].mxu0 %v2452
        %v2662 = vpop.f32.mrb[0].mxu0
        %v2663 = vadd.f32 0.0, %v2662
        %v2664 = vpop.f32.mrb[0].mxu0
        %2665 = vmatprep.mubr.f32.mxu0 0.0
        %2666 = vmatmul.mubr.f32.gmra.mrb[0].mxu0 %v2455
        %v2667 = vpop.f32.mrb[0].mxu0
        %v2668 = vadd.f32 0.0, %v2667
        %v2669 = vpop.f32.mrb[0].mxu0
        %2670 = vmatprep.mubr.f32.mxu0 0.0
        %2671 = vmatmul.mubr.f32.gmra.mrb[0].mxu0 %v2458
        %v2672 = vpop.f32.mrb[0].mxu0
        %v2673 = vadd.f32 0.0, %v2672
        %v2674 = vpop.f32.mrb[0].mxu0
        %2675 = vmatprep.mubr.f32.mxu0 0.0
        %2676 = vmatmul.mubr.f32.gmra.mrb[0].mxu0 %v2461
        %v2677 = vpop.f32.mrb[0].mxu0
        %v2678 = vadd.f32 0.0, %v2677
        %v2679 = vpop.f32.mrb[0].mxu0
        %2680 = vmatprep.mubr.f32.mxu0 0.0
        %2681 = vmatmul.mubr.f32.gmra.mrb[0].mxu0 %v2464
        %v2682 = vpop.f32.mrb[0].mxu0
        %v2683 = vadd.f32 0.0, %v2682
        %v2684 = vpop.f32.mrb[0].mxu0
        %2685 = vmatprep.mubr.f32.mxu0 0.0
        %2686 = vmatmul.mubr.f32.gmra.mrb[0].mxu0 %v2467
        %v2687 = vpop.f32.mrb[0].mxu0
        %v2688 = vadd.f32 0.0, %v2687
        %v2689 = vpop.f32.mrb[0].mxu0
        %2690 = vmatprep.mubr.f32.mxu0 0.0
        %2691 = vmatmul.mubr.f32.gmra.mrb[0].mxu0 %v2470
        %v2692 = vpop.f32.mrb[0].mxu0
        %v2693 = vadd.f32 0.0, %v2692
        %v2694 = vpop.f32.mrb[0].mxu0
        %2695 = vmatprep.mubr.f32.mxu0 0.0
        %2696 = vmatmul.mubr.f32.gmra.mrb[0].mxu0 %v2473
        %v2697 = vpop.f32.mrb[0].mxu0
        %v2698 = vadd.f32 0.0, %v2697
        %v2699 = vpop.f32.mrb[0].mxu0
        %2700 = vmatprep.mubr.f32.mxu0 0.0
        %2701 = vmatmul.mubr.f32.gmra.mrb[0].mxu0 %v2476
        %v2702 = vpop.f32.mrb[0].mxu0
        %v2703 = vadd.f32 0.0, %v2702
        %v2704 = vpop.f32.mrb[0].mxu0
        %2705 = vdwg.mxu0
        %v2706 = vadd.f32 %v2314, %v2548
        %v2707 = vadd.f32 %v2315, %v2553
        %v2708 = vadd.f32 %v2316, %v2558
        %v2709 = vadd.f32 %v2317, %v2563
        %v2710 = vadd.f32 %v2318, %v2568
        %v2711 = vadd.f32 %v2319, %v2573
        %v2712 = vadd.f32 %v2320, %v2578
        %v2713 = vadd.f32 %v2321, %v2583
        %v2714 = vadd.f32 %v2322, %v2588
        %v2715 = vadd.f32 %v2323, %v2593
        %v2716 = vadd.f32 %v2324, %v2598
        %v2717 = vadd.f32 %v2325, %v2603
        %v2718 = vadd.f32 %v2326, %v2608
        %v2719 = vadd.f32 %v2327, %v2613
        %v2720 = vadd.f32 %v2328, %v2618
        %v2721 = vadd.f32 %v2329, %v2623
        %v2722 = vadd.f32 %v2330, %v2628
        %v2723 = vadd.f32 %v2331, %v2633
        %v2724 = vadd.f32 %v2332, %v2638
        %v2725 = vadd.f32 %v2333, %v2643
        %v2726 = vadd.f32 %v2334, %v2648
        %v2727 = vadd.f32 %v2335, %v2653
        %v2728 = vadd.f32 %v2336, %v2658
        %v2729 = vadd.f32 %v2337, %v2663
        %v2730 = vadd.f32 %v2338, %v2668
        %v2731 = vadd.f32 %v2339, %v2673
        %v2732 = vadd.f32 %v2340, %v2678
        %v2733 = vadd.f32 %v2341, %v2683
        %v2734 = vadd.f32 %v2342, %v2688
        %v2735 = vadd.f32 %v2343, %v2693
        %v2736 = vadd.f32 %v2344, %v2698
        %v2737 = vadd.f32 %v2345, %v2703
        %v2738 = vld [vmem:[%s1952 + $0x2] sm:$0xff]
        %v2739 = vld [vmem:[%s1952 + $0xa] sm:$0xff]
        %v2740 = vld [vmem:[%s1952 + $0x1a] sm:$0xff]
        %v2741 = vld [vmem:[%s1952 + $0x22] sm:$0xff]
        %v2742 = vld [vmem:[%s1952 + $0x32] sm:$0xff]
        %v2743 = vld [vmem:[%s1952 + $0x3a] sm:$0xff]
        %v2744 = vld [vmem:[%s1952 + $0x4a] sm:$0xff]
        %v2745 = vld [vmem:[%s1952 + $0x52] sm:$0xff]
        %v2746 = vld [vmem:[%s1952 + $0x62] sm:$0xff]
        %v2747 = vld [vmem:[%s1952 + $0x6a] sm:$0xff]
        %v2748 = vld [vmem:[%s1952 + $0x7a] sm:$0xff]
        %v2749 = vld [vmem:[%s1952 + $0x82] sm:$0xff]
        %v2750 = vld [vmem:[%s1952 + $0x92] sm:$0xff]
        %v2751 = vld [vmem:[%s1952 + $0x9a] sm:$0xff]
        %v2752 = vld [vmem:[%s1952 + $0xaa] sm:$0xff]
        %v2753 = vld [vmem:[%s1952 + $0xb2] sm:$0xff]
        %v2754 = vld [vmem:[%s1952 + $0xc2] sm:$0xff]
        %v2755 = vld [vmem:[%s1952 + $0xca] sm:$0xff]
        %v2756 = vld [vmem:[%s1952 + $0xda] sm:$0xff]
        %v2757 = vld [vmem:[%s1952 + $0xe2] sm:$0xff]
        %v2758 = vld [vmem:[%s1952 + $0xf2] sm:$0xff]
        %v2759 = vld [vmem:[%s1952 + $0xfa] sm:$0xff]
        %v2760 = vld [vmem:[%s1952 + $0x10a] sm:$0xff]
        %v2761 = vld [vmem:[%s1952 + $0x112] sm:$0xff]
        %v2762 = vld [vmem:[%s1952 + $0x122] sm:$0xff]
        %v2763 = vld [vmem:[%s1952 + $0x12a] sm:$0xff]
        %v2764 = vld [vmem:[%s1952 + $0x13a] sm:$0xff]
        %v2765 = vld [vmem:[%s1952 + $0x142] sm:$0xff]
        %v2766 = vld [vmem:[%s1952 + $0x152] sm:$0xff]
        %v2767 = vld [vmem:[%s1952 + $0x15a] sm:$0xff]
        %v2768 = vld [vmem:[%s1952 + $0x16a] sm:$0xff]
        %v2769 = vld [vmem:[%s1952 + $0x172] sm:$0xff]
        %s2770 = sadd.s32 %s1985, 2
        %s2771 = smul.u32 %s2770, 4
        %s2772 = scalar_lea.vmem %s2, %s2771
        %v2773 = vld [vmem:[%s2772] sm:$0xf]
        %v2775 = vsel %vm204, %v2738, 0
        %v2778 = vsel %vm204, %v2739, 0
        %v2781 = vsel %vm204, %v2740, 0
        %v2784 = vsel %vm204, %v2741, 0
        %v2787 = vsel %vm204, %v2742, 0
        %v2790 = vsel %vm204, %v2743, 0
        %v2793 = vsel %vm204, %v2744, 0
        %v2796 = vsel %vm204, %v2745, 0
        %v2799 = vsel %vm204, %v2746, 0
        %v2802 = vsel %vm204, %v2747, 0
        %v2805 = vsel %vm204, %v2748, 0
        %v2808 = vsel %vm204, %v2749, 0
        %v2811 = vsel %vm204, %v2750, 0
        %v2814 = vsel %vm204, %v2751, 0
        %v2817 = vsel %vm204, %v2752, 0
        %v2820 = vsel %vm204, %v2753, 0
        %v2823 = vsel %vm204, %v2754, 0
        %v2826 = vsel %vm204, %v2755, 0
        %v2829 = vsel %vm204, %v2756, 0
        %v2832 = vsel %vm204, %v2757, 0
        %v2835 = vsel %vm204, %v2758, 0
        %v2838 = vsel %vm204, %v2759, 0
        %v2841 = vsel %vm204, %v2760, 0
        %v2844 = vsel %vm204, %v2761, 0
        %v2847 = vsel %vm204, %v2762, 0
        %v2850 = vsel %vm204, %v2763, 0
        %v2853 = vsel %vm204, %v2764, 0
        %v2856 = vsel %vm204, %v2765, 0
        %v2859 = vsel %vm204, %v2766, 0
        %v2862 = vsel %vm204, %v2767, 0
        %v2865 = vsel %vm204, %v2768, 0
        %v2868 = vsel %vm204, %v2769, 0
        %v2871 = vsel %vm2085, %v2773, 0
        %2873 = vmatprep.subr.mxu0 0.0
        %2874 = vmatpush1.msra.mxu0 %v2871
        %2875 = vmatprep.subr.mxu0 0.0
        %2876 = vmatpush1.msra.mxu0 0.0
        %2877 = vmatprep.subr.mxu0 0.0
        %2878 = vmatpush1.msra.mxu0 0.0
        %2879 = vmatprep.subr.mxu0 0.0
        %2880 = vmatpush1.msra.mxu0 0.0
        %2881 = vmatprep.subr.mxu0 0.0
        %2882 = vmatpush1.msra.mxu0 0.0
        %2883 = vmatprep.subr.mxu0 0.0
        %2884 = vmatpush1.msra.mxu0 0.0
        %2885 = vmatprep.subr.mxu0 0.0
        %2886 = vmatpush1.msra.mxu0 0.0
        %2887 = vmatprep.subr.mxu0 0.0
        %2888 = vmatpush1.msra.mxu0 0.0
        %2889 = vmatprep.subr.mxu0 0.0
        %2890 = vmatpush1.msra.mxu0 0.0
        %2891 = vmatprep.subr.mxu0 0.0
        %2892 = vmatpush1.msra.mxu0 0.0
        %2893 = vmatprep.subr.mxu0 0.0
        %2894 = vmatpush1.msra.mxu0 0.0
        %2895 = vmatprep.subr.mxu0 0.0
        %2896 = vmatpush1.msra.mxu0 0.0
        %2897 = vmatprep.subr.mxu0 0.0
        %2898 = vmatpush1.msra.mxu0 0.0
        %2899 = vmatprep.subr.mxu0 0.0
        %2900 = vmatpush1.msra.mxu0 0.0
        %2901 = vmatprep.subr.mxu0 0.0
        %2902 = vmatpush1.msra.mxu0 0.0
        %2903 = vmatprep.subr.mxu0 0.0
        %2904 = vmatpush1.msra.mxu0 0.0
        %2905 = vmatprep.subr.mxu0 0.0
        %2906 = vmatpush1.msra.mxu0 0.0
        %2907 = vmatprep.subr.mxu0 0.0
        %2908 = vmatpush1.msra.mxu0 0.0
        %2909 = vmatprep.subr.mxu0 0.0
        %2910 = vmatpush1.msra.mxu0 0.0
        %2911 = vmatprep.subr.mxu0 0.0
        %2912 = vmatpush1.msra.mxu0 0.0
        %2913 = vmatprep.subr.mxu0 0.0
        %2914 = vmatpush1.msra.mxu0 0.0
        %2915 = vmatprep.subr.mxu0 0.0
        %2916 = vmatpush1.msra.mxu0 0.0
        %2917 = vmatprep.subr.mxu0 0.0
        %2918 = vmatpush1.msra.mxu0 0.0
        %2919 = vmatprep.subr.mxu0 0.0
        %2920 = vmatpush1.msra.mxu0 0.0
        %2921 = vmatprep.subr.mxu0 0.0
        %2922 = vmatpush1.msra.mxu0 0.0
        %2923 = vmatprep.subr.mxu0 0.0
        %2924 = vmatpush1.msra.mxu0 0.0
        %2925 = vmatprep.subr.mxu0 0.0
        %2926 = vmatpush1.msra.mxu0 0.0
        %2927 = vmatprep.subr.mxu0 0.0
        %2928 = vmatpush1.msra.mxu0 0.0
        %2929 = vmatprep.subr.mxu0 0.0
        %2930 = vmatpush1.msra.mxu0 0.0
        %2931 = vmatprep.subr.mxu0 0.0
        %2932 = vmatpush1.msra.mxu0 0.0
        %2933 = vmatprep.subr.mxu0 0.0
        %2934 = vmatpush1.msra.mxu0 0.0
        %2935 = vmatprep.subr.mxu0 0.0
        %2936 = vmatpush1.msra.mxu0 0.0
        %2937 = vmatprep.mubr.f32.mxu0 0.0
        %2938 = vmatmul.mubr.f32.gmra.mrb[0].mxu0 %v2775
        %v2939 = vpop.f32.mrb[0].mxu0
        %v2940 = vadd.f32 0.0, %v2939
        %v2941 = vpop.f32.mrb[0].mxu0
        %2942 = vmatprep.mubr.f32.mxu0 0.0
        %2943 = vmatmul.mubr.f32.gmra.mrb[0].mxu0 %v2778
        %v2944 = vpop.f32.mrb[0].mxu0
        %v2945 = vadd.f32 0.0, %v2944
        %v2946 = vpop.f32.mrb[0].mxu0
        %2947 = vmatprep.mubr.f32.mxu0 0.0
        %2948 = vmatmul.mubr.f32.gmra.mrb[0].mxu0 %v2781
        %v2949 = vpop.f32.mrb[0].mxu0
        %v2950 = vadd.f32 0.0, %v2949
        %v2951 = vpop.f32.mrb[0].mxu0
        %2952 = vmatprep.mubr.f32.mxu0 0.0
        %2953 = vmatmul.mubr.f32.gmra.mrb[0].mxu0 %v2784
        %v2954 = vpop.f32.mrb[0].mxu0
        %v2955 = vadd.f32 0.0, %v2954
        %v2956 = vpop.f32.mrb[0].mxu0
        %2957 = vmatprep.mubr.f32.mxu0 0.0
        %2958 = vmatmul.mubr.f32.gmra.mrb[0].mxu0 %v2787
        %v2959 = vpop.f32.mrb[0].mxu0
        %v2960 = vadd.f32 0.0, %v2959
        %v2961 = vpop.f32.mrb[0].mxu0
        %2962 = vmatprep.mubr.f32.mxu0 0.0
        %2963 = vmatmul.mubr.f32.gmra.mrb[0].mxu0 %v2790
        %v2964 = vpop.f32.mrb[0].mxu0
        %v2965 = vadd.f32 0.0, %v2964
        %v2966 = vpop.f32.mrb[0].mxu0
        %2967 = vmatprep.mubr.f32.mxu0 0.0
        %2968 = vmatmul.mubr.f32.gmra.mrb[0].mxu0 %v2793
        %v2969 = vpop.f32.mrb[0].mxu0
        %v2970 = vadd.f32 0.0, %v2969
        %v2971 = vpop.f32.mrb[0].mxu0
        %2972 = vmatprep.mubr.f32.mxu0 0.0
        %2973 = vmatmul.mubr.f32.gmra.mrb[0].mxu0 %v2796
        %v2974 = vpop.f32.mrb[0].mxu0
        %v2975 = vadd.f32 0.0, %v2974
        %v2976 = vpop.f32.mrb[0].mxu0
        %2977 = vmatprep.mubr.f32.mxu0 0.0
        %2978 = vmatmul.mubr.f32.gmra.mrb[0].mxu0 %v2799
        %v2979 = vpop.f32.mrb[0].mxu0
        %v2980 = vadd.f32 0.0, %v2979
        %v2981 = vpop.f32.mrb[0].mxu0
        %2982 = vmatprep.mubr.f32.mxu0 0.0
        %2983 = vmatmul.mubr.f32.gmra.mrb[0].mxu0 %v2802
        %v2984 = vpop.f32.mrb[0].mxu0
        %v2985 = vadd.f32 0.0, %v2984
        %v2986 = vpop.f32.mrb[0].mxu0
        %2987 = vmatprep.mubr.f32.mxu0 0.0
        %2988 = vmatmul.mubr.f32.gmra.mrb[0].mxu0 %v2805
        %v2989 = vpop.f32.mrb[0].mxu0
        %v2990 = vadd.f32 0.0, %v2989
        %v2991 = vpop.f32.mrb[0].mxu0
        %2992 = vmatprep.mubr.f32.mxu0 0.0
        %2993 = vmatmul.mubr.f32.gmra.mrb[0].mxu0 %v2808
        %v2994 = vpop.f32.mrb[0].mxu0
        %v2995 = vadd.f32 0.0, %v2994
        %v2996 = vpop.f32.mrb[0].mxu0
        %2997 = vmatprep.mubr.f32.mxu0 0.0
        %2998 = vmatmul.mubr.f32.gmra.mrb[0].mxu0 %v2811
        %v2999 = vpop.f32.mrb[0].mxu0
        %v3000 = vadd.f32 0.0, %v2999
        %v3001 = vpop.f32.mrb[0].mxu0
        %3002 = vmatprep.mubr.f32.mxu0 0.0
        %3003 = vmatmul.mubr.f32.gmra.mrb[0].mxu0 %v2814
        %v3004 = vpop.f32.mrb[0].mxu0
        %v3005 = vadd.f32 0.0, %v3004
        %v3006 = vpop.f32.mrb[0].mxu0
        %3007 = vmatprep.mubr.f32.mxu0 0.0
        %3008 = vmatmul.mubr.f32.gmra.mrb[0].mxu0 %v2817
        %v3009 = vpop.f32.mrb[0].mxu0
        %v3010 = vadd.f32 0.0, %v3009
        %v3011 = vpop.f32.mrb[0].mxu0
        %3012 = vmatprep.mubr.f32.mxu0 0.0
        %3013 = vmatmul.mubr.f32.gmra.mrb[0].mxu0 %v2820
        %v3014 = vpop.f32.mrb[0].mxu0
        %v3015 = vadd.f32 0.0, %v3014
        %v3016 = vpop.f32.mrb[0].mxu0
        %3017 = vmatprep.mubr.f32.mxu0 0.0
        %3018 = vmatmul.mubr.f32.gmra.mrb[0].mxu0 %v2823
        %v3019 = vpop.f32.mrb[0].mxu0
        %v3020 = vadd.f32 0.0, %v3019
        %v3021 = vpop.f32.mrb[0].mxu0
        %3022 = vmatprep.mubr.f32.mxu0 0.0
        %3023 = vmatmul.mubr.f32.gmra.mrb[0].mxu0 %v2826
        %v3024 = vpop.f32.mrb[0].mxu0
        %v3025 = vadd.f32 0.0, %v3024
        %v3026 = vpop.f32.mrb[0].mxu0
        %3027 = vmatprep.mubr.f32.mxu0 0.0
        %3028 = vmatmul.mubr.f32.gmra.mrb[0].mxu0 %v2829
        %v3029 = vpop.f32.mrb[0].mxu0
        %v3030 = vadd.f32 0.0, %v3029
        %v3031 = vpop.f32.mrb[0].mxu0
        %3032 = vmatprep.mubr.f32.mxu0 0.0
        %3033 = vmatmul.mubr.f32.gmra.mrb[0].mxu0 %v2832
        %v3034 = vpop.f32.mrb[0].mxu0
        %v3035 = vadd.f32 0.0, %v3034
        %v3036 = vpop.f32.mrb[0].mxu0
        %3037 = vmatprep.mubr.f32.mxu0 0.0
        %3038 = vmatmul.mubr.f32.gmra.mrb[0].mxu0 %v2835
        %v3039 = vpop.f32.mrb[0].mxu0
        %v3040 = vadd.f32 0.0, %v3039
        %v3041 = vpop.f32.mrb[0].mxu0
        %3042 = vmatprep.mubr.f32.mxu0 0.0
        %3043 = vmatmul.mubr.f32.gmra.mrb[0].mxu0 %v2838
        %v3044 = vpop.f32.mrb[0].mxu0
        %v3045 = vadd.f32 0.0, %v3044
        %v3046 = vpop.f32.mrb[0].mxu0
        %3047 = vmatprep.mubr.f32.mxu0 0.0
        %3048 = vmatmul.mubr.f32.gmra.mrb[0].mxu0 %v2841
        %v3049 = vpop.f32.mrb[0].mxu0
        %v3050 = vadd.f32 0.0, %v3049
        %v3051 = vpop.f32.mrb[0].mxu0
        %3052 = vmatprep.mubr.f32.mxu0 0.0
        %3053 = vmatmul.mubr.f32.gmra.mrb[0].mxu0 %v2844
        %v3054 = vpop.f32.mrb[0].mxu0
        %v3055 = vadd.f32 0.0, %v3054
        %v3056 = vpop.f32.mrb[0].mxu0
        %3057 = vmatprep.mubr.f32.mxu0 0.0
        %3058 = vmatmul.mubr.f32.gmra.mrb[0].mxu0 %v2847
        %v3059 = vpop.f32.mrb[0].mxu0
        %v3060 = vadd.f32 0.0, %v3059
        %v3061 = vpop.f32.mrb[0].mxu0
        %3062 = vmatprep.mubr.f32.mxu0 0.0
        %3063 = vmatmul.mubr.f32.gmra.mrb[0].mxu0 %v2850
        %v3064 = vpop.f32.mrb[0].mxu0
        %v3065 = vadd.f32 0.0, %v3064
        %v3066 = vpop.f32.mrb[0].mxu0
        %3067 = vmatprep.mubr.f32.mxu0 0.0
        %3068 = vmatmul.mubr.f32.gmra.mrb[0].mxu0 %v2853
        %v3069 = vpop.f32.mrb[0].mxu0
        %v3070 = vadd.f32 0.0, %v3069
        %v3071 = vpop.f32.mrb[0].mxu0
        %3072 = vmatprep.mubr.f32.mxu0 0.0
        %3073 = vmatmul.mubr.f32.gmra.mrb[0].mxu0 %v2856
        %v3074 = vpop.f32.mrb[0].mxu0
        %v3075 = vadd.f32 0.0, %v3074
        %v3076 = vpop.f32.mrb[0].mxu0
        %3077 = vmatprep.mubr.f32.mxu0 0.0
        %3078 = vmatmul.mubr.f32.gmra.mrb[0].mxu0 %v2859
        %v3079 = vpop.f32.mrb[0].mxu0
        %v3080 = vadd.f32 0.0, %v3079
        %v3081 = vpop.f32.mrb[0].mxu0
        %3082 = vmatprep.mubr.f32.mxu0 0.0
        %3083 = vmatmul.mubr.f32.gmra.mrb[0].mxu0 %v2862
        %v3084 = vpop.f32.mrb[0].mxu0
        %v3085 = vadd.f32 0.0, %v3084
        %v3086 = vpop.f32.mrb[0].mxu0
        %3087 = vmatprep.mubr.f32.mxu0 0.0
        %3088 = vmatmul.mubr.f32.gmra.mrb[0].mxu0 %v2865
        %v3089 = vpop.f32.mrb[0].mxu0
        %v3090 = vadd.f32 0.0, %v3089
        %v3091 = vpop.f32.mrb[0].mxu0
        %3092 = vmatprep.mubr.f32.mxu0 0.0
        %3093 = vmatmul.mubr.f32.gmra.mrb[0].mxu0 %v2868
        %v3094 = vpop.f32.mrb[0].mxu0
        %v3095 = vadd.f32 0.0, %v3094
        %v3096 = vpop.f32.mrb[0].mxu0
        %3097 = vdwg.mxu0
        %v3098 = vadd.f32 %v2706, %v2940
        %v3099 = vadd.f32 %v2707, %v2945
        %v3100 = vadd.f32 %v2708, %v2950
        %v3101 = vadd.f32 %v2709, %v2955
        %v3102 = vadd.f32 %v2710, %v2960
        %v3103 = vadd.f32 %v2711, %v2965
        %v3104 = vadd.f32 %v2712, %v2970
        %v3105 = vadd.f32 %v2713, %v2975
        %v3106 = vadd.f32 %v2714, %v2980
        %v3107 = vadd.f32 %v2715, %v2985
        %v3108 = vadd.f32 %v2716, %v2990
        %v3109 = vadd.f32 %v2717, %v2995
        %v3110 = vadd.f32 %v2718, %v3000
        %v3111 = vadd.f32 %v2719, %v3005
        %v3112 = vadd.f32 %v2720, %v3010
        %v3113 = vadd.f32 %v2721, %v3015
        %v3114 = vadd.f32 %v2722, %v3020
        %v3115 = vadd.f32 %v2723, %v3025
        %v3116 = vadd.f32 %v2724, %v3030
        %v3117 = vadd.f32 %v2725, %v3035
        %v3118 = vadd.f32 %v2726, %v3040
        %v3119 = vadd.f32 %v2727, %v3045
        %v3120 = vadd.f32 %v2728, %v3050
        %v3121 = vadd.f32 %v2729, %v3055
        %v3122 = vadd.f32 %v2730, %v3060
        %v3123 = vadd.f32 %v2731, %v3065
        %v3124 = vadd.f32 %v2732, %v3070
        %v3125 = vadd.f32 %v2733, %v3075
        %v3126 = vadd.f32 %v2734, %v3080
        %v3127 = vadd.f32 %v2735, %v3085
        %v3128 = vadd.f32 %v2736, %v3090
        %v3129 = vadd.f32 %v2737, %v3095
      $region44: #{tpu_custom_call.1} parent=31 // loop_footer
        %s1918 = sadd.s32 1, %s1914
      $region45: #{tpu_custom_call.1} parent=31 // loop_footer_branch
        %1913 = sbr.rel target = $region41
      $region46: #{tpu_custom_call.1} parent=31 // loop_exit
        _
      %v3130 = vsel %vm204, %v1919, 0.0
      %v3131 = vsel %vm204, %v1920, 0.0
      %v3132 = vadd.f32 %v3130, %v3131
      %v3133 = vsel %vm204, %v1921, 0.0
      %v3134 = vadd.f32 %v3132, %v3133
      %v3135 = vsel %vm204, %v1922, 0.0
      %v3136 = vadd.f32 %v3134, %v3135
      %v3137 = vsel %vm204, %v1923, 0.0
      %v3138 = vadd.f32 %v3136, %v3137
      %v3139 = vsel %vm204, %v1924, 0.0
      %v3140 = vadd.f32 %v3138, %v3139
      %v3141 = vsel %vm204, %v1925, 0.0
      %v3142 = vadd.f32 %v3140, %v3141
      %v3143 = vsel %vm204, %v1926, 0.0
      %v3144 = vadd.f32 %v3142, %v3143
      %v3145 = vsel %vm204, %v1927, 0.0
      %v3146 = vadd.f32 %v3144, %v3145
      %v3147 = vsel %vm204, %v1928, 0.0
      %v3148 = vadd.f32 %v3146, %v3147
      %v3149 = vsel %vm204, %v1929, 0.0
      %v3150 = vadd.f32 %v3148, %v3149
      %v3151 = vsel %vm204, %v1930, 0.0
      %v3152 = vadd.f32 %v3150, %v3151
      %v3153 = vsel %vm204, %v1931, 0.0
      %v3154 = vadd.f32 %v3152, %v3153
      %v3155 = vsel %vm204, %v1932, 0.0
      %v3156 = vadd.f32 %v3154, %v3155
      %v3157 = vsel %vm204, %v1933, 0.0
      %v3158 = vadd.f32 %v3156, %v3157
      %v3159 = vsel %vm204, %v1934, 0.0
      %v3160 = vadd.f32 %v3158, %v3159
      %v3161 = vsel %vm204, %v1935, 0.0
      %v3162 = vadd.f32 %v3160, %v3161
      %v3163 = vsel %vm204, %v1936, 0.0
      %v3164 = vadd.f32 %v3162, %v3163
      %v3165 = vsel %vm204, %v1937, 0.0
      %v3166 = vadd.f32 %v3164, %v3165
      %v3167 = vsel %vm204, %v1938, 0.0
      %v3168 = vadd.f32 %v3166, %v3167
      %v3169 = vsel %vm204, %v1939, 0.0
      %v3170 = vadd.f32 %v3168, %v3169
      %v3171 = vsel %vm204, %v1940, 0.0
      %v3172 = vadd.f32 %v3170, %v3171
      %v3173 = vsel %vm204, %v1941, 0.0
      %v3174 = vadd.f32 %v3172, %v3173
      %v3175 = vsel %vm204, %v1942, 0.0
      %v3176 = vadd.f32 %v3174, %v3175
      %v3177 = vsel %vm204, %v1943, 0.0
      %v3178 = vadd.f32 %v3176, %v3177
      %v3179 = vsel %vm204, %v1944, 0.0
      %v3180 = vadd.f32 %v3178, %v3179
      %v3181 = vsel %vm204, %v1945, 0.0
      %v3182 = vadd.f32 %v3180, %v3181
      %v3183 = vsel %vm204, %v1946, 0.0
      %v3184 = vadd.f32 %v3182, %v3183
      %v3185 = vsel %vm204, %v1947, 0.0
      %v3186 = vadd.f32 %v3184, %v3185
      %v3187 = vsel %vm204, %v1948, 0.0
      %v3188 = vadd.f32 %v3186, %v3187
      %v3189 = vsel %vm204, %v1949, 0.0
      %v3190 = vadd.f32 %v3188, %v3189
      %v3191 = vsel %vm204, %v1950, 0.0
      %v3192 = vadd.f32 %v3190, %v3191
      %v3193 = vrot.slane %v3192, 4
      %v3194 = vadd.f32 %v3192, %v3193
      %v3195 = vrot.slane %v3194, 2
      %v3196 = vadd.f32 %v3194, %v3195
      %v3197 = vrot.slane %v3196, 1
      %v3198 = vadd.f32 %v3196, %v3197
      %v3199 = vmul.f32 %v3198, 0.00390625
      %v3200 = vmul.f32 %v1919, %v1919
      %v3201 = vmul.f32 %v1920, %v1920
      %v3202 = vmul.f32 %v1921, %v1921
      %v3203 = vmul.f32 %v1922, %v1922
      %v3204 = vmul.f32 %v1923, %v1923
      %v3205 = vmul.f32 %v1924, %v1924
      %v3206 = vmul.f32 %v1925, %v1925
      %v3207 = vmul.f32 %v1926, %v1926
      %v3208 = vmul.f32 %v1927, %v1927
      %v3209 = vmul.f32 %v1928, %v1928
      %v3210 = vmul.f32 %v1929, %v1929
      %v3211 = vmul.f32 %v1930, %v1930
      %v3212 = vmul.f32 %v1931, %v1931
      %v3213 = vmul.f32 %v1932, %v1932
      %v3214 = vmul.f32 %v1933, %v1933
      %v3215 = vmul.f32 %v1934, %v1934
      %v3216 = vmul.f32 %v1935, %v1935
      %v3217 = vmul.f32 %v1936, %v1936
      %v3218 = vmul.f32 %v1937, %v1937
      %v3219 = vmul.f32 %v1938, %v1938
      %v3220 = vmul.f32 %v1939, %v1939
      %v3221 = vmul.f32 %v1940, %v1940
      %v3222 = vmul.f32 %v1941, %v1941
      %v3223 = vmul.f32 %v1942, %v1942
      %v3224 = vmul.f32 %v1943, %v1943
      %v3225 = vmul.f32 %v1944, %v1944
      %v3226 = vmul.f32 %v1945, %v1945
      %v3227 = vmul.f32 %v1946, %v1946
      %v3228 = vmul.f32 %v1947, %v1947
      %v3229 = vmul.f32 %v1948, %v1948
      %v3230 = vmul.f32 %v1949, %v1949
      %v3231 = vmul.f32 %v1950, %v1950
      %v3232 = vsel %vm204, %v3200, 0.0
      %v3233 = vsel %vm204, %v3201, 0.0
      %v3234 = vadd.f32 %v3232, %v3233
      %v3235 = vsel %vm204, %v3202, 0.0
      %v3236 = vadd.f32 %v3234, %v3235
      %v3237 = vsel %vm204, %v3203, 0.0
      %v3238 = vadd.f32 %v3236, %v3237
      %v3239 = vsel %vm204, %v3204, 0.0
      %v3240 = vadd.f32 %v3238, %v3239
      %v3241 = vsel %vm204, %v3205, 0.0
      %v3242 = vadd.f32 %v3240, %v3241
      %v3243 = vsel %vm204, %v3206, 0.0
      %v3244 = vadd.f32 %v3242, %v3243
      %v3245 = vsel %vm204, %v3207, 0.0
      %v3246 = vadd.f32 %v3244, %v3245
      %v3247 = vsel %vm204, %v3208, 0.0
      %v3248 = vadd.f32 %v3246, %v3247
      %v3249 = vsel %vm204, %v3209, 0.0
      %v3250 = vadd.f32 %v3248, %v3249
      %v3251 = vsel %vm204, %v3210, 0.0
      %v3252 = vadd.f32 %v3250, %v3251
      %v3253 = vsel %vm204, %v3211, 0.0
      %v3254 = vadd.f32 %v3252, %v3253
      %v3255 = vsel %vm204, %v3212, 0.0
      %v3256 = vadd.f32 %v3254, %v3255
      %v3257 = vsel %vm204, %v3213, 0.0
      %v3258 = vadd.f32 %v3256, %v3257
      %v3259 = vsel %vm204, %v3214, 0.0
      %v3260 = vadd.f32 %v3258, %v3259
      %v3261 = vsel %vm204, %v3215, 0.0
      %v3262 = vadd.f32 %v3260, %v3261
      %v3263 = vsel %vm204, %v3216, 0.0
      %v3264 = vadd.f32 %v3262, %v3263
      %v3265 = vsel %vm204, %v3217, 0.0
      %v3266 = vadd.f32 %v3264, %v3265
      %v3267 = vsel %vm204, %v3218, 0.0
      %v3268 = vadd.f32 %v3266, %v3267
      %v3269 = vsel %vm204, %v3219, 0.0
      %v3270 = vadd.f32 %v3268, %v3269
      %v3271 = vsel %vm204, %v3220, 0.0
      %v3272 = vadd.f32 %v3270, %v3271
      %v3273 = vsel %vm204, %v3221, 0.0
      %v3274 = vadd.f32 %v3272, %v3273
      %v3275 = vsel %vm204, %v3222, 0.0
      %v3276 = vadd.f32 %v3274, %v3275
      %v3277 = vsel %vm204, %v3223, 0.0
      %v3278 = vadd.f32 %v3276, %v3277
      %v3279 = vsel %vm204, %v3224, 0.0
      %v3280 = vadd.f32 %v3278, %v3279
      %v3281 = vsel %vm204, %v3225, 0.0
      %v3282 = vadd.f32 %v3280, %v3281
      %v3283 = vsel %vm204, %v3226, 0.0
      %v3284 = vadd.f32 %v3282, %v3283
      %v3285 = vsel %vm204, %v3227, 0.0
      %v3286 = vadd.f32 %v3284, %v3285
      %v3287 = vsel %vm204, %v3228, 0.0
      %v3288 = vadd.f32 %v3286, %v3287
      %v3289 = vsel %vm204, %v3229, 0.0
      %v3290 = vadd.f32 %v3288, %v3289
      %v3291 = vsel %vm204, %v3230, 0.0
      %v3292 = vadd.f32 %v3290, %v3291
      %v3293 = vsel %vm204, %v3231, 0.0
      %v3294 = vadd.f32 %v3292, %v3293
      %v3295 = vrot.slane %v3294, 4
      %v3296 = vadd.f32 %v3294, %v3295
      %v3297 = vrot.slane %v3296, 2
      %v3298 = vadd.f32 %v3296, %v3297
      %v3299 = vrot.slane %v3298, 1
      %v3300 = vadd.f32 %v3298, %v3299
      %v3301 = vmul.f32 %v3300, 0.00390625
      %v3302 = vmul.f32 %v3199, %v3199
      %v3303 = vsub.f32 %v3301, %v3302
      %v3304 = vmax.f32 %v3303, 0.0
      %v3305 = vsub.f32 %v1919, %v3199
      %v3306 = vsub.f32 %v1920, %v3199
      %v3307 = vsub.f32 %v1921, %v3199
      %v3308 = vsub.f32 %v1922, %v3199
      %v3309 = vsub.f32 %v1923, %v3199
      %v3310 = vsub.f32 %v1924, %v3199
      %v3311 = vsub.f32 %v1925, %v3199
      %v3312 = vsub.f32 %v1926, %v3199
      %v3313 = vsub.f32 %v1927, %v3199
      %v3314 = vsub.f32 %v1928, %v3199
      %v3315 = vsub.f32 %v1929, %v3199
      %v3316 = vsub.f32 %v1930, %v3199
      %v3317 = vsub.f32 %v1931, %v3199
      %v3318 = vsub.f32 %v1932, %v3199
      %v3319 = vsub.f32 %v1933, %v3199
      %v3320 = vsub.f32 %v1934, %v3199
      %v3321 = vsub.f32 %v1935, %v3199
      %v3322 = vsub.f32 %v1936, %v3199
      %v3323 = vsub.f32 %v1937, %v3199
      %v3324 = vsub.f32 %v1938, %v3199
      %v3325 = vsub.f32 %v1939, %v3199
      %v3326 = vsub.f32 %v1940, %v3199
      %v3327 = vsub.f32 %v1941, %v3199
      %v3328 = vsub.f32 %v1942, %v3199
      %v3329 = vsub.f32 %v1943, %v3199
      %v3330 = vsub.f32 %v1944, %v3199
      %v3331 = vsub.f32 %v1945, %v3199
      %v3332 = vsub.f32 %v1946, %v3199
      %v3333 = vsub.f32 %v1947, %v3199
      %v3334 = vsub.f32 %v1948, %v3199
      %v3335 = vsub.f32 %v1949, %v3199
      %v3336 = vsub.f32 %v1950, %v3199
      %v3337 = vadd.f32 %v3304, 1e-05
      %v3338 = vrsqrt.pop %v3337
      %v3339 = vmul.f32 %v3305, %v3338
      %v3340 = vmul.f32 %v3306, %v3338
      %v3341 = vmul.f32 %v3307, %v3338
      %v3342 = vmul.f32 %v3308, %v3338
      %v3343 = vmul.f32 %v3309, %v3338
      %v3344 = vmul.f32 %v3310, %v3338
      %v3345 = vmul.f32 %v3311, %v3338
      %v3346 = vmul.f32 %v3312, %v3338
      %v3347 = vmul.f32 %v3313, %v3338
      %v3348 = vmul.f32 %v3314, %v3338
      %v3349 = vmul.f32 %v3315, %v3338
      %v3350 = vmul.f32 %v3316, %v3338
      %v3351 = vmul.f32 %v3317, %v3338
      %v3352 = vmul.f32 %v3318, %v3338
      %v3353 = vmul.f32 %v3319, %v3338
      %v3354 = vmul.f32 %v3320, %v3338
      %v3355 = vmul.f32 %v3321, %v3338
      %v3356 = vmul.f32 %v3322, %v3338
      %v3357 = vmul.f32 %v3323, %v3338
      %v3358 = vmul.f32 %v3324, %v3338
      %v3359 = vmul.f32 %v3325, %v3338
      %v3360 = vmul.f32 %v3326, %v3338
      %v3361 = vmul.f32 %v3327, %v3338
      %v3362 = vmul.f32 %v3328, %v3338
      %v3363 = vmul.f32 %v3329, %v3338
      %v3364 = vmul.f32 %v3330, %v3338
      %v3365 = vmul.f32 %v3331, %v3338
      %v3366 = vmul.f32 %v3332, %v3338
      %v3367 = vmul.f32 %v3333, %v3338
      %v3368 = vmul.f32 %v3334, %v3338
      %v3369 = vmul.f32 %v3335, %v3338
      %v3370 = vmul.f32 %v3336, %v3338
      %v3371 = vadd.f32 %v171, %v3339
      %v3372 = vadd.f32 %v172, %v3340
      %v3373 = vadd.f32 %v173, %v3341
      %v3374 = vadd.f32 %v174, %v3342
      %v3375 = vadd.f32 %v175, %v3343
      %v3376 = vadd.f32 %v176, %v3344
      %v3377 = vadd.f32 %v177, %v3345
      %v3378 = vadd.f32 %v178, %v3346
      %v3379 = vadd.f32 %v179, %v3347
      %v3380 = vadd.f32 %v180, %v3348
      %v3381 = vadd.f32 %v181, %v3349
      %v3382 = vadd.f32 %v182, %v3350
      %v3383 = vadd.f32 %v183, %v3351
      %v3384 = vadd.f32 %v184, %v3352
      %v3385 = vadd.f32 %v185, %v3353
      %v3386 = vadd.f32 %v186, %v3354
      %v3387 = vadd.f32 %v187, %v3355
      %v3388 = vadd.f32 %v188, %v3356
      %v3389 = vadd.f32 %v189, %v3357
      %v3390 = vadd.f32 %v190, %v3358
      %v3391 = vadd.f32 %v191, %v3359
      %v3392 = vadd.f32 %v192, %v3360
      %v3393 = vadd.f32 %v193, %v3361
      %v3394 = vadd.f32 %v194, %v3362
      %v3395 = vadd.f32 %v195, %v3363
      %v3396 = vadd.f32 %v196, %v3364
      %v3397 = vadd.f32 %v197, %v3365
      %v3398 = vadd.f32 %v198, %v3366
      %v3399 = vadd.f32 %v199, %v3367
      %v3400 = vadd.f32 %v200, %v3368
      %v3401 = vadd.f32 %v201, %v3369
      %v3402 = vadd.f32 %v202, %v3370
      %3403 = vst.msk [vmem:[%s170] sm:$0xff] %vm204, %v3371
      %3404 = vst.msk [vmem:[%s170 + $0x8] sm:$0xff] %vm204, %v3372
      %3405 = vst.msk [vmem:[%s170 + $0x10] sm:$0xff] %vm204, %v3373
      %3406 = vst.msk [vmem:[%s170 + $0x18] sm:$0xff] %vm204, %v3374
      %3407 = vst.msk [vmem:[%s170 + $0x20] sm:$0xff] %vm204, %v3375
      %3408 = vst.msk [vmem:[%s170 + $0x28] sm:$0xff] %vm204, %v3376
      %3409 = vst.msk [vmem:[%s170 + $0x30] sm:$0xff] %vm204, %v3377
      %3410 = vst.msk [vmem:[%s170 + $0x38] sm:$0xff] %vm204, %v3378
      %3411 = vst.msk [vmem:[%s170 + $0x40] sm:$0xff] %vm204, %v3379
      %3412 = vst.msk [vmem:[%s170 + $0x48] sm:$0xff] %vm204, %v3380
      %3413 = vst.msk [vmem:[%s170 + $0x50] sm:$0xff] %vm204, %v3381
      %3414 = vst.msk [vmem:[%s170 + $0x58] sm:$0xff] %vm204, %v3382
      %3415 = vst.msk [vmem:[%s170 + $0x60] sm:$0xff] %vm204, %v3383
      %3416 = vst.msk [vmem:[%s170 + $0x68] sm:$0xff] %vm204, %v3384
      %3417 = vst.msk [vmem:[%s170 + $0x70] sm:$0xff] %vm204, %v3385
      %3418 = vst.msk [vmem:[%s170 + $0x78] sm:$0xff] %vm204, %v3386
      %3419 = vst.msk [vmem:[%s170 + $0x80] sm:$0xff] %vm204, %v3387
      %3420 = vst.msk [vmem:[%s170 + $0x88] sm:$0xff] %vm204, %v3388
      %3421 = vst.msk [vmem:[%s170 + $0x90] sm:$0xff] %vm204, %v3389
      %3422 = vst.msk [vmem:[%s170 + $0x98] sm:$0xff] %vm204, %v3390
      %3423 = vst.msk [vmem:[%s170 + $0xa0] sm:$0xff] %vm204, %v3391
      %3424 = vst.msk [vmem:[%s170 + $0xa8] sm:$0xff] %vm204, %v3392
      %3425 = vst.msk [vmem:[%s170 + $0xb0] sm:$0xff] %vm204, %v3393
      %3426 = vst.msk [vmem:[%s170 + $0xb8] sm:$0xff] %vm204, %v3394
      %3427 = vst.msk [vmem:[%s170 + $0xc0] sm:$0xff] %vm204, %v3395
      %3428 = vst.msk [vmem:[%s170 + $0xc8] sm:$0xff] %vm204, %v3396
      %3429 = vst.msk [vmem:[%s170 + $0xd0] sm:$0xff] %vm204, %v3397
      %3430 = vst.msk [vmem:[%s170 + $0xd8] sm:$0xff] %vm204, %v3398
      %3431 = vst.msk [vmem:[%s170 + $0xe0] sm:$0xff] %vm204, %v3399
      %3432 = vst.msk [vmem:[%s170 + $0xe8] sm:$0xff] %vm204, %v3400
      %3433 = vst.msk [vmem:[%s170 + $0xf0] sm:$0xff] %vm204, %v3401
      %3434 = vst.msk [vmem:[%s170 + $0xf8] sm:$0xff] %vm204, %v3402
      %p3435 = scmp.lt.s32.totalorder %s14, 1
      %s3436 = scalar_select %p3435, %s14, 1
      %s3437 = smul.addr %s3436, 32
      %s3438 = smul.addr %s3437, 8
      %s3439 = scalar_lea.vmem %s3, %s3438
      // Predicated region
      $region47: #{tpu_custom_call.1} parent=31 // pred_check
        %p3440 = pneg %p100
      $region48: #{tpu_custom_call.1} parent=31 // pred_check_branch
        %3442 = sbr.rel (%p3440) target = $region50
      $region49: #{tpu_custom_call.1} parent=31 // pred_region
        _
      $region50: #{tpu_custom_call.1} parent=31 // pred_fallthru
        _
    $region32: #{tpu_custom_call.1} parent=5 // pred_fallthru
      _
    %p3443 = scmp.le.s32.totalorder 2, %s9
    // Predicated region
    $region51: #{tpu_custom_call.1} parent=5 // pred_check
      %p3444 = pneg %p3443
    $region52: #{tpu_custom_call.1} parent=5 // pred_check_branch
      %3446 = sbr.rel (%p3444) target = $region54
    $region53: #{tpu_custom_call.1} parent=5 // pred_region
      %s3447 = ssub.s32 %s9, 2
      // Predicated region
      $region55: #{tpu_custom_call.1} parent=53 // pred_check
        %p3448 = pneg %p106
      $region56: #{tpu_custom_call.1} parent=53 // pred_check_branch
        %3450 = sbr.rel (%p3448) target = $region58
      $region57: #{tpu_custom_call.1} parent=53 // pred_region
        %p3451 = scmp.lt.s32.totalorder %s15, 1
        %s3452 = scalar_select %p3451, %s15, 1
        %s3453 = smul.addr %s3452, 32
        %s3454 = smul.addr %s3453, 8
        %s3455 = scalar_lea.vmem %s3, %s3454
      $region58: #{tpu_custom_call.1} parent=53 // pred_fallthru
        _
    $region54: #{tpu_custom_call.1} parent=5 // pred_fallthru
      _
  $region6: #{tpu_custom_call.1} parent=0 // loop_footer
    %s13 = sadd.s32 1, %s9
  $region7: #{tpu_custom_call.1} parent=0 // loop_footer_branch
    %8 = sbr.rel target = $region3
  $region8: #{tpu_custom_call.1} parent=0 // loop_exit
    _

</llo_original>
